<compile_context>
chip_gen: v7x
topology: tpu7x:2x2x1
jax: 0.10.0
libtpu: 0.0.40
codegen_flags: <defaults>
</compile_context>

<pallas_src>
import functools

import jax
import jax.numpy as jnp
from jax import lax
from jax.experimental import pallas as pl
from jax.experimental.pallas import tpu as pltpu


def _round_up(x, m):
    return ((x + m - 1) // m) * m


def _pick_tile(n, pref, mult):
    """Largest tile <= pref that divides n and is a multiple of `mult`."""
    t = min(pref, n)
    t = max((t // mult) * mult, mult)
    while t > mult and n % t:
        t -= mult
    return t if (t > 0 and n % t == 0) else n


def _vmem_limit_bytes():
    # Explicit scoped-VMEM budget (defaults are only 16/32 MiB).  Leave
    # headroom: ~48 MiB on v7x (64 MiB physical), ~100 MiB on v5e/v6e.
    try:
        cap = int(pltpu.get_tpu_info().vmem_capacity_bytes)
        return max(32 << 20, min(cap - (16 << 20), 100 << 20))
    except Exception:
        return 64 << 20


_VMEM_LIMIT = _vmem_limit_bytes()


def _tensorcores_per_chip():
    try:
        kind = jax.devices()[0].device_kind.lower()
        if "v7" in kind or "7x" in kind:
            return 2
    except Exception:
        pass
    return 1


def _probe_buffered():
    """Check (once, eagerly) that pipeline_mode=pl.Buffered(1) is supported."""
    try:
        def k(x_ref, o_ref):
            o_ref[...] = x_ref[...] + 1.0

        fn = pl.pallas_call(
            k,
            out_shape=jax.ShapeDtypeStruct((8, 128), jnp.float32),
            grid_spec=pltpu.PrefetchScalarGridSpec(
                num_scalar_prefetch=0,
                grid=(2,),
                in_specs=[pl.BlockSpec((8, 128), lambda i: (0, 0),
                                       pipeline_mode=pl.Buffered(1))],
                out_specs=pl.BlockSpec((8, 128), lambda i: (0, 0)),
            ),
        )
        jax.block_until_ready(fn(jnp.zeros((8, 128), jnp.float32)))
        return True
    except Exception:
        return False


_BUFFERED_OK = _probe_buffered()


def _const_spec(shape, index_map):
    """BlockSpec for an operand whose block index never changes: single-buffer
    it (default double buffering only doubles resident VMEM, e.g. W_hh)."""
    if _BUFFERED_OK:
        return pl.BlockSpec(shape, index_map, pipeline_mode=pl.Buffered(1))
    return pl.BlockSpec(shape, index_map)


# ---------------------------------------------------------------------------
# Tiled linear kernel:  out = x @ w + b   (bf16 MXU, f32 accumulation,
# K-tiled reduction with a VMEM accumulator, configurable output dtype)
# ---------------------------------------------------------------------------
def _linear_kernel(x_ref, w_ref, b_ref, o_ref, acc_ref):
    k = pl.program_id(2)

    @pl.when(k == 0)
    def _():
        acc_ref[...] = jnp.zeros_like(acc_ref)

    acc_ref[...] += jnp.dot(x_ref[...].astype(jnp.bfloat16), w_ref[...],
                            preferred_element_type=jnp.float32)

    @pl.when(k == pl.num_programs(2) - 1)
    def _():
        o_ref[...] = (acc_ref[...] + b_ref[...]).astype(o_ref.dtype)


def linear(x2d, w_t, b, *, out_dtype=jnp.float32, tm=256, tn=512):
    """x2d: (N, K) f32/bf16 (cast to bf16 in-kernel), w_t: (K, V) bf16,
    b: (1, V) f32  ->  (N, V) out_dtype."""
    N, K = x2d.shape
    V = w_t.shape[-1]

    # Row tile: multiple of 16 (bf16-safe sublanes); pad ragged N (no tm=8
    # collapse / no re-reading W N/8 times).
    tm = min(tm, _round_up(N, 16))
    Np = _round_up(N, tm)
    if Np != N:
        x2d = jnp.pad(x2d, ((0, Np - N), (0, 0)))

    # Lane-dense output tiles (params are pre-padded to a 128-multiple vocab).
    tn = _pick_tile(V, tn, 128) if V % 128 == 0 else V

    # K-tile only when the contraction is large; otherwise keep full-K panels
    # resident so the stationary operand is read from HBM exactly once.
    tk = _pick_tile(K, 1024, 128) if (K % 128 == 0 and K > 2048) else K

    n_i, n_j, n_k = Np // tm, V // tn, K // tk
    if V >= Np:   # |W| >= |X|: W's block index is constant over the inner axis
        grid = (n_j, n_i, n_k)
        x_map = lambda j, i, k: (i, k)
        w_map = lambda j, i, k: (k, j)
        b_map = lambda j, i, k: (0, j)
        o_map = lambda j, i, k: (i, j)
    else:         # |X| > |W|: X stays put over the inner axis instead
        grid = (n_i, n_j, n_k)
        x_map = lambda i, j, k: (i, k)
        w_map = lambda i, j, k: (k, j)
        b_map = lambda i, j, k: (0, j)
        o_map = lambda i, j, k: (i, j)

    out = pl.pallas_call(
        _linear_kernel,
        out_shape=jax.ShapeDtypeStruct((Np, V), out_dtype),
        grid_spec=pltpu.PrefetchScalarGridSpec(
            num_scalar_prefetch=0,
            grid=grid,
            in_specs=[
                pl.BlockSpec((tm, tk), x_map),
                pl.BlockSpec((tk, tn), w_map),
                pl.BlockSpec((1, tn), b_map),
            ],
            out_specs=pl.BlockSpec((tm, tn), o_map),
            scratch_shapes=[pltpu.VMEM((tm, tn), jnp.float32)],
        ),
        compiler_params=pltpu.CompilerParams(
            dimension_semantics=("parallel", "parallel", "arbitrary"),
            vmem_limit_bytes=_VMEM_LIMIT),
    )(x2d, w_t, b)
    return out[:N] if Np != N else out


# ---------------------------------------------------------------------------
# LSTM recurrence kernel.  Grid = (batch blocks, time chunks); each grid step
# runs an (partially) unrolled loop over the timesteps of one chunk.  The
# input-gate pre-activations xg = x @ W_ih + (b_ih + b_hh) are precomputed
# (bf16), so only the (tb, Hp) x (Hp, 4Hp) recurrent matmul is serial.
# ---------------------------------------------------------------------------
def _lstm_chunk_kernel(xg_ref, h0_ref, c0_ref, w_hh_ref,
                       y_ref, hn_ref, cn_ref, h_scr, c_scr,
                       *, chunk, n_steps, mask_tail, unroll):
    ci = pl.program_id(1)          # time-chunk index (axis 0 = batch block)

    @pl.when(ci == 0)
    def _():
        h_scr[...] = h0_ref[...]
        c_scr[...] = c0_ref[...]

    hp = h_scr.shape[-1]

    def step(t, carry):
        h = h_scr[...]
        c = c_scr[...]
        gates = xg_ref[t].astype(jnp.float32) + jnp.dot(
            h.astype(jnp.bfloat16), w_hh_ref[...],
            preferred_element_type=jnp.float32)
        # Gate slices are 128-lane aligned because hp is a multiple of 128.
        i_g = jax.nn.sigmoid(gates[:, 0 * hp:1 * hp])
        f_g = jax.nn.sigmoid(gates[:, 1 * hp:2 * hp])
        g_g = jnp.tanh(gates[:, 2 * hp:3 * hp])
        o_g = jax.nn.sigmoid(gates[:, 3 * hp:4 * hp])
        c_new = f_g * c + i_g * g_g
        h_new = o_g * jnp.tanh(c_new)
        if mask_tail:
            # Sequence was padded up to a multiple of the chunk: freeze the
            # state on padded timesteps so h_n / c_n stay exact.
            valid = (ci * chunk + t) < n_steps
            h_new = jnp.where(valid, h_new, h)
            c_new = jnp.where(valid, c_new, c)
        h_scr[...] = h_new
        c_scr[...] = c_new
        y_ref[t] = h_new.astype(y_ref.dtype)     # bf16 HBM stream
        return carry

    lax.fori_loop(0, chunk, step, 0, unroll=unroll)

    @pl.when(ci == pl.num_programs(1) - 1)
    def _():
        hn_ref[...] = h_scr[...]
        cn_ref[...] = c_scr[...]


def lstm_layer(xg, h0, c0, w_hh, *, time_chunk=None, batch_blocks=1):
    """xg: (S, Bp, 4Hp) bf16; h0/c0: (Bp, Hp) f32; w_hh: (Hp, 4Hp) bf16
    ->  y: (S, Bp, Hp) bf16,  h_n, c_n: (Bp, Hp) f32."""
    S, Bp, G = xg.shape
    Hp = G // 4

    if time_chunk is None:
        time_chunk = 16 if Hp <= 256 else 8       # vreg-pressure guard
    tc = max(1, min(time_chunk, S))
    Sp = _round_up(S, tc)                         # guard ragged / prime S
    if Sp != S:
        xg = jnp.pad(xg, ((0, Sp - S), (0, 0), (0, 0)))

    # Optional batch split across TensorCores (v7x); keep each batch block a
    # multiple of 16 rows so bf16 blocks stay sublane-tile aligned.
    if batch_blocks > 1 and Bp % (16 * batch_blocks) != 0:
        batch_blocks = 1
    tb = Bp // batch_blocks
    n_chunks = Sp // tc

    unroll = True if Hp <= 512 else max(1, min(4, tc))
    kernel = functools.partial(_lstm_chunk_kernel, chunk=tc, n_steps=S,
                               mask_tail=(Sp != S), unroll=unroll)

    y, h_n, c_n = pl.pallas_call(
        kernel,
        out_shape=(jax.ShapeDtypeStruct((Sp, Bp, Hp), jnp.bfloat16),
                   jax.ShapeDtypeStruct((Bp, Hp), jnp.float32),
                   jax.ShapeDtypeStruct((Bp, Hp), jnp.float32)),
        grid_spec=pltpu.PrefetchScalarGridSpec(
            num_scalar_prefetch=0,
            grid=(batch_blocks, n_chunks),
            in_specs=[
                pl.BlockSpec((tc, tb, G), lambda b, i: (i, b, 0)),
                _const_spec((tb, Hp), lambda b, i: (b, 0)),
                _const_spec((tb, Hp), lambda b, i: (b, 0)),
                _const_spec((Hp, G), lambda b, i: (0, 0)),
            ],
            out_specs=(
                pl.BlockSpec((tc, tb, Hp), lambda b, i: (i, b, 0)),
                pl.BlockSpec((tb, Hp), lambda b, i: (b, 0)),
                pl.BlockSpec((tb, Hp), lambda b, i: (b, 0)),
            ),
            scratch_shapes=[pltpu.VMEM((tb, Hp), jnp.float32),
                            pltpu.VMEM((tb, Hp), jnp.float32)],
        ),
        compiler_params=pltpu.CompilerParams(
            dimension_semantics=("parallel", "arbitrary"),
            vmem_limit_bytes=_VMEM_LIMIT),
    )(xg, h0, c0, w_hh)

    if Sp != S:
        y = y[:S]
    return y, h_n, c_n


# ---------------------------------------------------------------------------
# Full module forward (matches nn.Module.forward semantics, eval mode)
# ---------------------------------------------------------------------------
def rnn_forward(params, src, hidden, *, n_layers, hid_dim, vocab_size):
    h0, c0 = hidden                                   # (L, B, H) each
    B, S = src.shape
    H = hid_dim
    Bp = _round_up(B, 8)
    Hp = _round_up(H, 128)
    V = vocab_size

    # Embedding lookup, time-major, batch-padded; table stored bf16 so the big
    # activation stream is already half-width.  Dropout is identity (eval).
    # TODO(synk): a Pallas scalar-prefetch gather would fuse the take/pad pair.
    emb = jnp.take(params["embedding"], src.T, axis=0)        # (S, B, E) bf16
    x = jnp.pad(emb, ((0, 0), (0, Bp - B), (0, 0)))           # (S, Bp, E)

    h0p = jnp.pad(h0, ((0, 0), (0, Bp - B), (0, Hp - H)))
    c0p = jnp.pad(c0, ((0, 0), (0, Bp - B), (0, Hp - H)))

    # Batch-split the recurrence only on 2-TC chips (v7x) with enough batch.
    batch_blocks = 2 if (Bp >= 32 and _tensorcores_per_chip() >= 2) else 1

    h_n, c_n = [], []
    for l in range(n_layers):
        in_dim = x.shape[-1]
        # Hoisted input projection for the whole sequence -> bf16 xg stream.
        xg = linear(x.reshape(S * Bp, in_dim),
                    params[f"w_ih_{l}"], params[f"b_{l}"],
                    out_dtype=jnp.bfloat16)
        xg = xg.reshape(S, Bp, 4 * Hp)
        x, hl, cl = lstm_layer(xg, h0p[l], c0p[l], params[f"w_hh_{l}"],
                               batch_blocks=batch_blocks)
        # TODO(synk): nn.LSTM inter-layer dropout (training mode only) omitted.
        h_n.append(hl)
        c_n.append(cl)

    outputs = x                                       # (S, Bp, Hp) bf16
    # torch: prediction = self.linear(outputs.squeeze(0))
    flat = outputs.reshape(S * Bp, Hp)
    pred = linear(flat, params["linear_w"], params["linear_b"],
                  out_dtype=jnp.float32)
    Vp = pred.shape[-1]
    pred = pred.reshape(S, Bp, Vp)[:, :B, :V]
    if S == 1:
        pred = jnp.squeeze(pred, axis=0)

    h_n = jnp.stack(h_n)[:, :B, :H]
    c_n = jnp.stack(c_n)[:, :B, :H]
    return pred, (h_n, c_n)


# ---------------------------------------------------------------------------
# Deterministic parameter construction (shapes follow the nn.Module __init__),
# converted to the padded / transposed / bf16 kernel layout.
# ---------------------------------------------------------------------------
def init_params(key, input_dim, emb_dim, hid_dim, n_layers):
    H = hid_dim
    Hp = _round_up(H, 128)
    V = input_dim
    Vp = _round_up(V, 128)
    k = 1.0 / jnp.sqrt(hid_dim)
    keys = jax.random.split(key, 3 + 4 * n_layers)

    params = {}
    params["embedding"] = jax.random.normal(
        keys[0], (input_dim, emb_dim), jnp.float32).astype(jnp.bfloat16)

    def pad_gate_cols(w):
        # (In, 4H) -> (In, 4Hp): pad each gate block [i|f|g|o] to Hp lanes.
        n_in = w.shape[0]
        w4 = jnp.pad(w.reshape(n_in, 4, H), ((0, 0), (0, 0), (0, Hp - H)))
        return w4.reshape(n_in, 4 * Hp)

    for l in range(n_layers):
        in_sz = emb_dim if l == 0 else hid_dim
        in_pad = emb_dim if l == 0 else Hp
        kw = keys[3 + 4 * l: 3 + 4 * (l + 1)]
        w_ih = jax.random.uniform(kw[0], (4 * H, in_sz), jnp.float32, -k, k)
        w_hh = jax.random.uniform(kw[1], (4 * H, H), jnp.float32, -k, k)
        b_ih = jax.random.uniform(kw[2], (4 * H,), jnp.float32, -k, k)
        b_hh = jax.random.uniform(kw[3], (4 * H,), jnp.float32, -k, k)

        w_ih_t = jnp.pad(w_ih.T, ((0, in_pad - in_sz), (0, 0)))   # (in_pad, 4H)
        w_hh_t = jnp.pad(w_hh.T, ((0, Hp - H), (0, 0)))           # (Hp, 4H)
        params[f"w_ih_{l}"] = pad_gate_cols(w_ih_t).astype(jnp.bfloat16)
        params[f"w_hh_{l}"] = pad_gate_cols(w_hh_t).astype(jnp.bfloat16)
        params[f"b_{l}"] = pad_gate_cols((b_ih + b_hh).reshape(1, 4 * H))

    lin_w = jax.random.uniform(keys[1], (V, H), jnp.float32, -k, k)
    lin_b = jax.random.uniform(keys[2], (V,), jnp.float32, -k, k)
    params["linear_w"] = jnp.pad(lin_w.T,
                                 ((0, Hp - H), (0, Vp - V))).astype(jnp.bfloat16)
    params["linear_b"] = jnp.pad(lin_b, (0, Vp - V)).reshape(1, Vp)
    return params


if __name__ == "__main__":
    # Small shapes consistent with the module's forward.
    input_dim = 16    # vocab size
    emb_dim = 32
    hid_dim = 32
    n_layers = 2
    batch = 2
    seq_len = 8

    key = jax.random.PRNGKey(0)
    k_params, k_src = jax.random.split(key)

    params = init_params(k_params, input_dim, emb_dim, hid_dim, n_layers)
    src = jax.random.randint(k_src, (batch, seq_len), 0, input_dim, jnp.int32)

    # init_hidden_
    h0 = jnp.zeros((n_layers, batch, hid_dim), jnp.float32)
    c0 = jnp.zeros((n_layers, batch, hid_dim), jnp.float32)

    fwd = jax.jit(functools.partial(rnn_forward, n_layers=n_layers,
                                    hid_dim=hid_dim, vocab_size=input_dim))
    prediction, (h_n, c_n) = fwd(params, src, (h0, c0))
    jax.block_until_ready((prediction, h_n, c_n))

    assert prediction.shape == (seq_len, batch, input_dim), prediction.shape
    assert h_n.shape == (n_layers, batch, hid_dim), h_n.shape
    assert c_n.shape == (n_layers, batch, hid_dim), c_n.shape
    print("KERNEL_OK")
</pallas_src>

<mosaic_0001>
module attributes {stable_mosaic.version = 11 : i64} {
  func.func @k(%arg0: i32, %arg1: memref<8x128xf32, #tpu.memory_space<vmem>>, %arg2: memref<8x128xf32, #tpu.memory_space<vmem>>) attributes {dimension_semantics = [#tpu.dimension_semantics<arbitrary>], iteration_bounds = array<i64: 2>, scalar_prefetch = 0 : i64, scratch_operands = 0 : i64, tpu.core_type = #tpu.core_type<tc>, window_params = [{pipeline_mode = #tpu.pipeline_mode<synchronous>, transform_indices = @transform_0, window_bounds = array<i64: 8, 128>}, {pipeline_mode = #tpu.pipeline_mode<synchronous>, transform_indices = @transform_1, window_bounds = array<i64: 8, 128>}]} {
    %c0 = arith.constant 0 : index
    %c0_0 = arith.constant 0 : index
    %0 = vector.load %arg1[%c0, %c0_0] : memref<8x128xf32, #tpu.memory_space<vmem>>, vector<8x128xf32>
    %cst = arith.constant 1.000000e+00 : f32
    %1 = vector.broadcast %cst : f32 to vector<8x128xf32>
    %2 = arith.addf %0, %1 : vector<8x128xf32>
    %c0_1 = arith.constant 0 : index
    %c0_2 = arith.constant 0 : index
    %3 = vector.load %arg2[%c0_1, %c0_2] : memref<8x128xf32, #tpu.memory_space<vmem>>, vector<8x128xf32>
    tpu.vector_store %arg2[%c0_1, %c0_2], %2 {strides = array<i32>} : memref<8x128xf32, #tpu.memory_space<vmem>>, vector<8x128xf32>,
    return
  }
  func.func @transform_0(%arg0: i32) -> (i32, i32) {
    %c0_i32 = arith.constant 0 : i32
    %c0_i32_0 = arith.constant 0 : i32
    %c0_i32_1 = arith.constant 0 : i32
    return %c0_i32, %c0_i32_0 : i32, i32
  }
  func.func @transform_1(%arg0: i32) -> (i32, i32) {
    %c0_i32 = arith.constant 0 : i32
    %c0_i32_0 = arith.constant 0 : i32
    %c0_i32_1 = arith.constant 0 : i32
    return %c0_i32, %c0_i32_0 : i32, i32
  }
}

module attributes {stable_mosaic.version = 11 : i64} {
  func.func @_linear_kernel(%arg0: i32, %arg1: i32, %arg2: i32, %arg3: memref<64x128xbf16, #tpu.memory_space<vmem>>, %arg4: memref<128x512xbf16, #tpu.memory_space<vmem>>, %arg5: memref<1x512xf32, #tpu.memory_space<vmem>>, %arg6: memref<64x512xbf16, #tpu.memory_space<vmem>>, %arg7: memref<64x512xf32, #tpu.memory_space<vmem>>) attributes {dimension_semantics = [#tpu.dimension_semantics<parallel>, #tpu.dimension_semantics<parallel>, #tpu.dimension_semantics<arbitrary>], iteration_bounds = array<i64: 1, 1, 1>, scalar_prefetch = 0 : i64, scratch_operands = 1 : i64, tpu.core_type = #tpu.core_type<tc>, window_params = [{transform_indices = @transform_0, window_bounds = array<i64: 64, 128>}, {transform_indices = @transform_1, window_bounds = array<i64: 128, 512>}, {transform_indices = @transform_2, window_bounds = array<i64: 1, 512>}, {transform_indices = @transform_3, window_bounds = array<i64: 64, 512>}]} {
    %c0_i32 = arith.constant 0 : i32
    %0 = arith.cmpi eq, %arg2, %c0_i32 : i32
    %1 = arith.extui %0 : i1 to i32
    %c0_i32_0 = arith.constant 0 : i32
    %2 = arith.cmpi ne, %1, %c0_i32_0 : i32
    scf.if %2 {
      %cst_10 = arith.constant 0.000000e+00 : f32
      %12 = vector.broadcast %cst_10 : f32 to vector<64x512xf32>
      %c0_11 = arith.constant 0 : index
      %c0_12 = arith.constant 0 : index
      %13 = vector.load %arg7[%c0_11, %c0_12] : memref<64x512xf32, #tpu.memory_space<vmem>>, vector<64x512xf32>
      tpu.vector_store %arg7[%c0_11, %c0_12], %12 {strides = array<i32>} : memref<64x512xf32, #tpu.memory_space<vmem>>, vector<64x512xf32>,
    } else {
    }
    %c0 = arith.constant 0 : index
    %c0_1 = arith.constant 0 : index
    %3 = vector.load %arg7[%c0, %c0_1] : memref<64x512xf32, #tpu.memory_space<vmem>>, vector<64x512xf32>
    %c0_2 = arith.constant 0 : index
    %c0_3 = arith.constant 0 : index
    %4 = vector.load %arg3[%c0_2, %c0_3] : memref<64x128xbf16, #tpu.memory_space<vmem>>, vector<64x128xbf16>
    %c0_4 = arith.constant 0 : index
    %c0_5 = arith.constant 0 : index
    %5 = vector.load %arg4[%c0_4, %c0_5] : memref<128x512xbf16, #tpu.memory_space<vmem>>, vector<128x512xbf16>
    %cst = arith.constant dense<0.000000e+00> : vector<64x512xf32>
    %6 = tpu.matmul %4, %5, %cst {dimension_numbers = #tpu.dot_dimension_numbers<[1], [0], [0], [1], [0, 0, 1, 1], [], []>} : vector<64x128xbf16>, vector<128x512xbf16>, vector<64x512xf32> -> vector<64x512xf32>
    %7 = arith.addf %3, %6 : vector<64x512xf32>
    %c0_6 = arith.constant 0 : index
    %c0_7 = arith.constant 0 : index
    %8 = vector.load %arg7[%c0_6, %c0_7] : memref<64x512xf32, #tpu.memory_space<vmem>>, vector<64x512xf32>
    tpu.vector_store %arg7[%c0_6, %c0_7], %7 {strides = array<i32>} : memref<64x512xf32, #tpu.memory_space<vmem>>, vector<64x512xf32>,
    %c0_i32_8 = arith.constant 0 : i32
    %9 = arith.cmpi eq, %arg2, %c0_i32_8 : i32
    %10 = arith.extui %9 : i1 to i32
    %c0_i32_9 = arith.constant 0 : i32
    %11 = arith.cmpi ne, %10, %c0_i32_9 : i32
    scf.if %11 {
      %c0_10 = arith.constant 0 : index
      %c0_11 = arith.constant 0 : index
      %12 = vector.load %arg7[%c0_10, %c0_11] : memref<64x512xf32, #tpu.memory_space<vmem>>, vector<64x512xf32>
      %c0_12 = arith.constant 0 : index
      %c0_13 = arith.constant 0 : index
      %13 = vector.load %arg5[%c0_12, %c0_13] : memref<1x512xf32, #tpu.memory_space<vmem>>, vector<1x512xf32>
      %14 = vector.broadcast %13 : vector<1x512xf32> to vector<64x512xf32>
      %15 = arith.addf %12, %14 : vector<64x512xf32>
      %16 = arith.truncf %15 : vector<64x512xf32> to vector<64x512xbf16>
      %c0_14 = arith.constant 0 : index
      %c0_15 = arith.constant 0 : index
      %17 = vector.load %arg6[%c0_14, %c0_15] : memref<64x512xbf16, #tpu.memory_space<vmem>>, vector<64x512xbf16>
      tpu.vector_store %arg6[%c0_14, %c0_15], %16 {strides = array<i32>} : memref<64x512xbf16, #tpu.memory_space<vmem>>, vector<64x512xbf16>,
    } else {
    }
    return
  }
  func.func @transform_0(%arg0: i32, %arg1: i32, %arg2: i32) -> (i32, i32) {
    %c0_i32 = arith.constant 0 : i32
    return %arg1, %arg2 : i32, i32
  }
  func.func @transform_1(%arg0: i32, %arg1: i32, %arg2: i32) -> (i32, i32) {
    %c0_i32 = arith.constant 0 : i32
    return %arg2, %arg0 : i32, i32
  }
  func.func @transform_2(%arg0: i32, %arg1: i32, %arg2: i32) -> (i32, i32) {
    %c0_i32 = arith.constant 0 : i32
    %c0_i32_0 = arith.constant 0 : i32
    return %c0_i32, %arg0 : i32, i32
  }
  func.func @transform_3(%arg0: i32, %arg1: i32, %arg2: i32) -> (i32, i32) {
    %c0_i32 = arith.constant 0 : i32
    return %arg1, %arg0 : i32, i32
  }
}

module attributes {stable_mosaic.version = 11 : i64} {
  func.func @_linear_kernel(%arg0: i32, %arg1: i32, %arg2: i32, %arg3: memref<64x128xbf16, #tpu.memory_space<vmem>>, %arg4: memref<128x128xbf16, #tpu.memory_space<vmem>>, %arg5: memref<1x128xf32, #tpu.memory_space<vmem>>, %arg6: memref<64x128xf32, #tpu.memory_space<vmem>>, %arg7: memref<64x128xf32, #tpu.memory_space<vmem>>) attributes {dimension_semantics = [#tpu.dimension_semantics<parallel>, #tpu.dimension_semantics<parallel>, #tpu.dimension_semantics<arbitrary>], iteration_bounds = array<i64: 1, 1, 1>, scalar_prefetch = 0 : i64, scratch_operands = 1 : i64, tpu.core_type = #tpu.core_type<tc>, window_params = [{transform_indices = @transform_0, window_bounds = array<i64: 64, 128>}, {transform_indices = @transform_1, window_bounds = array<i64: 128, 128>}, {transform_indices = @transform_2, window_bounds = array<i64: 1, 128>}, {transform_indices = @transform_3, window_bounds = array<i64: 64, 128>}]} {
    %c0_i32 = arith.constant 0 : i32
    %0 = arith.cmpi eq, %arg2, %c0_i32 : i32
    %1 = arith.extui %0 : i1 to i32
    %c0_i32_0 = arith.constant 0 : i32
    %2 = arith.cmpi ne, %1, %c0_i32_0 : i32
    scf.if %2 {
      %cst_10 = arith.constant 0.000000e+00 : f32
      %12 = vector.broadcast %cst_10 : f32 to vector<64x128xf32>
      %c0_11 = arith.constant 0 : index
      %c0_12 = arith.constant 0 : index
      %13 = vector.load %arg7[%c0_11, %c0_12] : memref<64x128xf32, #tpu.memory_space<vmem>>, vector<64x128xf32>
      tpu.vector_store %arg7[%c0_11, %c0_12], %12 {strides = array<i32>} : memref<64x128xf32, #tpu.memory_space<vmem>>, vector<64x128xf32>,
    } else {
    }
    %c0 = arith.constant 0 : index
    %c0_1 = arith.constant 0 : index
    %3 = vector.load %arg7[%c0, %c0_1] : memref<64x128xf32, #tpu.memory_space<vmem>>, vector<64x128xf32>
    %c0_2 = arith.constant 0 : index
    %c0_3 = arith.constant 0 : index
    %4 = vector.load %arg3[%c0_2, %c0_3] : memref<64x128xbf16, #tpu.memory_space<vmem>>, vector<64x128xbf16>
    %c0_4 = arith.constant 0 : index
    %c0_5 = arith.constant 0 : index
    %5 = vector.load %arg4[%c0_4, %c0_5] : memref<128x128xbf16, #tpu.memory_space<vmem>>, vector<128x128xbf16>
    %cst = arith.constant dense<0.000000e+00> : vector<64x128xf32>
    %6 = tpu.matmul %4, %5, %cst {dimension_numbers = #tpu.dot_dimension_numbers<[1], [0], [0], [1], [0, 0, 1, 1], [], []>} : vector<64x128xbf16>, vector<128x128xbf16>, vector<64x128xf32> -> vector<64x128xf32>
    %7 = arith.addf %3, %6 : vector<64x128xf32>
    %c0_6 = arith.constant 0 : index
    %c0_7 = arith.constant 0 : index
    %8 = vector.load %arg7[%c0_6, %c0_7] : memref<64x128xf32, #tpu.memory_space<vmem>>, vector<64x128xf32>
    tpu.vector_store %arg7[%c0_6, %c0_7], %7 {strides = array<i32>} : memref<64x128xf32, #tpu.memory_space<vmem>>, vector<64x128xf32>,
    %c0_i32_8 = arith.constant 0 : i32
    %9 = arith.cmpi eq, %arg2, %c0_i32_8 : i32
    %10 = arith.extui %9 : i1 to i32
    %c0_i32_9 = arith.constant 0 : i32
    %11 = arith.cmpi ne, %10, %c0_i32_9 : i32
    scf.if %11 {
      %c0_10 = arith.constant 0 : index
      %c0_11 = arith.constant 0 : index
      %12 = vector.load %arg7[%c0_10, %c0_11] : memref<64x128xf32, #tpu.memory_space<vmem>>, vector<64x128xf32>
      %c0_12 = arith.constant 0 : index
      %c0_13 = arith.constant 0 : index
      %13 = vector.load %arg5[%c0_12, %c0_13] : memref<1x128xf32, #tpu.memory_space<vmem>>, vector<1x128xf32>
      %14 = vector.broadcast %13 : vector<1x128xf32> to vector<64x128xf32>
      %15 = arith.addf %12, %14 : vector<64x128xf32>
      %c0_14 = arith.constant 0 : index
      %c0_15 = arith.constant 0 : index
      %16 = vector.load %arg6[%c0_14, %c0_15] : memref<64x128xf32, #tpu.memory_space<vmem>>, vector<64x128xf32>
      tpu.vector_store %arg6[%c0_14, %c0_15], %15 {strides = array<i32>} : memref<64x128xf32, #tpu.memory_space<vmem>>, vector<64x128xf32>,
    } else {
    }
    return
  }
  func.func @transform_0(%arg0: i32, %arg1: i32, %arg2: i32) -> (i32, i32) {
    %c0_i32 = arith.constant 0 : i32
    return %arg1, %arg2 : i32, i32
  }
  func.func @transform_1(%arg0: i32, %arg1: i32, %arg2: i32) -> (i32, i32) {
    %c0_i32 = arith.constant 0 : i32
    return %arg2, %arg0 : i32, i32
  }
  func.func @transform_2(%arg0: i32, %arg1: i32, %arg2: i32) -> (i32, i32) {
    %c0_i32 = arith.constant 0 : i32
    %c0_i32_0 = arith.constant 0 : i32
    return %c0_i32, %arg0 : i32, i32
  }
  func.func @transform_3(%arg0: i32, %arg1: i32, %arg2: i32) -> (i32, i32) {
    %c0_i32 = arith.constant 0 : i32
    return %arg1, %arg0 : i32, i32
  }
}

module attributes {stable_mosaic.version = 11 : i64} {
  func.func @_linear_kernel(%arg0: i32, %arg1: i32, %arg2: i32, %arg3: memref<64x32xbf16, #tpu.memory_space<vmem>>, %arg4: memref<32x512xbf16, #tpu.memory_space<vmem>>, %arg5: memref<1x512xf32, #tpu.memory_space<vmem>>, %arg6: memref<64x512xbf16, #tpu.memory_space<vmem>>, %arg7: memref<64x512xf32, #tpu.memory_space<vmem>>) attributes {dimension_semantics = [#tpu.dimension_semantics<parallel>, #tpu.dimension_semantics<parallel>, #tpu.dimension_semantics<arbitrary>], iteration_bounds = array<i64: 1, 1, 1>, scalar_prefetch = 0 : i64, scratch_operands = 1 : i64, tpu.core_type = #tpu.core_type<tc>, window_params = [{transform_indices = @transform_0, window_bounds = array<i64: 64, 32>}, {transform_indices = @transform_1, window_bounds = array<i64: 32, 512>}, {transform_indices = @transform_2, window_bounds = array<i64: 1, 512>}, {transform_indices = @transform_3, window_bounds = array<i64: 64, 512>}]} {
    %c0_i32 = arith.constant 0 : i32
    %0 = arith.cmpi eq, %arg2, %c0_i32 : i32
    %1 = arith.extui %0 : i1 to i32
    %c0_i32_0 = arith.constant 0 : i32
    %2 = arith.cmpi ne, %1, %c0_i32_0 : i32
    scf.if %2 {
      %cst_10 = arith.constant 0.000000e+00 : f32
      %12 = vector.broadcast %cst_10 : f32 to vector<64x512xf32>
      %c0_11 = arith.constant 0 : index
      %c0_12 = arith.constant 0 : index
      %13 = vector.load %arg7[%c0_11, %c0_12] : memref<64x512xf32, #tpu.memory_space<vmem>>, vector<64x512xf32>
      tpu.vector_store %arg7[%c0_11, %c0_12], %12 {strides = array<i32>} : memref<64x512xf32, #tpu.memory_space<vmem>>, vector<64x512xf32>,
    } else {
    }
    %c0 = arith.constant 0 : index
    %c0_1 = arith.constant 0 : index
    %3 = vector.load %arg7[%c0, %c0_1] : memref<64x512xf32, #tpu.memory_space<vmem>>, vector<64x512xf32>
    %c0_2 = arith.constant 0 : index
    %c0_3 = arith.constant 0 : index
    %4 = vector.load %arg3[%c0_2, %c0_3] : memref<64x32xbf16, #tpu.memory_space<vmem>>, vector<64x32xbf16>
    %c0_4 = arith.constant 0 : index
    %c0_5 = arith.constant 0 : index
    %5 = vector.load %arg4[%c0_4, %c0_5] : memref<32x512xbf16, #tpu.memory_space<vmem>>, vector<32x512xbf16>
    %cst = arith.constant dense<0.000000e+00> : vector<64x512xf32>
    %6 = tpu.matmul %4, %5, %cst {dimension_numbers = #tpu.dot_dimension_numbers<[1], [0], [0], [1], [0, 0, 1, 1], [], []>} : vector<64x32xbf16>, vector<32x512xbf16>, vector<64x512xf32> -> vector<64x512xf32>
    %7 = arith.addf %3, %6 : vector<64x512xf32>
    %c0_6 = arith.constant 0 : index
    %c0_7 = arith.constant 0 : index
    %8 = vector.load %arg7[%c0_6, %c0_7] : memref<64x512xf32, #tpu.memory_space<vmem>>, vector<64x512xf32>
    tpu.vector_store %arg7[%c0_6, %c0_7], %7 {strides = array<i32>} : memref<64x512xf32, #tpu.memory_space<vmem>>, vector<64x512xf32>,
    %c0_i32_8 = arith.constant 0 : i32
    %9 = arith.cmpi eq, %arg2, %c0_i32_8 : i32
    %10 = arith.extui %9 : i1 to i32
    %c0_i32_9 = arith.constant 0 : i32
    %11 = arith.cmpi ne, %10, %c0_i32_9 : i32
    scf.if %11 {
      %c0_10 = arith.constant 0 : index
      %c0_11 = arith.constant 0 : index
      %12 = vector.load %arg7[%c0_10, %c0_11] : memref<64x512xf32, #tpu.memory_space<vmem>>, vector<64x512xf32>
      %c0_12 = arith.constant 0 : index
      %c0_13 = arith.constant 0 : index
      %13 = vector.load %arg5[%c0_12, %c0_13] : memref<1x512xf32, #tpu.memory_space<vmem>>, vector<1x512xf32>
      %14 = vector.broadcast %13 : vector<1x512xf32> to vector<64x512xf32>
      %15 = arith.addf %12, %14 : vector<64x512xf32>
      %16 = arith.truncf %15 : vector<64x512xf32> to vector<64x512xbf16>
      %c0_14 = arith.constant 0 : index
      %c0_15 = arith.constant 0 : index
      %17 = vector.load %arg6[%c0_14, %c0_15] : memref<64x512xbf16, #tpu.memory_space<vmem>>, vector<64x512xbf16>
      tpu.vector_store %arg6[%c0_14, %c0_15], %16 {strides = array<i32>} : memref<64x512xbf16, #tpu.memory_space<vmem>>, vector<64x512xbf16>,
    } else {
    }
    return
  }
  func.func @transform_0(%arg0: i32, %arg1: i32, %arg2: i32) -> (i32, i32) {
    %c0_i32 = arith.constant 0 : i32
    return %arg1, %arg2 : i32, i32
  }
  func.func @transform_1(%arg0: i32, %arg1: i32, %arg2: i32) -> (i32, i32) {
    %c0_i32 = arith.constant 0 : i32
    return %arg2, %arg0 : i32, i32
  }
  func.func @transform_2(%arg0: i32, %arg1: i32, %arg2: i32) -> (i32, i32) {
    %c0_i32 = arith.constant 0 : i32
    %c0_i32_0 = arith.constant 0 : i32
    return %c0_i32, %arg0 : i32, i32
  }
  func.func @transform_3(%arg0: i32, %arg1: i32, %arg2: i32) -> (i32, i32) {
    %c0_i32 = arith.constant 0 : i32
    return %arg1, %arg0 : i32, i32
  }
}

module attributes {stable_mosaic.version = 11 : i64} {
  func.func @_lstm_chunk_kernel(%arg0: i32, %arg1: i32, %arg2: memref<8x8x512xbf16, #tpu.memory_space<vmem>>, %arg3: memref<8x128xf32, #tpu.memory_space<vmem>>, %arg4: memref<8x128xf32, #tpu.memory_space<vmem>>, %arg5: memref<128x512xbf16, #tpu.memory_space<vmem>>, %arg6: memref<8x8x128xbf16, #tpu.memory_space<vmem>>, %arg7: memref<8x128xf32, #tpu.memory_space<vmem>>, %arg8: memref<8x128xf32, #tpu.memory_space<vmem>>, %arg9: memref<8x128xf32, #tpu.memory_space<vmem>>, %arg10: memref<8x128xf32, #tpu.memory_space<vmem>>) attributes {dimension_semantics = [#tpu.dimension_semantics<parallel>, #tpu.dimension_semantics<arbitrary>], iteration_bounds = array<i64: 1, 1>, scalar_prefetch = 0 : i64, scratch_operands = 2 : i64, tpu.core_type = #tpu.core_type<tc>, window_params = [{transform_indices = @transform_0, window_bounds = array<i64: 8, 8, 512>}, {transform_indices = @transform_1, window_bounds = array<i64: 8, 128>}, {transform_indices = @transform_2, window_bounds = array<i64: 8, 128>}, {pipeline_mode = #tpu.pipeline_mode<synchronous>, transform_indices = @transform_3, window_bounds = array<i64: 128, 512>}, {transform_indices = @transform_4, window_bounds = array<i64: 8, 8, 128>}, {transform_indices = @transform_5, window_bounds = array<i64: 8, 128>}, {transform_indices = @transform_6, window_bounds = array<i64: 8, 128>}]} {
    %c0_i32 = arith.constant 0 : i32
    %0 = arith.cmpi eq, %arg1, %c0_i32 : i32
    %1 = arith.extui %0 : i1 to i32
    %c0_i32_0 = arith.constant 0 : i32
    %2 = arith.cmpi ne, %1, %c0_i32_0 : i32
    scf.if %2 {
      %c0_146 = arith.constant 0 : index
      %c0_147 = arith.constant 0 : index
      %342 = vector.load %arg3[%c0_146, %c0_147] : memref<8x128xf32, #tpu.memory_space<vmem>>, vector<8x128xf32>
      %c0_148 = arith.constant 0 : index
      %c0_149 = arith.constant 0 : index
      %343 = vector.load %arg9[%c0_148, %c0_149] : memref<8x128xf32, #tpu.memory_space<vmem>>, vector<8x128xf32>
      tpu.vector_store %arg9[%c0_148, %c0_149], %342 {strides = array<i32>} : memref<8x128xf32, #tpu.memory_space<vmem>>, vector<8x128xf32>,
      %c0_150 = arith.constant 0 : index
      %c0_151 = arith.constant 0 : index
      %344 = vector.load %arg4[%c0_150, %c0_151] : memref<8x128xf32, #tpu.memory_space<vmem>>, vector<8x128xf32>
      %c0_152 = arith.constant 0 : index
      %c0_153 = arith.constant 0 : index
      %345 = vector.load %arg10[%c0_152, %c0_153] : memref<8x128xf32, #tpu.memory_space<vmem>>, vector<8x128xf32>
      tpu.vector_store %arg10[%c0_152, %c0_153], %344 {strides = array<i32>} : memref<8x128xf32, #tpu.memory_space<vmem>>, vector<8x128xf32>,
    } else {
    }
    %c0_i32_1 = arith.constant 0 : i32
    %c0 = arith.constant 0 : index
    %c0_2 = arith.constant 0 : index
    %3 = vector.load %arg9[%c0, %c0_2] : memref<8x128xf32, #tpu.memory_space<vmem>>, vector<8x128xf32>
    %c0_3 = arith.constant 0 : index
    %c0_4 = arith.constant 0 : index
    %4 = vector.load %arg10[%c0_3, %c0_4] : memref<8x128xf32, #tpu.memory_space<vmem>>, vector<8x128xf32>
    %5 = arith.index_cast %c0_i32_1 : i32 to index
    %c0_5 = arith.constant 0 : index
    %c0_6 = arith.constant 0 : index
    %6 = vector.load %arg2[%5, %c0_5, %c0_6] : memref<8x8x512xbf16, #tpu.memory_space<vmem>>, vector<1x8x512xbf16>
    %7 = vector.shape_cast %6 : vector<1x8x512xbf16> to vector<8x512xbf16>
    %8 = arith.extf %7 : vector<8x512xbf16> to vector<8x512xf32>
    %9 = arith.truncf %3 : vector<8x128xf32> to vector<8x128xbf16>
    %c0_7 = arith.constant 0 : index
    %c0_8 = arith.constant 0 : index
    %10 = vector.load %arg5[%c0_7, %c0_8] : memref<128x512xbf16, #tpu.memory_space<vmem>>, vector<128x512xbf16>
    %cst = arith.constant dense<0.000000e+00> : vector<8x512xf32>
    %11 = tpu.matmul %9, %10, %cst {dimension_numbers = #tpu.dot_dimension_numbers<[1], [0], [0], [1], [0, 0, 1, 1], [], []>} : vector<8x128xbf16>, vector<128x512xbf16>, vector<8x512xf32> -> vector<8x512xf32>
    %12 = arith.addf %8, %11 : vector<8x512xf32>
    %13 = vector.extract_strided_slice %12 {offsets = [0, 0], sizes = [8, 128], strides = [1, 1]} : vector<8x512xf32> to vector<8x128xf32>
    %14 = arith.negf %13 : vector<8x128xf32>
    %15 = math.exp %14 : vector<8x128xf32>
    %cst_9 = arith.constant 1.000000e+00 : f32
    %16 = vector.broadcast %cst_9 : f32 to vector<8x128xf32>
    %17 = arith.addf %16, %15 : vector<8x128xf32>
    %18 = arith.divf %16, %17 : vector<8x128xf32>
    %19 = vector.extract_strided_slice %12 {offsets = [0, 128], sizes = [8, 128], strides = [1, 1]} : vector<8x512xf32> to vector<8x128xf32>
    %20 = arith.negf %19 : vector<8x128xf32>
    %21 = math.exp %20 : vector<8x128xf32>
    %cst_10 = arith.constant 1.000000e+00 : f32
    %22 = vector.broadcast %cst_10 : f32 to vector<8x128xf32>
    %23 = arith.addf %22, %21 : vector<8x128xf32>
    %24 = arith.divf %22, %23 : vector<8x128xf32>
    %25 = vector.extract_strided_slice %12 {offsets = [0, 256], sizes = [8, 128], strides = [1, 1]} : vector<8x512xf32> to vector<8x128xf32>
    %26 = math.tanh %25 : vector<8x128xf32>
    %27 = vector.extract_strided_slice %12 {offsets = [0, 384], sizes = [8, 128], strides = [1, 1]} : vector<8x512xf32> to vector<8x128xf32>
    %28 = arith.negf %27 : vector<8x128xf32>
    %29 = math.exp %28 : vector<8x128xf32>
    %cst_11 = arith.constant 1.000000e+00 : f32
    %30 = vector.broadcast %cst_11 : f32 to vector<8x128xf32>
    %31 = arith.addf %30, %29 : vector<8x128xf32>
    %32 = arith.divf %30, %31 : vector<8x128xf32>
    %33 = arith.mulf %24, %4 : vector<8x128xf32>
    %34 = arith.mulf %18, %26 : vector<8x128xf32>
    %35 = arith.addf %33, %34 : vector<8x128xf32>
    %36 = math.tanh %35 : vector<8x128xf32>
    %37 = arith.mulf %32, %36 : vector<8x128xf32>
    %c0_12 = arith.constant 0 : index
    %c0_13 = arith.constant 0 : index
    %38 = vector.load %arg9[%c0_12, %c0_13] : memref<8x128xf32, #tpu.memory_space<vmem>>, vector<8x128xf32>
    tpu.vector_store %arg9[%c0_12, %c0_13], %37 {strides = array<i32>} : memref<8x128xf32, #tpu.memory_space<vmem>>, vector<8x128xf32>,
    %c0_14 = arith.constant 0 : index
    %c0_15 = arith.constant 0 : index
    %39 = vector.load %arg10[%c0_14, %c0_15] : memref<8x128xf32, #tpu.memory_space<vmem>>, vector<8x128xf32>
    tpu.vector_store %arg10[%c0_14, %c0_15], %35 {strides = array<i32>} : memref<8x128xf32, #tpu.memory_space<vmem>>, vector<8x128xf32>,
    %40 = arith.truncf %37 : vector<8x128xf32> to vector<8x128xbf16>
    %41 = arith.index_cast %c0_i32_1 : i32 to index
    %c0_16 = arith.constant 0 : index
    %c0_17 = arith.constant 0 : index
    %42 = vector.load %arg6[%41, %c0_16, %c0_17] : memref<8x8x128xbf16, #tpu.memory_space<vmem>>, vector<1x8x128xbf16>
    %43 = vector.shape_cast %42 : vector<1x8x128xbf16> to vector<8x128xbf16>
    %44 = vector.shape_cast %40 : vector<8x128xbf16> to vector<1x8x128xbf16>
    tpu.vector_store %arg6[%41, %c0_16, %c0_17], %44 {strides = array<i32>} : memref<8x8x128xbf16, #tpu.memory_space<vmem>>, vector<1x8x128xbf16>,
    %c1_i32 = arith.constant 1 : i32
    %c0_18 = arith.constant 0 : index
    %c0_19 = arith.constant 0 : index
    %45 = vector.load %arg9[%c0_18, %c0_19] : memref<8x128xf32, #tpu.memory_space<vmem>>, vector<8x128xf32>
    %c0_20 = arith.constant 0 : index
    %c0_21 = arith.constant 0 : index
    %46 = vector.load %arg10[%c0_20, %c0_21] : memref<8x128xf32, #tpu.memory_space<vmem>>, vector<8x128xf32>
    %47 = arith.index_cast %c1_i32 : i32 to index
    %c0_22 = arith.constant 0 : index
    %c0_23 = arith.constant 0 : index
    %48 = vector.load %arg2[%47, %c0_22, %c0_23] : memref<8x8x512xbf16, #tpu.memory_space<vmem>>, vector<1x8x512xbf16>
    %49 = vector.shape_cast %48 : vector<1x8x512xbf16> to vector<8x512xbf16>
    %50 = arith.extf %49 : vector<8x512xbf16> to vector<8x512xf32>
    %51 = arith.truncf %45 : vector<8x128xf32> to vector<8x128xbf16>
    %c0_24 = arith.constant 0 : index
    %c0_25 = arith.constant 0 : index
    %52 = vector.load %arg5[%c0_24, %c0_25] : memref<128x512xbf16, #tpu.memory_space<vmem>>, vector<128x512xbf16>
    %cst_26 = arith.constant dense<0.000000e+00> : vector<8x512xf32>
    %53 = tpu.matmul %51, %52, %cst_26 {dimension_numbers = #tpu.dot_dimension_numbers<[1], [0], [0], [1], [0, 0, 1, 1], [], []>} : vector<8x128xbf16>, vector<128x512xbf16>, vector<8x512xf32> -> vector<8x512xf32>
    %54 = arith.addf %50, %53 : vector<8x512xf32>
    %55 = vector.extract_strided_slice %54 {offsets = [0, 0], sizes = [8, 128], strides = [1, 1]} : vector<8x512xf32> to vector<8x128xf32>
    %56 = arith.negf %55 : vector<8x128xf32>
    %57 = math.exp %56 : vector<8x128xf32>
    %cst_27 = arith.constant 1.000000e+00 : f32
    %58 = vector.broadcast %cst_27 : f32 to vector<8x128xf32>
    %59 = arith.addf %58, %57 : vector<8x128xf32>
    %60 = arith.divf %58, %59 : vector<8x128xf32>
    %61 = vector.extract_strided_slice %54 {offsets = [0, 128], sizes = [8, 128], strides = [1, 1]} : vector<8x512xf32> to vector<8x128xf32>
    %62 = arith.negf %61 : vector<8x128xf32>
    %63 = math.exp %62 : vector<8x128xf32>
    %cst_28 = arith.constant 1.000000e+00 : f32
    %64 = vector.broadcast %cst_28 : f32 to vector<8x128xf32>
    %65 = arith.addf %64, %63 : vector<8x128xf32>
    %66 = arith.divf %64, %65 : vector<8x128xf32>
    %67 = vector.extract_strided_slice %54 {offsets = [0, 256], sizes = [8, 128], strides = [1, 1]} : vector<8x512xf32> to vector<8x128xf32>
    %68 = math.tanh %67 : vector<8x128xf32>
    %69 = vector.extract_strided_slice %54 {offsets = [0, 384], sizes = [8, 128], strides = [1, 1]} : vector<8x512xf32> to vector<8x128xf32>
    %70 = arith.negf %69 : vector<8x128xf32>
    %71 = math.exp %70 : vector<8x128xf32>
    %cst_29 = arith.constant 1.000000e+00 : f32
    %72 = vector.broadcast %cst_29 : f32 to vector<8x128xf32>
    %73 = arith.addf %72, %71 : vector<8x128xf32>
    %74 = arith.divf %72, %73 : vector<8x128xf32>
    %75 = arith.mulf %66, %46 : vector<8x128xf32>
    %76 = arith.mulf %60, %68 : vector<8x128xf32>
    %77 = arith.addf %75, %76 : vector<8x128xf32>
    %78 = math.tanh %77 : vector<8x128xf32>
    %79 = arith.mulf %74, %78 : vector<8x128xf32>
    %c0_30 = arith.constant 0 : index
    %c0_31 = arith.constant 0 : index
    %80 = vector.load %arg9[%c0_30, %c0_31] : memref<8x128xf32, #tpu.memory_space<vmem>>, vector<8x128xf32>
    tpu.vector_store %arg9[%c0_30, %c0_31], %79 {strides = array<i32>} : memref<8x128xf32, #tpu.memory_space<vmem>>, vector<8x128xf32>,
    %c0_32 = arith.constant 0 : index
    %c0_33 = arith.constant 0 : index
    %81 = vector.load %arg10[%c0_32, %c0_33] : memref<8x128xf32, #tpu.memory_space<vmem>>, vector<8x128xf32>
    tpu.vector_store %arg10[%c0_32, %c0_33], %77 {strides = array<i32>} : memref<8x128xf32, #tpu.memory_space<vmem>>, vector<8x128xf32>,
    %82 = arith.truncf %79 : vector<8x128xf32> to vector<8x128xbf16>
    %83 = arith.index_cast %c1_i32 : i32 to index
    %c0_34 = arith.constant 0 : index
    %c0_35 = arith.constant 0 : index
    %84 = vector.load %arg6[%83, %c0_34, %c0_35] : memref<8x8x128xbf16, #tpu.memory_space<vmem>>, vector<1x8x128xbf16>
    %85 = vector.shape_cast %84 : vector<1x8x128xbf16> to vector<8x128xbf16>
    %86 = vector.shape_cast %82 : vector<8x128xbf16> to vector<1x8x128xbf16>
    tpu.vector_store %arg6[%83, %c0_34, %c0_35], %86 {strides = array<i32>} : memref<8x8x128xbf16, #tpu.memory_space<vmem>>, vector<1x8x128xbf16>,
    %c2_i32 = arith.constant 2 : i32
    %c0_36 = arith.constant 0 : index
    %c0_37 = arith.constant 0 : index
    %87 = vector.load %arg9[%c0_36, %c0_37] : memref<8x128xf32, #tpu.memory_space<vmem>>, vector<8x128xf32>
    %c0_38 = arith.constant 0 : index
    %c0_39 = arith.constant 0 : index
    %88 = vector.load %arg10[%c0_38, %c0_39] : memref<8x128xf32, #tpu.memory_space<vmem>>, vector<8x128xf32>
    %89 = arith.index_cast %c2_i32 : i32 to index
    %c0_40 = arith.constant 0 : index
    %c0_41 = arith.constant 0 : index
    %90 = vector.load %arg2[%89, %c0_40, %c0_41] : memref<8x8x512xbf16, #tpu.memory_space<vmem>>, vector<1x8x512xbf16>
    %91 = vector.shape_cast %90 : vector<1x8x512xbf16> to vector<8x512xbf16>
    %92 = arith.extf %91 : vector<8x512xbf16> to vector<8x512xf32>
    %93 = arith.truncf %87 : vector<8x128xf32> to vector<8x128xbf16>
    %c0_42 = arith.constant 0 : index
    %c0_43 = arith.constant 0 : index
    %94 = vector.load %arg5[%c0_42, %c0_43] : memref<128x512xbf16, #tpu.memory_space<vmem>>, vector<128x512xbf16>
    %cst_44 = arith.constant dense<0.000000e+00> : vector<8x512xf32>
    %95 = tpu.matmul %93, %94, %cst_44 {dimension_numbers = #tpu.dot_dimension_numbers<[1], [0], [0], [1], [0, 0, 1, 1], [], []>} : vector<8x128xbf16>, vector<128x512xbf16>, vector<8x512xf32> -> vector<8x512xf32>
    %96 = arith.addf %92, %95 : vector<8x512xf32>
    %97 = vector.extract_strided_slice %96 {offsets = [0, 0], sizes = [8, 128], strides = [1, 1]} : vector<8x512xf32> to vector<8x128xf32>
    %98 = arith.negf %97 : vector<8x128xf32>
    %99 = math.exp %98 : vector<8x128xf32>
    %cst_45 = arith.constant 1.000000e+00 : f32
    %100 = vector.broadcast %cst_45 : f32 to vector<8x128xf32>
    %101 = arith.addf %100, %99 : vector<8x128xf32>
    %102 = arith.divf %100, %101 : vector<8x128xf32>
    %103 = vector.extract_strided_slice %96 {offsets = [0, 128], sizes = [8, 128], strides = [1, 1]} : vector<8x512xf32> to vector<8x128xf32>
    %104 = arith.negf %103 : vector<8x128xf32>
    %105 = math.exp %104 : vector<8x128xf32>
    %cst_46 = arith.constant 1.000000e+00 : f32
    %106 = vector.broadcast %cst_46 : f32 to vector<8x128xf32>
    %107 = arith.addf %106, %105 : vector<8x128xf32>
    %108 = arith.divf %106, %107 : vector<8x128xf32>
    %109 = vector.extract_strided_slice %96 {offsets = [0, 256], sizes = [8, 128], strides = [1, 1]} : vector<8x512xf32> to vector<8x128xf32>
    %110 = math.tanh %109 : vector<8x128xf32>
    %111 = vector.extract_strided_slice %96 {offsets = [0, 384], sizes = [8, 128], strides = [1, 1]} : vector<8x512xf32> to vector<8x128xf32>
    %112 = arith.negf %111 : vector<8x128xf32>
    %113 = math.exp %112 : vector<8x128xf32>
    %cst_47 = arith.constant 1.000000e+00 : f32
    %114 = vector.broadcast %cst_47 : f32 to vector<8x128xf32>
    %115 = arith.addf %114, %113 : vector<8x128xf32>
    %116 = arith.divf %114, %115 : vector<8x128xf32>
    %117 = arith.mulf %108, %88 : vector<8x128xf32>
    %118 = arith.mulf %102, %110 : vector<8x128xf32>
    %119 = arith.addf %117, %118 : vector<8x128xf32>
    %120 = math.tanh %119 : vector<8x128xf32>
    %121 = arith.mulf %116, %120 : vector<8x128xf32>
    %c0_48 = arith.constant 0 : index
    %c0_49 = arith.constant 0 : index
    %122 = vector.load %arg9[%c0_48, %c0_49] : memref<8x128xf32, #tpu.memory_space<vmem>>, vector<8x128xf32>
    tpu.vector_store %arg9[%c0_48, %c0_49], %121 {strides = array<i32>} : memref<8x128xf32, #tpu.memory_space<vmem>>, vector<8x128xf32>,
    %c0_50 = arith.constant 0 : index
    %c0_51 = arith.constant 0 : index
    %123 = vector.load %arg10[%c0_50, %c0_51] : memref<8x128xf32, #tpu.memory_space<vmem>>, vector<8x128xf32>
    tpu.vector_store %arg10[%c0_50, %c0_51], %119 {strides = array<i32>} : memref<8x128xf32, #tpu.memory_space<vmem>>, vector<8x128xf32>,
    %124 = arith.truncf %121 : vector<8x128xf32> to vector<8x128xbf16>
    %125 = arith.index_cast %c2_i32 : i32 to index
    %c0_52 = arith.constant 0 : index
    %c0_53 = arith.constant 0 : index
    %126 = vector.load %arg6[%125, %c0_52, %c0_53] : memref<8x8x128xbf16, #tpu.memory_space<vmem>>, vector<1x8x128xbf16>
    %127 = vector.shape_cast %126 : vector<1x8x128xbf16> to vector<8x128xbf16>
    %128 = vector.shape_cast %124 : vector<8x128xbf16> to vector<1x8x128xbf16>
    tpu.vector_store %arg6[%125, %c0_52, %c0_53], %128 {strides = array<i32>} : memref<8x8x128xbf16, #tpu.memory_space<vmem>>, vector<1x8x128xbf16>,
    %c3_i32 = arith.constant 3 : i32
    %c0_54 = arith.constant 0 : index
    %c0_55 = arith.constant 0 : index
    %129 = vector.load %arg9[%c0_54, %c0_55] : memref<8x128xf32, #tpu.memory_space<vmem>>, vector<8x128xf32>
    %c0_56 = arith.constant 0 : index
    %c0_57 = arith.constant 0 : index
    %130 = vector.load %arg10[%c0_56, %c0_57] : memref<8x128xf32, #tpu.memory_space<vmem>>, vector<8x128xf32>
    %131 = arith.index_cast %c3_i32 : i32 to index
    %c0_58 = arith.constant 0 : index
    %c0_59 = arith.constant 0 : index
    %132 = vector.load %arg2[%131, %c0_58, %c0_59] : memref<8x8x512xbf16, #tpu.memory_space<vmem>>, vector<1x8x512xbf16>
    %133 = vector.shape_cast %132 : vector<1x8x512xbf16> to vector<8x512xbf16>
    %134 = arith.extf %133 : vector<8x512xbf16> to vector<8x512xf32>
    %135 = arith.truncf %129 : vector<8x128xf32> to vector<8x128xbf16>
    %c0_60 = arith.constant 0 : index
    %c0_61 = arith.constant 0 : index
    %136 = vector.load %arg5[%c0_60, %c0_61] : memref<128x512xbf16, #tpu.memory_space<vmem>>, vector<128x512xbf16>
    %cst_62 = arith.constant dense<0.000000e+00> : vector<8x512xf32>
    %137 = tpu.matmul %135, %136, %cst_62 {dimension_numbers = #tpu.dot_dimension_numbers<[1], [0], [0], [1], [0, 0, 1, 1], [], []>} : vector<8x128xbf16>, vector<128x512xbf16>, vector<8x512xf32> -> vector<8x512xf32>
    %138 = arith.addf %134, %137 : vector<8x512xf32>
    %139 = vector.extract_strided_slice %138 {offsets = [0, 0], sizes = [8, 128], strides = [1, 1]} : vector<8x512xf32> to vector<8x128xf32>
    %140 = arith.negf %139 : vector<8x128xf32>
    %141 = math.exp %140 : vector<8x128xf32>
    %cst_63 = arith.constant 1.000000e+00 : f32
    %142 = vector.broadcast %cst_63 : f32 to vector<8x128xf32>
    %143 = arith.addf %142, %141 : vector<8x128xf32>
    %144 = arith.divf %142, %143 : vector<8x128xf32>
    %145 = vector.extract_strided_slice %138 {offsets = [0, 128], sizes = [8, 128], strides = [1, 1]} : vector<8x512xf32> to vector<8x128xf32>
    %146 = arith.negf %145 : vector<8x128xf32>
    %147 = math.exp %146 : vector<8x128xf32>
    %cst_64 = arith.constant 1.000000e+00 : f32
    %148 = vector.broadcast %cst_64 : f32 to vector<8x128xf32>
    %149 = arith.addf %148, %147 : vector<8x128xf32>
    %150 = arith.divf %148, %149 : vector<8x128xf32>
    %151 = vector.extract_strided_slice %138 {offsets = [0, 256], sizes = [8, 128], strides = [1, 1]} : vector<8x512xf32> to vector<8x128xf32>
    %152 = math.tanh %151 : vector<8x128xf32>
    %153 = vector.extract_strided_slice %138 {offsets = [0, 384], sizes = [8, 128], strides = [1, 1]} : vector<8x512xf32> to vector<8x128xf32>
    %154 = arith.negf %153 : vector<8x128xf32>
    %155 = math.exp %154 : vector<8x128xf32>
    %cst_65 = arith.constant 1.000000e+00 : f32
    %156 = vector.broadcast %cst_65 : f32 to vector<8x128xf32>
    %157 = arith.addf %156, %155 : vector<8x128xf32>
    %158 = arith.divf %156, %157 : vector<8x128xf32>
    %159 = arith.mulf %150, %130 : vector<8x128xf32>
    %160 = arith.mulf %144, %152 : vector<8x128xf32>
    %161 = arith.addf %159, %160 : vector<8x128xf32>
    %162 = math.tanh %161 : vector<8x128xf32>
    %163 = arith.mulf %158, %162 : vector<8x128xf32>
    %c0_66 = arith.constant 0 : index
    %c0_67 = arith.constant 0 : index
    %164 = vector.load %arg9[%c0_66, %c0_67] : memref<8x128xf32, #tpu.memory_space<vmem>>, vector<8x128xf32>
    tpu.vector_store %arg9[%c0_66, %c0_67], %163 {strides = array<i32>} : memref<8x128xf32, #tpu.memory_space<vmem>>, vector<8x128xf32>,
    %c0_68 = arith.constant 0 : index
    %c0_69 = arith.constant 0 : index
    %165 = vector.load %arg10[%c0_68, %c0_69] : memref<8x128xf32, #tpu.memory_space<vmem>>, vector<8x128xf32>
    tpu.vector_store %arg10[%c0_68, %c0_69], %161 {strides = array<i32>} : memref<8x128xf32, #tpu.memory_space<vmem>>, vector<8x128xf32>,
    %166 = arith.truncf %163 : vector<8x128xf32> to vector<8x128xbf16>
    %167 = arith.index_cast %c3_i32 : i32 to index
    %c0_70 = arith.constant 0 : index
    %c0_71 = arith.constant 0 : index
    %168 = vector.load %arg6[%167, %c0_70, %c0_71] : memref<8x8x128xbf16, #tpu.memory_space<vmem>>, vector<1x8x128xbf16>
    %169 = vector.shape_cast %168 : vector<1x8x128xbf16> to vector<8x128xbf16>
    %170 = vector.shape_cast %166 : vector<8x128xbf16> to vector<1x8x128xbf16>
    tpu.vector_store %arg6[%167, %c0_70, %c0_71], %170 {strides = array<i32>} : memref<8x8x128xbf16, #tpu.memory_space<vmem>>, vector<1x8x128xbf16>,
    %c4_i32 = arith.constant 4 : i32
    %c0_72 = arith.constant 0 : index
    %c0_73 = arith.constant 0 : index
    %171 = vector.load %arg9[%c0_72, %c0_73] : memref<8x128xf32, #tpu.memory_space<vmem>>, vector<8x128xf32>
    %c0_74 = arith.constant 0 : index
    %c0_75 = arith.constant 0 : index
    %172 = vector.load %arg10[%c0_74, %c0_75] : memref<8x128xf32, #tpu.memory_space<vmem>>, vector<8x128xf32>
    %173 = arith.index_cast %c4_i32 : i32 to index
    %c0_76 = arith.constant 0 : index
    %c0_77 = arith.constant 0 : index
    %174 = vector.load %arg2[%173, %c0_76, %c0_77] : memref<8x8x512xbf16, #tpu.memory_space<vmem>>, vector<1x8x512xbf16>
    %175 = vector.shape_cast %174 : vector<1x8x512xbf16> to vector<8x512xbf16>
    %176 = arith.extf %175 : vector<8x512xbf16> to vector<8x512xf32>
    %177 = arith.truncf %171 : vector<8x128xf32> to vector<8x128xbf16>
    %c0_78 = arith.constant 0 : index
    %c0_79 = arith.constant 0 : index
    %178 = vector.load %arg5[%c0_78, %c0_79] : memref<128x512xbf16, #tpu.memory_space<vmem>>, vector<128x512xbf16>
    %cst_80 = arith.constant dense<0.000000e+00> : vector<8x512xf32>
    %179 = tpu.matmul %177, %178, %cst_80 {dimension_numbers = #tpu.dot_dimension_numbers<[1], [0], [0], [1], [0, 0, 1, 1], [], []>} : vector<8x128xbf16>, vector<128x512xbf16>, vector<8x512xf32> -> vector<8x512xf32>
    %180 = arith.addf %176, %179 : vector<8x512xf32>
    %181 = vector.extract_strided_slice %180 {offsets = [0, 0], sizes = [8, 128], strides = [1, 1]} : vector<8x512xf32> to vector<8x128xf32>
    %182 = arith.negf %181 : vector<8x128xf32>
    %183 = math.exp %182 : vector<8x128xf32>
    %cst_81 = arith.constant 1.000000e+00 : f32
    %184 = vector.broadcast %cst_81 : f32 to vector<8x128xf32>
    %185 = arith.addf %184, %183 : vector<8x128xf32>
    %186 = arith.divf %184, %185 : vector<8x128xf32>
    %187 = vector.extract_strided_slice %180 {offsets = [0, 128], sizes = [8, 128], strides = [1, 1]} : vector<8x512xf32> to vector<8x128xf32>
    %188 = arith.negf %187 : vector<8x128xf32>
    %189 = math.exp %188 : vector<8x128xf32>
    %cst_82 = arith.constant 1.000000e+00 : f32
    %190 = vector.broadcast %cst_82 : f32 to vector<8x128xf32>
    %191 = arith.addf %190, %189 : vector<8x128xf32>
    %192 = arith.divf %190, %191 : vector<8x128xf32>
    %193 = vector.extract_strided_slice %180 {offsets = [0, 256], sizes = [8, 128], strides = [1, 1]} : vector<8x512xf32> to vector<8x128xf32>
    %194 = math.tanh %193 : vector<8x128xf32>
    %195 = vector.extract_strided_slice %180 {offsets = [0, 384], sizes = [8, 128], strides = [1, 1]} : vector<8x512xf32> to vector<8x128xf32>
    %196 = arith.negf %195 : vector<8x128xf32>
    %197 = math.exp %196 : vector<8x128xf32>
    %cst_83 = arith.constant 1.000000e+00 : f32
    %198 = vector.broadcast %cst_83 : f32 to vector<8x128xf32>
    %199 = arith.addf %198, %197 : vector<8x128xf32>
    %200 = arith.divf %198, %199 : vector<8x128xf32>
    %201 = arith.mulf %192, %172 : vector<8x128xf32>
    %202 = arith.mulf %186, %194 : vector<8x128xf32>
    %203 = arith.addf %201, %202 : vector<8x128xf32>
    %204 = math.tanh %203 : vector<8x128xf32>
    %205 = arith.mulf %200, %204 : vector<8x128xf32>
    %c0_84 = arith.constant 0 : index
    %c0_85 = arith.constant 0 : index
    %206 = vector.load %arg9[%c0_84, %c0_85] : memref<8x128xf32, #tpu.memory_space<vmem>>, vector<8x128xf32>
    tpu.vector_store %arg9[%c0_84, %c0_85], %205 {strides = array<i32>} : memref<8x128xf32, #tpu.memory_space<vmem>>, vector<8x128xf32>,
    %c0_86 = arith.constant 0 : index
    %c0_87 = arith.constant 0 : index
    %207 = vector.load %arg10[%c0_86, %c0_87] : memref<8x128xf32, #tpu.memory_space<vmem>>, vector<8x128xf32>
    tpu.vector_store %arg10[%c0_86, %c0_87], %203 {strides = array<i32>} : memref<8x128xf32, #tpu.memory_space<vmem>>, vector<8x128xf32>,
    %208 = arith.truncf %205 : vector<8x128xf32> to vector<8x128xbf16>
    %209 = arith.index_cast %c4_i32 : i32 to index
    %c0_88 = arith.constant 0 : index
    %c0_89 = arith.constant 0 : index
    %210 = vector.load %arg6[%209, %c0_88, %c0_89] : memref<8x8x128xbf16, #tpu.memory_space<vmem>>, vector<1x8x128xbf16>
    %211 = vector.shape_cast %210 : vector<1x8x128xbf16> to vector<8x128xbf16>
    %212 = vector.shape_cast %208 : vector<8x128xbf16> to vector<1x8x128xbf16>
    tpu.vector_store %arg6[%209, %c0_88, %c0_89], %212 {strides = array<i32>} : memref<8x8x128xbf16, #tpu.memory_space<vmem>>, vector<1x8x128xbf16>,
    %c5_i32 = arith.constant 5 : i32
    %c0_90 = arith.constant 0 : index
    %c0_91 = arith.constant 0 : index
    %213 = vector.load %arg9[%c0_90, %c0_91] : memref<8x128xf32, #tpu.memory_space<vmem>>, vector<8x128xf32>
    %c0_92 = arith.constant 0 : index
    %c0_93 = arith.constant 0 : index
    %214 = vector.load %arg10[%c0_92, %c0_93] : memref<8x128xf32, #tpu.memory_space<vmem>>, vector<8x128xf32>
    %215 = arith.index_cast %c5_i32 : i32 to index
    %c0_94 = arith.constant 0 : index
    %c0_95 = arith.constant 0 : index
    %216 = vector.load %arg2[%215, %c0_94, %c0_95] : memref<8x8x512xbf16, #tpu.memory_space<vmem>>, vector<1x8x512xbf16>
    %217 = vector.shape_cast %216 : vector<1x8x512xbf16> to vector<8x512xbf16>
    %218 = arith.extf %217 : vector<8x512xbf16> to vector<8x512xf32>
    %219 = arith.truncf %213 : vector<8x128xf32> to vector<8x128xbf16>
    %c0_96 = arith.constant 0 : index
    %c0_97 = arith.constant 0 : index
    %220 = vector.load %arg5[%c0_96, %c0_97] : memref<128x512xbf16, #tpu.memory_space<vmem>>, vector<128x512xbf16>
    %cst_98 = arith.constant dense<0.000000e+00> : vector<8x512xf32>
    %221 = tpu.matmul %219, %220, %cst_98 {dimension_numbers = #tpu.dot_dimension_numbers<[1], [0], [0], [1], [0, 0, 1, 1], [], []>} : vector<8x128xbf16>, vector<128x512xbf16>, vector<8x512xf32> -> vector<8x512xf32>
    %222 = arith.addf %218, %221 : vector<8x512xf32>
    %223 = vector.extract_strided_slice %222 {offsets = [0, 0], sizes = [8, 128], strides = [1, 1]} : vector<8x512xf32> to vector<8x128xf32>
    %224 = arith.negf %223 : vector<8x128xf32>
    %225 = math.exp %224 : vector<8x128xf32>
    %cst_99 = arith.constant 1.000000e+00 : f32
    %226 = vector.broadcast %cst_99 : f32 to vector<8x128xf32>
    %227 = arith.addf %226, %225 : vector<8x128xf32>
    %228 = arith.divf %226, %227 : vector<8x128xf32>
    %229 = vector.extract_strided_slice %222 {offsets = [0, 128], sizes = [8, 128], strides = [1, 1]} : vector<8x512xf32> to vector<8x128xf32>
    %230 = arith.negf %229 : vector<8x128xf32>
    %231 = math.exp %230 : vector<8x128xf32>
    %cst_100 = arith.constant 1.000000e+00 : f32
    %232 = vector.broadcast %cst_100 : f32 to vector<8x128xf32>
    %233 = arith.addf %232, %231 : vector<8x128xf32>
    %234 = arith.divf %232, %233 : vector<8x128xf32>
    %235 = vector.extract_strided_slice %222 {offsets = [0, 256], sizes = [8, 128], strides = [1, 1]} : vector<8x512xf32> to vector<8x128xf32>
    %236 = math.tanh %235 : vector<8x128xf32>
    %237 = vector.extract_strided_slice %222 {offsets = [0, 384], sizes = [8, 128], strides = [1, 1]} : vector<8x512xf32> to vector<8x128xf32>
    %238 = arith.negf %237 : vector<8x128xf32>
    %239 = math.exp %238 : vector<8x128xf32>
    %cst_101 = arith.constant 1.000000e+00 : f32
    %240 = vector.broadcast %cst_101 : f32 to vector<8x128xf32>
    %241 = arith.addf %240, %239 : vector<8x128xf32>
    %242 = arith.divf %240, %241 : vector<8x128xf32>
    %243 = arith.mulf %234, %214 : vector<8x128xf32>
    %244 = arith.mulf %228, %236 : vector<8x128xf32>
    %245 = arith.addf %243, %244 : vector<8x128xf32>
    %246 = math.tanh %245 : vector<8x128xf32>
    %247 = arith.mulf %242, %246 : vector<8x128xf32>
    %c0_102 = arith.constant 0 : index
    %c0_103 = arith.constant 0 : index
    %248 = vector.load %arg9[%c0_102, %c0_103] : memref<8x128xf32, #tpu.memory_space<vmem>>, vector<8x128xf32>
    tpu.vector_store %arg9[%c0_102, %c0_103], %247 {strides = array<i32>} : memref<8x128xf32, #tpu.memory_space<vmem>>, vector<8x128xf32>,
    %c0_104 = arith.constant 0 : index
    %c0_105 = arith.constant 0 : index
    %249 = vector.load %arg10[%c0_104, %c0_105] : memref<8x128xf32, #tpu.memory_space<vmem>>, vector<8x128xf32>
    tpu.vector_store %arg10[%c0_104, %c0_105], %245 {strides = array<i32>} : memref<8x128xf32, #tpu.memory_space<vmem>>, vector<8x128xf32>,
    %250 = arith.truncf %247 : vector<8x128xf32> to vector<8x128xbf16>
    %251 = arith.index_cast %c5_i32 : i32 to index
    %c0_106 = arith.constant 0 : index
    %c0_107 = arith.constant 0 : index
    %252 = vector.load %arg6[%251, %c0_106, %c0_107] : memref<8x8x128xbf16, #tpu.memory_space<vmem>>, vector<1x8x128xbf16>
    %253 = vector.shape_cast %252 : vector<1x8x128xbf16> to vector<8x128xbf16>
    %254 = vector.shape_cast %250 : vector<8x128xbf16> to vector<1x8x128xbf16>
    tpu.vector_store %arg6[%251, %c0_106, %c0_107], %254 {strides = array<i32>} : memref<8x8x128xbf16, #tpu.memory_space<vmem>>, vector<1x8x128xbf16>,
    %c6_i32 = arith.constant 6 : i32
    %c0_108 = arith.constant 0 : index
    %c0_109 = arith.constant 0 : index
    %255 = vector.load %arg9[%c0_108, %c0_109] : memref<8x128xf32, #tpu.memory_space<vmem>>, vector<8x128xf32>
    %c0_110 = arith.constant 0 : index
    %c0_111 = arith.constant 0 : index
    %256 = vector.load %arg10[%c0_110, %c0_111] : memref<8x128xf32, #tpu.memory_space<vmem>>, vector<8x128xf32>
    %257 = arith.index_cast %c6_i32 : i32 to index
    %c0_112 = arith.constant 0 : index
    %c0_113 = arith.constant 0 : index
    %258 = vector.load %arg2[%257, %c0_112, %c0_113] : memref<8x8x512xbf16, #tpu.memory_space<vmem>>, vector<1x8x512xbf16>
    %259 = vector.shape_cast %258 : vector<1x8x512xbf16> to vector<8x512xbf16>
    %260 = arith.extf %259 : vector<8x512xbf16> to vector<8x512xf32>
    %261 = arith.truncf %255 : vector<8x128xf32> to vector<8x128xbf16>
    %c0_114 = arith.constant 0 : index
    %c0_115 = arith.constant 0 : index
    %262 = vector.load %arg5[%c0_114, %c0_115] : memref<128x512xbf16, #tpu.memory_space<vmem>>, vector<128x512xbf16>
    %cst_116 = arith.constant dense<0.000000e+00> : vector<8x512xf32>
    %263 = tpu.matmul %261, %262, %cst_116 {dimension_numbers = #tpu.dot_dimension_numbers<[1], [0], [0], [1], [0, 0, 1, 1], [], []>} : vector<8x128xbf16>, vector<128x512xbf16>, vector<8x512xf32> -> vector<8x512xf32>
    %264 = arith.addf %260, %263 : vector<8x512xf32>
    %265 = vector.extract_strided_slice %264 {offsets = [0, 0], sizes = [8, 128], strides = [1, 1]} : vector<8x512xf32> to vector<8x128xf32>
    %266 = arith.negf %265 : vector<8x128xf32>
    %267 = math.exp %266 : vector<8x128xf32>
    %cst_117 = arith.constant 1.000000e+00 : f32
    %268 = vector.broadcast %cst_117 : f32 to vector<8x128xf32>
    %269 = arith.addf %268, %267 : vector<8x128xf32>
    %270 = arith.divf %268, %269 : vector<8x128xf32>
    %271 = vector.extract_strided_slice %264 {offsets = [0, 128], sizes = [8, 128], strides = [1, 1]} : vector<8x512xf32> to vector<8x128xf32>
    %272 = arith.negf %271 : vector<8x128xf32>
    %273 = math.exp %272 : vector<8x128xf32>
    %cst_118 = arith.constant 1.000000e+00 : f32
    %274 = vector.broadcast %cst_118 : f32 to vector<8x128xf32>
    %275 = arith.addf %274, %273 : vector<8x128xf32>
    %276 = arith.divf %274, %275 : vector<8x128xf32>
    %277 = vector.extract_strided_slice %264 {offsets = [0, 256], sizes = [8, 128], strides = [1, 1]} : vector<8x512xf32> to vector<8x128xf32>
    %278 = math.tanh %277 : vector<8x128xf32>
    %279 = vector.extract_strided_slice %264 {offsets = [0, 384], sizes = [8, 128], strides = [1, 1]} : vector<8x512xf32> to vector<8x128xf32>
    %280 = arith.negf %279 : vector<8x128xf32>
    %281 = math.exp %280 : vector<8x128xf32>
    %cst_119 = arith.constant 1.000000e+00 : f32
    %282 = vector.broadcast %cst_119 : f32 to vector<8x128xf32>
    %283 = arith.addf %282, %281 : vector<8x128xf32>
    %284 = arith.divf %282, %283 : vector<8x128xf32>
    %285 = arith.mulf %276, %256 : vector<8x128xf32>
    %286 = arith.mulf %270, %278 : vector<8x128xf32>
    %287 = arith.addf %285, %286 : vector<8x128xf32>
    %288 = math.tanh %287 : vector<8x128xf32>
    %289 = arith.mulf %284, %288 : vector<8x128xf32>
    %c0_120 = arith.constant 0 : index
    %c0_121 = arith.constant 0 : index
    %290 = vector.load %arg9[%c0_120, %c0_121] : memref<8x128xf32, #tpu.memory_space<vmem>>, vector<8x128xf32>
    tpu.vector_store %arg9[%c0_120, %c0_121], %289 {strides = array<i32>} : memref<8x128xf32, #tpu.memory_space<vmem>>, vector<8x128xf32>,
    %c0_122 = arith.constant 0 : index
    %c0_123 = arith.constant 0 : index
    %291 = vector.load %arg10[%c0_122, %c0_123] : memref<8x128xf32, #tpu.memory_space<vmem>>, vector<8x128xf32>
    tpu.vector_store %arg10[%c0_122, %c0_123], %287 {strides = array<i32>} : memref<8x128xf32, #tpu.memory_space<vmem>>, vector<8x128xf32>,
    %292 = arith.truncf %289 : vector<8x128xf32> to vector<8x128xbf16>
    %293 = arith.index_cast %c6_i32 : i32 to index
    %c0_124 = arith.constant 0 : index
    %c0_125 = arith.constant 0 : index
    %294 = vector.load %arg6[%293, %c0_124, %c0_125] : memref<8x8x128xbf16, #tpu.memory_space<vmem>>, vector<1x8x128xbf16>
    %295 = vector.shape_cast %294 : vector<1x8x128xbf16> to vector<8x128xbf16>
    %296 = vector.shape_cast %292 : vector<8x128xbf16> to vector<1x8x128xbf16>
    tpu.vector_store %arg6[%293, %c0_124, %c0_125], %296 {strides = array<i32>} : memref<8x8x128xbf16, #tpu.memory_space<vmem>>, vector<1x8x128xbf16>,
    %c7_i32 = arith.constant 7 : i32
    %c0_126 = arith.constant 0 : index
    %c0_127 = arith.constant 0 : index
    %297 = vector.load %arg9[%c0_126, %c0_127] : memref<8x128xf32, #tpu.memory_space<vmem>>, vector<8x128xf32>
    %c0_128 = arith.constant 0 : index
    %c0_129 = arith.constant 0 : index
    %298 = vector.load %arg10[%c0_128, %c0_129] : memref<8x128xf32, #tpu.memory_space<vmem>>, vector<8x128xf32>
    %299 = arith.index_cast %c7_i32 : i32 to index
    %c0_130 = arith.constant 0 : index
    %c0_131 = arith.constant 0 : index
    %300 = vector.load %arg2[%299, %c0_130, %c0_131] : memref<8x8x512xbf16, #tpu.memory_space<vmem>>, vector<1x8x512xbf16>
    %301 = vector.shape_cast %300 : vector<1x8x512xbf16> to vector<8x512xbf16>
    %302 = arith.extf %301 : vector<8x512xbf16> to vector<8x512xf32>
    %303 = arith.truncf %297 : vector<8x128xf32> to vector<8x128xbf16>
    %c0_132 = arith.constant 0 : index
    %c0_133 = arith.constant 0 : index
    %304 = vector.load %arg5[%c0_132, %c0_133] : memref<128x512xbf16, #tpu.memory_space<vmem>>, vector<128x512xbf16>
    %cst_134 = arith.constant dense<0.000000e+00> : vector<8x512xf32>
    %305 = tpu.matmul %303, %304, %cst_134 {dimension_numbers = #tpu.dot_dimension_numbers<[1], [0], [0], [1], [0, 0, 1, 1], [], []>} : vector<8x128xbf16>, vector<128x512xbf16>, vector<8x512xf32> -> vector<8x512xf32>
    %306 = arith.addf %302, %305 : vector<8x512xf32>
    %307 = vector.extract_strided_slice %306 {offsets = [0, 0], sizes = [8, 128], strides = [1, 1]} : vector<8x512xf32> to vector<8x128xf32>
    %308 = arith.negf %307 : vector<8x128xf32>
    %309 = math.exp %308 : vector<8x128xf32>
    %cst_135 = arith.constant 1.000000e+00 : f32
    %310 = vector.broadcast %cst_135 : f32 to vector<8x128xf32>
    %311 = arith.addf %310, %309 : vector<8x128xf32>
    %312 = arith.divf %310, %311 : vector<8x128xf32>
    %313 = vector.extract_strided_slice %306 {offsets = [0, 128], sizes = [8, 128], strides = [1, 1]} : vector<8x512xf32> to vector<8x128xf32>
    %314 = arith.negf %313 : vector<8x128xf32>
    %315 = math.exp %314 : vector<8x128xf32>
    %cst_136 = arith.constant 1.000000e+00 : f32
    %316 = vector.broadcast %cst_136 : f32 to vector<8x128xf32>
    %317 = arith.addf %316, %315 : vector<8x128xf32>
    %318 = arith.divf %316, %317 : vector<8x128xf32>
    %319 = vector.extract_strided_slice %306 {offsets = [0, 256], sizes = [8, 128], strides = [1, 1]} : vector<8x512xf32> to vector<8x128xf32>
    %320 = math.tanh %319 : vector<8x128xf32>
    %321 = vector.extract_strided_slice %306 {offsets = [0, 384], sizes = [8, 128], strides = [1, 1]} : vector<8x512xf32> to vector<8x128xf32>
    %322 = arith.negf %321 : vector<8x128xf32>
    %323 = math.exp %322 : vector<8x128xf32>
    %cst_137 = arith.constant 1.000000e+00 : f32
    %324 = vector.broadcast %cst_137 : f32 to vector<8x128xf32>
    %325 = arith.addf %324, %323 : vector<8x128xf32>
    %326 = arith.divf %324, %325 : vector<8x128xf32>
    %327 = arith.mulf %318, %298 : vector<8x128xf32>
    %328 = arith.mulf %312, %320 : vector<8x128xf32>
    %329 = arith.addf %327, %328 : vector<8x128xf32>
    %330 = math.tanh %329 : vector<8x128xf32>
    %331 = arith.mulf %326, %330 : vector<8x128xf32>
    %c0_138 = arith.constant 0 : index
    %c0_139 = arith.constant 0 : index
    %332 = vector.load %arg9[%c0_138, %c0_139] : memref<8x128xf32, #tpu.memory_space<vmem>>, vector<8x128xf32>
    tpu.vector_store %arg9[%c0_138, %c0_139], %331 {strides = array<i32>} : memref<8x128xf32, #tpu.memory_space<vmem>>, vector<8x128xf32>,
    %c0_140 = arith.constant 0 : index
    %c0_141 = arith.constant 0 : index
    %333 = vector.load %arg10[%c0_140, %c0_141] : memref<8x128xf32, #tpu.memory_space<vmem>>, vector<8x128xf32>
    tpu.vector_store %arg10[%c0_140, %c0_141], %329 {strides = array<i32>} : memref<8x128xf32, #tpu.memory_space<vmem>>, vector<8x128xf32>,
    %334 = arith.truncf %331 : vector<8x128xf32> to vector<8x128xbf16>
    %335 = arith.index_cast %c7_i32 : i32 to index
    %c0_142 = arith.constant 0 : index
    %c0_143 = arith.constant 0 : index
    %336 = vector.load %arg6[%335, %c0_142, %c0_143] : memref<8x8x128xbf16, #tpu.memory_space<vmem>>, vector<1x8x128xbf16>
    %337 = vector.shape_cast %336 : vector<1x8x128xbf16> to vector<8x128xbf16>
    %338 = vector.shape_cast %334 : vector<8x128xbf16> to vector<1x8x128xbf16>
    tpu.vector_store %arg6[%335, %c0_142, %c0_143], %338 {strides = array<i32>} : memref<8x8x128xbf16, #tpu.memory_space<vmem>>, vector<1x8x128xbf16>,
    %c8_i32 = arith.constant 8 : i32
    %c0_i32_144 = arith.constant 0 : i32
    %339 = arith.cmpi eq, %arg1, %c0_i32_144 : i32
    %340 = arith.extui %339 : i1 to i32
    %c0_i32_145 = arith.constant 0 : i32
    %341 = arith.cmpi ne, %340, %c0_i32_145 : i32
    scf.if %341 {
      %c0_146 = arith.constant 0 : index
      %c0_147 = arith.constant 0 : index
      %342 = vector.load %arg9[%c0_146, %c0_147] : memref<8x128xf32, #tpu.memory_space<vmem>>, vector<8x128xf32>
      %c0_148 = arith.constant 0 : index
      %c0_149 = arith.constant 0 : index
      %343 = vector.load %arg7[%c0_148, %c0_149] : memref<8x128xf32, #tpu.memory_space<vmem>>, vector<8x128xf32>
      tpu.vector_store %arg7[%c0_148, %c0_149], %342 {strides = array<i32>} : memref<8x128xf32, #tpu.memory_space<vmem>>, vector<8x128xf32>,
      %c0_150 = arith.constant 0 : index
      %c0_151 = arith.constant 0 : index
      %344 = vector.load %arg10[%c0_150, %c0_151] : memref<8x128xf32, #tpu.memory_space<vmem>>, vector<8x128xf32>
      %c0_152 = arith.constant 0 : index
      %c0_153 = arith.constant 0 : index
      %345 = vector.load %arg8[%c0_152, %c0_153] : memref<8x128xf32, #tpu.memory_space<vmem>>, vector<8x128xf32>
      tpu.vector_store %arg8[%c0_152, %c0_153], %344 {strides = array<i32>} : memref<8x128xf32, #tpu.memory_space<vmem>>, vector<8x128xf32>,
    } else {
    }
    return
  }
  func.func @transform_0(%arg0: i32, %arg1: i32) -> (i32, i32, i32) {
    %c0_i32 = arith.constant 0 : i32
    %c0_i32_0 = arith.constant 0 : i32
    return %arg1, %arg0, %c0_i32 : i32, i32, i32
  }
  func.func @transform_1(%arg0: i32, %arg1: i32) -> (i32, i32) {
    %c0_i32 = arith.constant 0 : i32
    %c0_i32_0 = arith.constant 0 : i32
    return %arg0, %c0_i32 : i32, i32
  }
  func.func @transform_2(%arg0: i32, %arg1: i32) -> (i32, i32) {
    %c0_i32 = arith.constant 0 : i32
    %c0_i32_0 = arith.constant 0 : i32
    return %arg0, %c0_i32 : i32, i32
  }
  func.func @transform_3(%arg0: i32, %arg1: i32) -> (i32, i32) {
    %c0_i32 = arith.constant 0 : i32
    %c0_i32_0 = arith.constant 0 : i32
    %c0_i32_1 = arith.constant 0 : i32
    return %c0_i32, %c0_i32_0 : i32, i32
  }
  func.func @transform_4(%arg0: i32, %arg1: i32) -> (i32, i32, i32) {
    %c0_i32 = arith.constant 0 : i32
    %c0_i32_0 = arith.constant 0 : i32
    return %arg1, %arg0, %c0_i32 : i32, i32, i32
  }
  func.func @transform_5(%arg0: i32, %arg1: i32) -> (i32, i32) {
    %c0_i32 = arith.constant 0 : i32
    %c0_i32_0 = arith.constant 0 : i32
    return %arg0, %c0_i32 : i32, i32
  }
  func.func @transform_6(%arg0: i32, %arg1: i32) -> (i32, i32) {
    %c0_i32 = arith.constant 0 : i32
    %c0_i32_0 = arith.constant 0 : i32
    return %arg0, %c0_i32 : i32, i32
  }
}

</mosaic_0001>

<llo_original>
// kernel: tpu_custom_call.1
$region0: #{tpu_custom_call.1}
  #allocation0 [shape = 'u32[]', space=smem, size = 0x4, offset = 0x4, fixed_abs, tag = 'smem constant byte address 0x4 - core index']
  #allocation1 [shape = 'u32[144,128]{1,0:T(1,128)}', space=vmem, size = 0x12000, scoped, tag = 'internal scratch']
  %s0 = inlined_call_operand.hbm [shape: f32[8,128], index: 0, kind: input, shape index: {}]
  %s1 = inlined_call_operand.hbm [shape: f32[8,128], index: 1, kind: output, shape index: {}]
  %s2 = sld [smem:[#allocation0]]
  $region41: #{tpu_custom_call.1} parent=0
    _
  %s4 = ssub.s32 1, %s2
  %s5 = scalar_select 0, %s4, %s2
  $region1: #{tpu_custom_call.1} parent=0
    #allocation2 [shape = 'u8[4096]{0}', space=vmem, size = 0x1000, scoped, tag = 'input window, operand 0, single buffered']
    #allocation3 [shape = 's32[2]{0}', space=sflag, size = 0x8, scoped, tag = 'scoped memory for tpu_custom_call.1']
    #allocation4 [shape = 's32[2]{0}', space=sflag, size = 0x8, scoped, tag = 'scoped memory for tpu_custom_call.1']
    #allocation5 [shape = 'u8[4096]{0}', space=vmem, size = 0x1000, scoped, tag = 'output window, operand 0, single buffered']
    %6 = vsyncpa [#allocation3], 0
    %7 = vsyncpa [#allocation4], 0
    loop: start=0, step=1, limit=4
    $region2: #{tpu_custom_call.1} parent=1 // loop_pre_header
      _
    $region3: #{tpu_custom_call.1} parent=1 // loop_header
      %s9 = sphi 0, %s13
      %p10 = scmp.ge.s32.totalorder %s9, 4
      %s17 = sphi 0, %s17
      %s19 = sphi 0, %s17
      %s20 = sphi 0, %s19
      %s34 = sphi 0, %s20
      %s38 = sphi 0, %s38
      %s40 = sphi 0, %s38
      %s41 = sphi 0, %s40
      %s55 = sphi 0, %s41
    $region4: #{tpu_custom_call.1} parent=1 // loop_header_branch
      %12 = sbr.rel (%p10) target = $region8
    $region5: #{tpu_custom_call.1} parent=1 // loop_body
      %s14 = ssub.s32 %s9, 1
      %s15 = ssub.s32 %s9, 2
      %s16 = sadd.s32 %s9, 1
      %s18 = sadd.s32 %s17, 1
      %p21 = scmp.eq.s32.totalorder %s9, 1
      %p22 = scmp.ne.s32.totalorder %s17, %s19
      %p23 = scmp.eq.s32.totalorder %s9, 0
      %p24 = por %p22, %p23
      %p25 = scmp.ne.s32.totalorder %s17, %s19
      %p26 = scmp.eq.s32.totalorder %s14, 1
      %p27 = por %p25, %p26
      %p28 = scmp.ne.s32.totalorder %s19, %s20
      %p29 = scmp.eq.s32.totalorder %s14, 0
      %p30 = por %p28, %p29
      %p31 = scmp.ne.s32.totalorder %s19, %s20
      %p32 = scmp.eq.s32.totalorder %s15, 1
      %p33 = por %p31, %p32
      %p35 = scmp.ne.s32.totalorder %s20, %s34
      %p36 = scmp.eq.s32.totalorder %s15, 0
      %p37 = por %p35, %p36
      %s39 = sadd.s32 %s38, 1
      %p42 = scmp.eq.s32.totalorder %s9, 1
      %p43 = scmp.ne.s32.totalorder %s38, %s40
      %p44 = scmp.eq.s32.totalorder %s9, 0
      %p45 = por %p43, %p44
      %p46 = scmp.ne.s32.totalorder %s38, %s40
      %p47 = scmp.eq.s32.totalorder %s14, 1
      %p48 = por %p46, %p47
      %p49 = scmp.ne.s32.totalorder %s40, %s41
      %p50 = scmp.eq.s32.totalorder %s14, 0
      %p51 = por %p49, %p50
      %p52 = scmp.ne.s32.totalorder %s40, %s41
      %p53 = scmp.eq.s32.totalorder %s15, 1
      %p54 = por %p52, %p53
      %p56 = scmp.ne.s32.totalorder %s41, %s55
      %p57 = scmp.eq.s32.totalorder %s15, 0
      %p58 = por %p56, %p57
      %p59 = scmp.le.s32.totalorder 1, %s9
      %p60 = scmp.lt.s32.totalorder %s9, 3
      %p61 = pnand %p59, %p60
      %p62 = pneg %p61
      // Predicated region
      $region9: #{tpu_custom_call.1} parent=5 // pred_check
        _
      $region10: #{tpu_custom_call.1} parent=5 // pred_check_branch
        %64 = sbr.rel (%p61) target = $region12
      $region11: #{tpu_custom_call.1} parent=5 // pred_region
        %s65 = ssub.s32 %s9, 1
        // Predicated region
        $region13: #{tpu_custom_call.1} parent=11 // pred_check
          %p66 = pneg %p30
        $region14: #{tpu_custom_call.1} parent=11 // pred_check_branch
          %68 = sbr.rel (%p66) target = $region16
        $region15: #{tpu_custom_call.1} parent=11 // pred_region
          %s70 = ssub.s32 128, 128
          %71 = vsyncadd [#allocation3], %s70
          %s73 = sshll.u32 [#allocation2], 4
          %s74 = int_to_ptr.vmem [resolvable:$true] %s73
          %76 = dma.hbm_to_vmem [thread:$0]  %s0, 128, %s74, [#allocation3]
        $region16: #{tpu_custom_call.1} parent=11 // pred_fallthru
          _
      $region12: #{tpu_custom_call.1} parent=5 // pred_fallthru
        _
      %p77 = scmp.lt.s32.totalorder %s9, 2
      // Predicated region
      $region17: #{tpu_custom_call.1} parent=5 // pred_check
        %p78 = pneg %p77
      $region18: #{tpu_custom_call.1} parent=5 // pred_check_branch
        %80 = sbr.rel (%p78) target = $region20
      $region19: #{tpu_custom_call.1} parent=5 // pred_region
        _
      $region20: #{tpu_custom_call.1} parent=5 // pred_fallthru
        _
      %p81 = scmp.le.s32.totalorder 1, %s9
      %p82 = scmp.lt.s32.totalorder %s9, 3
      %p83 = pnand %p81, %p82
      %p84 = pneg %p83
      // Predicated region
      $region21: #{tpu_custom_call.1} parent=5 // pred_check
        _
      $region22: #{tpu_custom_call.1} parent=5 // pred_check_branch
        %86 = sbr.rel (%p83) target = $region24
      $region23: #{tpu_custom_call.1} parent=5 // pred_region
        %s87 = ssub.s32 %s9, 1
        // Predicated region
        $region25: #{tpu_custom_call.1} parent=23 // pred_check
          %p88 = pneg %p30
        $region26: #{tpu_custom_call.1} parent=23 // pred_check_branch
          %90 = sbr.rel (%p88) target = $region28
        $region27: #{tpu_custom_call.1} parent=23 // pred_region
          %91 = dma.done [#allocation3], 128
        $region28: #{tpu_custom_call.1} parent=23 // pred_fallthru
          _
        %p92 = pneg %p30
        %p93 = pneg %p27
        %p94 = pneg %p51
        %p95 = pneg %p48
        %v96 = vld [vmem:[#allocation2] sm:$0xff]
        %v97 = vadd.f32 %v96, 1.0
        %98 = vst [vmem:[#allocation5] sm:$0xff] %v97
        // Predicated region
        $region29: #{tpu_custom_call.1} parent=23 // pred_check
          %p99 = pneg %p48
        $region30: #{tpu_custom_call.1} parent=23 // pred_check_branch
          %101 = sbr.rel (%p99) target = $region32
        $region31: #{tpu_custom_call.1} parent=23 // pred_region
          %s103 = ssub.s32 128, 128
          %104 = vsyncadd [#allocation4], %s103
          %s106 = sshll.u32 [#allocation5], 4
          %s107 = int_to_ptr.vmem [resolvable:$true] %s106
          %109 = dma.vmem_to_hbm [thread:$0]  %s107, 128, %s1, [#allocation4]
        $region32: #{tpu_custom_call.1} parent=23 // pred_fallthru
          _
        // Predicated region
        $region33: #{tpu_custom_call.1} parent=23 // pred_check
          %p110 = pneg %p48
        $region34: #{tpu_custom_call.1} parent=23 // pred_check_branch
          %112 = sbr.rel (%p110) target = $region36
        $region35: #{tpu_custom_call.1} parent=23 // pred_region
          %113 = dma.done [#allocation4], 128
        $region36: #{tpu_custom_call.1} parent=23 // pred_fallthru
          _
      $region24: #{tpu_custom_call.1} parent=5 // pred_fallthru
        _
      %p114 = scmp.le.s32.totalorder 2, %s9
      // Predicated region
      $region37: #{tpu_custom_call.1} parent=5 // pred_check
        %p115 = pneg %p114
      $region38: #{tpu_custom_call.1} parent=5 // pred_check_branch
        %117 = sbr.rel (%p115) target = $region40
      $region39: #{tpu_custom_call.1} parent=5 // pred_region
        %s118 = ssub.s32 %s9, 2
      $region40: #{tpu_custom_call.1} parent=5 // pred_fallthru
        _
    $region6: #{tpu_custom_call.1} parent=1 // loop_footer
      %s13 = sadd.s32 1, %s9
    $region7: #{tpu_custom_call.1} parent=1 // loop_footer_branch
      %8 = sbr.rel target = $region3
    $region8: #{tpu_custom_call.1} parent=1 // loop_exit
      _
    %119 = vsyncpa [#allocation3], 1
    %s120 = scalar_lea.sflag [#allocation3], 1
    %121 = vsyncpa %s120, 1
    %122 = vsyncpa [#allocation4], 1
    %s123 = scalar_lea.sflag [#allocation4], 1
    %124 = vsyncpa %s123, 1

// kernel: rnn_forward.9
$region0: #{rnn_forward.9}
  #allocation0 [shape = 'u32[]', space=smem, size = 0x4, offset = 0x4, fixed_abs, tag = 'smem constant byte address 0x4 - core index']
  #allocation1 [shape = 'u32[144,128]{1,0:T(1,128)}', space=vmem, size = 0x12000, scoped, tag = 'internal scratch']
  #allocation2 [shape = 'f32[64,128]{1,0:T(8,128)}', space=vmem, size = 0x8000, scoped, tag = 'scratch operand']
  %s0 = inlined_call_operand.hbm [shape: bf16[64,128], index: 0, kind: input, shape index: {}]
  %s1 = inlined_call_operand.hbm [shape: bf16[128,128], index: 1, kind: input, shape index: {}]
  %s2 = inlined_call_operand.hbm [shape: f32[1,128], index: 2, kind: input, shape index: {}]
  %s3 = inlined_call_operand.hbm [shape: f32[64,128], index: 3, kind: output, shape index: {}]
  %s4 = sld [smem:[#allocation0]]
  $region42: #{rnn_forward.9} parent=0
    _
  %s6 = ssub.s32 1, %s4
  %s7 = scalar_select 0, %s6, %s4
  $region1: #{rnn_forward.9} parent=0
    #allocation3 [shape = 'u8[16384]{0}', space=vmem, size = 0x4000, scoped, tag = 'input window, operand 0, single buffered']
    #allocation4 [shape = 's32[1]{0}', space=sflag, size = 0x4, scoped, tag = 'scoped memory for rnn_forward.9']
    #allocation5 [shape = 's32[1]{0}', space=sflag, size = 0x4, scoped, tag = 'scoped memory for rnn_forward.9']
    #allocation6 [shape = 'u8[32768]{0}', space=vmem, size = 0x8000, scoped, tag = 'input window, operand 1, single buffered']
    #allocation7 [shape = 's32[1]{0}', space=sflag, size = 0x4, scoped, tag = 'scoped memory for rnn_forward.9']
    #allocation8 [shape = 'u8[512]{0}', space=vmem, size = 0x400, scoped, tag = 'input window, operand 2, single buffered']
    #allocation9 [shape = 'u8[32768]{0}', space=vmem, size = 0x8000, scoped, tag = 'output window, operand 0, single buffered']
    %8 = vsyncpa [#allocation4], 0
    %9 = vsyncpa [#allocation7], 0
    %10 = vsyncpa [#allocation5], 0
    // Predicated region
    $region2: #{rnn_forward.9} parent=1 // pred_check
      _
    $region3: #{rnn_forward.9} parent=1 // pred_check_branch
      %12 = sbr.rel (0) target = $region5
    $region4: #{rnn_forward.9} parent=1 // pred_region
      %s14 = ssub.s32 512, 512
      %15 = vsyncadd [#allocation4], %s14
      %s16 = sshll.u32 [#allocation3], 4
      %s17 = int_to_ptr.vmem [resolvable:$true] %s16
      %22 = dma.hbm_to_vmem [thread:$0]  %s0, 512, %s17, [#allocation4], 64, 64, 4
    $region5: #{rnn_forward.9} parent=1 // pred_fallthru
      _
    // Predicated region
    $region6: #{rnn_forward.9} parent=1 // pred_check
      _
    $region7: #{rnn_forward.9} parent=1 // pred_check_branch
      %24 = sbr.rel (0) target = $region9
    $region8: #{rnn_forward.9} parent=1 // pred_region
      %s26 = ssub.s32 1024, 1024
      %27 = vsyncadd [#allocation7], %s26
      %s28 = sshll.u32 [#allocation6], 4
      %s29 = int_to_ptr.vmem [resolvable:$true] %s28
      %34 = dma.hbm_to_vmem [thread:$0]  %s1, 1024, %s29, [#allocation7], 64, 64, 4
    $region9: #{rnn_forward.9} parent=1 // pred_fallthru
      _
    // Predicated region
    $region10: #{rnn_forward.9} parent=1 // pred_check
      _
    $region11: #{rnn_forward.9} parent=1 // pred_check_branch
      %36 = sbr.rel (0) target = $region13
    $region12: #{rnn_forward.9} parent=1 // pred_region
      %s38 = ssub.s32 16, 16
      %39 = vsyncadd [#allocation7], %s38
      %s41 = sshll.u32 [#allocation8], 4
      %s42 = int_to_ptr.vmem [resolvable:$true] %s41
      %44 = dma.hbm_to_vmem [thread:$0]  %s2, 16, %s42, [#allocation7]
    $region13: #{rnn_forward.9} parent=1 // pred_fallthru
      _
    // Predicated region
    $region14: #{rnn_forward.9} parent=1 // pred_check
      _
    $region15: #{rnn_forward.9} parent=1 // pred_check_branch
      %46 = sbr.rel (0) target = $region17
    $region16: #{rnn_forward.9} parent=1 // pred_region
      %47 = dma.done [#allocation4], 512
    $region17: #{rnn_forward.9} parent=1 // pred_fallthru
      _
    // Predicated region
    $region18: #{rnn_forward.9} parent=1 // pred_check
      _
    $region19: #{rnn_forward.9} parent=1 // pred_check_branch
      %49 = sbr.rel (0) target = $region21
    $region20: #{rnn_forward.9} parent=1 // pred_region
      %50 = dma.done [#allocation7], 1024
    $region21: #{rnn_forward.9} parent=1 // pred_fallthru
      _
    // Predicated region
    $region22: #{rnn_forward.9} parent=1 // pred_check
      _
    $region23: #{rnn_forward.9} parent=1 // pred_check_branch
      %52 = sbr.rel (0) target = $region25
    $region24: #{rnn_forward.9} parent=1 // pred_region
      %53 = dma.done [#allocation7], 16
    $region25: #{rnn_forward.9} parent=1 // pred_fallthru
      _
    %p55 = scmp.eq.s32.totalorder 0, 0
    // Predicated region
    $region26: #{rnn_forward.9} parent=1 // pred_check
      %p56 = pneg %p55
    $region27: #{rnn_forward.9} parent=1 // pred_check_branch
      %58 = sbr.rel (%p56) target = $region29
    $region28: #{rnn_forward.9} parent=1 // pred_region
      %59 = vst [vmem:[#allocation2] sm:$0xff] 0.0
      %60 = vst [vmem:[#allocation2 + $0x8] sm:$0xff] 0.0
      %61 = vst [vmem:[#allocation2 + $0x10] sm:$0xff] 0.0
      %62 = vst [vmem:[#allocation2 + $0x18] sm:$0xff] 0.0
      %63 = vst [vmem:[#allocation2 + $0x20] sm:$0xff] 0.0
      %64 = vst [vmem:[#allocation2 + $0x28] sm:$0xff] 0.0
      %65 = vst [vmem:[#allocation2 + $0x30] sm:$0xff] 0.0
      %66 = vst [vmem:[#allocation2 + $0x38] sm:$0xff] 0.0
    $region29: #{rnn_forward.9} parent=1 // pred_fallthru
      _
    %v67 = vld [vmem:[#allocation2] sm:$0xff]
    %v68 = vld [vmem:[#allocation2 + $0x8] sm:$0xff]
    %v69 = vld [vmem:[#allocation2 + $0x10] sm:$0xff]
    %v70 = vld [vmem:[#allocation2 + $0x18] sm:$0xff]
    %v71 = vld [vmem:[#allocation2 + $0x20] sm:$0xff]
    %v72 = vld [vmem:[#allocation2 + $0x28] sm:$0xff]
    %v73 = vld [vmem:[#allocation2 + $0x30] sm:$0xff]
    %v74 = vld [vmem:[#allocation2 + $0x38] sm:$0xff]
    %v75 = vld [vmem:[#allocation3] sm:$0xf]
    %v76 = vld [vmem:[#allocation3 + $0x4] sm:$0xf]
    %v77 = vld [vmem:[#allocation3 + $0x8] sm:$0xf]
    %v78 = vld [vmem:[#allocation3 + $0xc] sm:$0xf]
    %v79 = vld [vmem:[#allocation3 + $0x10] sm:$0xf]
    %v80 = vld [vmem:[#allocation3 + $0x14] sm:$0xf]
    %v81 = vld [vmem:[#allocation3 + $0x18] sm:$0xf]
    %v82 = vld [vmem:[#allocation3 + $0x1c] sm:$0xf]
    %v83 = vld [vmem:[#allocation6] sm:$0xf]
    %v84 = vld [vmem:[#allocation6 + $0x4] sm:$0xf]
    %v85 = vld [vmem:[#allocation6 + $0x8] sm:$0xf]
    %v86 = vld [vmem:[#allocation6 + $0xc] sm:$0xf]
    %v87 = vld [vmem:[#allocation6 + $0x10] sm:$0xf]
    %v88 = vld [vmem:[#allocation6 + $0x14] sm:$0xf]
    %v89 = vld [vmem:[#allocation6 + $0x18] sm:$0xf]
    %v90 = vld [vmem:[#allocation6 + $0x1c] sm:$0xf]
    %v91 = vld [vmem:[#allocation6 + $0x20] sm:$0xf]
    %v92 = vld [vmem:[#allocation6 + $0x24] sm:$0xf]
    %v93 = vld [vmem:[#allocation6 + $0x28] sm:$0xf]
    %v94 = vld [vmem:[#allocation6 + $0x2c] sm:$0xf]
    %v95 = vld [vmem:[#allocation6 + $0x30] sm:$0xf]
    %v96 = vld [vmem:[#allocation6 + $0x34] sm:$0xf]
    %v97 = vld [vmem:[#allocation6 + $0x38] sm:$0xf]
    %v98 = vld [vmem:[#allocation6 + $0x3c] sm:$0xf]
    %v107 = vunpack.c.l.b16 %v75
    %v108 = vunpack.c.l.b16 %v76
    %v109 = vunpack.c.l.b16 %v77
    %v110 = vunpack.c.l.b16 %v78
    %v111 = vunpack.c.l.b16 %v79
    %v112 = vunpack.c.l.b16 %v80
    %v113 = vunpack.c.l.b16 %v81
    %v114 = vunpack.c.l.b16 %v82
    %v115 = vpack.c.b16 %v108, %v107
    %v116 = vpack.c.b16 %v110, %v109
    %v117 = vpack.c.b16 %v112, %v111
    %v118 = vpack.c.b16 %v114, %v113
    %v139 = vunpack.c.l.b16 %v83
    %v140 = vunpack.c.l.b16 %v84
    %v141 = vunpack.c.l.b16 %v85
    %v142 = vunpack.c.l.b16 %v86
    %v143 = vunpack.c.l.b16 %v87
    %v144 = vunpack.c.l.b16 %v88
    %v145 = vunpack.c.l.b16 %v89
    %v146 = vunpack.c.l.b16 %v90
    %v147 = vunpack.c.l.b16 %v91
    %v148 = vunpack.c.l.b16 %v92
    %v149 = vunpack.c.l.b16 %v93
    %v150 = vunpack.c.l.b16 %v94
    %v151 = vunpack.c.l.b16 %v95
    %v152 = vunpack.c.l.b16 %v96
    %v153 = vunpack.c.l.b16 %v97
    %v154 = vunpack.c.l.b16 %v98
    %v155 = vpack.c.b16 %v140, %v139
    %v156 = vpack.c.b16 %v142, %v141
    %v157 = vpack.c.b16 %v144, %v143
    %v158 = vpack.c.b16 %v146, %v145
    %v159 = vpack.c.b16 %v148, %v147
    %v160 = vpack.c.b16 %v150, %v149
    %v161 = vpack.c.b16 %v152, %v151
    %v162 = vpack.c.b16 %v154, %v153
    %171 = vmatprep.subr.bf16.mxu0 0
    %172 = vmatpush1.bf16.msra.mxu0 %v155
    %173 = vmatprep.subr.bf16.mxu0 0
    %174 = vmatpush1.bf16.msra.mxu0 %v156
    %175 = vmatprep.subr.bf16.mxu0 0
    %176 = vmatpush1.bf16.msra.mxu0 %v157
    %177 = vmatprep.subr.bf16.mxu0 0
    %178 = vmatpush1.bf16.msra.mxu0 %v158
    %179 = vmatprep.subr.bf16.mxu0 0
    %180 = vmatpush1.bf16.msra.mxu0 %v159
    %181 = vmatprep.subr.bf16.mxu0 0
    %182 = vmatpush1.bf16.msra.mxu0 %v160
    %183 = vmatprep.subr.bf16.mxu0 0
    %184 = vmatpush1.bf16.msra.mxu0 %v161
    %185 = vmatprep.subr.bf16.mxu0 0
    %186 = vmatpush1.bf16.msra.mxu0 %v162
    %187 = vmatprep.subr.bf16.mxu0 0
    %188 = vmatpush1.bf16.msra.mxu0 0
    %189 = vmatprep.subr.bf16.mxu0 0
    %190 = vmatpush1.bf16.msra.mxu0 0
    %191 = vmatprep.subr.bf16.mxu0 0
    %192 = vmatpush1.bf16.msra.mxu0 0
    %193 = vmatprep.subr.bf16.mxu0 0
    %194 = vmatpush1.bf16.msra.mxu0 0
    %195 = vmatprep.subr.bf16.mxu0 0
    %196 = vmatpush1.bf16.msra.mxu0 0
    %197 = vmatprep.subr.bf16.mxu0 0
    %198 = vmatpush1.bf16.msra.mxu0 0
    %199 = vmatprep.subr.bf16.mxu0 0
    %200 = vmatpush1.bf16.msra.mxu0 0
    %201 = vmatprep.subr.bf16.mxu0 0
    %202 = vmatpush1.bf16.msra.mxu0 0
    %203 = vmatprep.mubr.bf16.mxu0 0
    %204 = vmatmul.mubr.bf16.gmra.mrb[0].mxu0 %v115
    %v205 = vpop.f32.mrb[0].mxu0
    %v206 = vadd.f32 0.0, %v205
    %v207 = vpop.f32.mrb[0].mxu0
    %v208 = vpop.f32.mrb[0].mxu0
    %v209 = vadd.f32 0.0, %v208
    %v210 = vpop.f32.mrb[0].mxu0
    %211 = vmatprep.mubr.bf16.mxu0 0
    %212 = vmatmul.mubr.bf16.gmra.mrb[0].mxu0 %v116
    %v213 = vpop.f32.mrb[0].mxu0
    %v214 = vadd.f32 0.0, %v213
    %v215 = vpop.f32.mrb[0].mxu0
    %v216 = vpop.f32.mrb[0].mxu0
    %v217 = vadd.f32 0.0, %v216
    %v218 = vpop.f32.mrb[0].mxu0
    %219 = vmatprep.mubr.bf16.mxu0 0
    %220 = vmatmul.mubr.bf16.gmra.mrb[0].mxu0 %v117
    %v221 = vpop.f32.mrb[0].mxu0
    %v222 = vadd.f32 0.0, %v221
    %v223 = vpop.f32.mrb[0].mxu0
    %v224 = vpop.f32.mrb[0].mxu0
    %v225 = vadd.f32 0.0, %v224
    %v226 = vpop.f32.mrb[0].mxu0
    %227 = vmatprep.mubr.bf16.mxu0 0
    %228 = vmatmul.mubr.bf16.gmra.mrb[0].mxu0 %v118
    %v229 = vpop.f32.mrb[0].mxu0
    %v230 = vadd.f32 0.0, %v229
    %v231 = vpop.f32.mrb[0].mxu0
    %v232 = vpop.f32.mrb[0].mxu0
    %v233 = vadd.f32 0.0, %v232
    %v234 = vpop.f32.mrb[0].mxu0
    %235 = vdwg.mxu0
    %v236 = vadd.f32 %v67, %v206
    %v237 = vadd.f32 %v68, %v209
    %v238 = vadd.f32 %v69, %v214
    %v239 = vadd.f32 %v70, %v217
    %v240 = vadd.f32 %v71, %v222
    %v241 = vadd.f32 %v72, %v225
    %v242 = vadd.f32 %v73, %v230
    %v243 = vadd.f32 %v74, %v233
    %244 = vst [vmem:[#allocation2] sm:$0xff] %v236
    %245 = vst [vmem:[#allocation2 + $0x8] sm:$0xff] %v237
    %246 = vst [vmem:[#allocation2 + $0x10] sm:$0xff] %v238
    %247 = vst [vmem:[#allocation2 + $0x18] sm:$0xff] %v239
    %248 = vst [vmem:[#allocation2 + $0x20] sm:$0xff] %v240
    %249 = vst [vmem:[#allocation2 + $0x28] sm:$0xff] %v241
    %250 = vst [vmem:[#allocation2 + $0x30] sm:$0xff] %v242
    %251 = vst [vmem:[#allocation2 + $0x38] sm:$0xff] %v243
    // Predicated region
    $region30: #{rnn_forward.9} parent=1 // pred_check
      %p252 = pneg %p55
    $region31: #{rnn_forward.9} parent=1 // pred_check_branch
      %254 = sbr.rel (%p252) target = $region33
    $region32: #{rnn_forward.9} parent=1 // pred_region
      %v255 = vld [vmem:[#allocation2] sm:$0xff]
      %v256 = vld [vmem:[#allocation2 + $0x8] sm:$0xff]
      %v257 = vld [vmem:[#allocation2 + $0x10] sm:$0xff]
      %v258 = vld [vmem:[#allocation2 + $0x18] sm:$0xff]
      %v259 = vld [vmem:[#allocation2 + $0x20] sm:$0xff]
      %v260 = vld [vmem:[#allocation2 + $0x28] sm:$0xff]
      %v261 = vld [vmem:[#allocation2 + $0x30] sm:$0xff]
      %v262 = vld [vmem:[#allocation2 + $0x38] sm:$0xff]
      %v263 = vld [vmem:[#allocation8] sm:$0x1]
      %v265 = vlaneseq
      %v266 = vshrl.u32 %v265, 7
      %v267 = vsub.s32 0, %v266
      %v268 = vrot.slane %v263, %v267
      %v270 = vadd.f32 %v255, %v268
      %v271 = vadd.f32 %v256, %v268
      %v272 = vadd.f32 %v257, %v268
      %v273 = vadd.f32 %v258, %v268
      %v274 = vadd.f32 %v259, %v268
      %v275 = vadd.f32 %v260, %v268
      %v276 = vadd.f32 %v261, %v268
      %v277 = vadd.f32 %v262, %v268
      %278 = vst [vmem:[#allocation9] sm:$0xff] %v270
      %279 = vst [vmem:[#allocation9 + $0x8] sm:$0xff] %v271
      %280 = vst [vmem:[#allocation9 + $0x10] sm:$0xff] %v272
      %281 = vst [vmem:[#allocation9 + $0x18] sm:$0xff] %v273
      %282 = vst [vmem:[#allocation9 + $0x20] sm:$0xff] %v274
      %283 = vst [vmem:[#allocation9 + $0x28] sm:$0xff] %v275
      %284 = vst [vmem:[#allocation9 + $0x30] sm:$0xff] %v276
      %285 = vst [vmem:[#allocation9 + $0x38] sm:$0xff] %v277
    $region33: #{rnn_forward.9} parent=1 // pred_fallthru
      _
    // Predicated region
    $region34: #{rnn_forward.9} parent=1 // pred_check
      _
    $region35: #{rnn_forward.9} parent=1 // pred_check_branch
      %287 = sbr.rel (0) target = $region37
    $region36: #{rnn_forward.9} parent=1 // pred_region
      %s289 = ssub.s32 1024, 1024
      %290 = vsyncadd [#allocation5], %s289
      %s291 = sshll.u32 [#allocation9], 4
      %s292 = int_to_ptr.vmem [resolvable:$true] %s291
      %297 = dma.vmem_to_hbm [thread:$0]  %s292, 1024, %s3, [#allocation5], 128, 128, 8
    $region37: #{rnn_forward.9} parent=1 // pred_fallthru
      _
    // Predicated region
    $region38: #{rnn_forward.9} parent=1 // pred_check
      _
    $region39: #{rnn_forward.9} parent=1 // pred_check_branch
      %299 = sbr.rel (0) target = $region41
    $region40: #{rnn_forward.9} parent=1 // pred_region
      %300 = dma.done [#allocation5], 1024
    $region41: #{rnn_forward.9} parent=1 // pred_fallthru
      _
    %301 = vsyncpa [#allocation4], 1
    %302 = vsyncpa [#allocation7], 1
    %303 = vsyncpa [#allocation5], 1

// kernel: rnn_forward.7
$region0: #{rnn_forward.7}
  #allocation0 [shape = 'u32[]', space=smem, size = 0x4, offset = 0x4, fixed_abs, tag = 'smem constant byte address 0x4 - core index']
  #allocation1 [shape = 'u32[144,128]{1,0:T(1,128)}', space=vmem, size = 0x12000, scoped, tag = 'internal scratch']
  #allocation2 [shape = 'f32[64,512]{1,0:T(8,128)}', space=vmem, size = 0x20000, scoped, tag = 'scratch operand']
  %s0 = inlined_call_operand.hbm [shape: bf16[64,128], index: 0, kind: input, shape index: {}]
  %s1 = inlined_call_operand.hbm [shape: bf16[128,512], index: 1, kind: input, shape index: {}]
  %s2 = inlined_call_operand.hbm [shape: f32[1,512], index: 2, kind: input, shape index: {}]
  %s3 = inlined_call_operand.hbm [shape: bf16[64,512], index: 3, kind: output, shape index: {}]
  %s4 = sld [smem:[#allocation0]]
  $region42: #{rnn_forward.7} parent=0
    _
  %s6 = ssub.s32 1, %s4
  %s7 = scalar_select 0, %s6, %s4
  $region1: #{rnn_forward.7} parent=0
    #allocation3 [shape = 'u8[16384]{0}', space=vmem, size = 0x4000, scoped, tag = 'input window, operand 0, single buffered']
    #allocation4 [shape = 's32[1]{0}', space=sflag, size = 0x4, scoped, tag = 'scoped memory for rnn_forward.7']
    #allocation5 [shape = 's32[1]{0}', space=sflag, size = 0x4, scoped, tag = 'scoped memory for rnn_forward.7']
    #allocation6 [shape = 'u8[131072]{0}', space=vmem, size = 0x20000, scoped, tag = 'input window, operand 1, single buffered']
    #allocation7 [shape = 's32[1]{0}', space=sflag, size = 0x4, scoped, tag = 'scoped memory for rnn_forward.7']
    #allocation8 [shape = 'u8[2048]{0}', space=vmem, size = 0x800, scoped, tag = 'input window, operand 2, single buffered']
    #allocation9 [shape = 'u8[65536]{0}', space=vmem, size = 0x10000, scoped, tag = 'output window, operand 0, single buffered']
    %8 = vsyncpa [#allocation4], 0
    %9 = vsyncpa [#allocation7], 0
    %10 = vsyncpa [#allocation5], 0
    // Predicated region
    $region2: #{rnn_forward.7} parent=1 // pred_check
      _
    $region3: #{rnn_forward.7} parent=1 // pred_check_branch
      %12 = sbr.rel (0) target = $region5
    $region4: #{rnn_forward.7} parent=1 // pred_region
      %s14 = ssub.s32 512, 512
      %15 = vsyncadd [#allocation4], %s14
      %s16 = sshll.u32 [#allocation3], 4
      %s17 = int_to_ptr.vmem [resolvable:$true] %s16
      %22 = dma.hbm_to_vmem [thread:$0]  %s0, 512, %s17, [#allocation4], 64, 64, 4
    $region5: #{rnn_forward.7} parent=1 // pred_fallthru
      _
    // Predicated region
    $region6: #{rnn_forward.7} parent=1 // pred_check
      _
    $region7: #{rnn_forward.7} parent=1 // pred_check_branch
      %24 = sbr.rel (0) target = $region9
    $region8: #{rnn_forward.7} parent=1 // pred_region
      %s26 = ssub.s32 4096, 4096
      %27 = vsyncadd [#allocation7], %s26
      %s28 = sshll.u32 [#allocation6], 4
      %s29 = int_to_ptr.vmem [resolvable:$true] %s28
      %34 = dma.hbm_to_vmem [thread:$0]  %s1, 4096, %s29, [#allocation7], 256, 256, 16
    $region9: #{rnn_forward.7} parent=1 // pred_fallthru
      _
    // Predicated region
    $region10: #{rnn_forward.7} parent=1 // pred_check
      _
    $region11: #{rnn_forward.7} parent=1 // pred_check_branch
      %36 = sbr.rel (0) target = $region13
    $region12: #{rnn_forward.7} parent=1 // pred_region
      %s38 = ssub.s32 64, 64
      %39 = vsyncadd [#allocation7], %s38
      %s41 = sshll.u32 [#allocation8], 4
      %s42 = int_to_ptr.vmem [resolvable:$true] %s41
      %44 = dma.hbm_to_vmem [thread:$0]  %s2, 64, %s42, [#allocation7]
    $region13: #{rnn_forward.7} parent=1 // pred_fallthru
      _
    // Predicated region
    $region14: #{rnn_forward.7} parent=1 // pred_check
      _
    $region15: #{rnn_forward.7} parent=1 // pred_check_branch
      %46 = sbr.rel (0) target = $region17
    $region16: #{rnn_forward.7} parent=1 // pred_region
      %47 = dma.done [#allocation4], 512
    $region17: #{rnn_forward.7} parent=1 // pred_fallthru
      _
    // Predicated region
    $region18: #{rnn_forward.7} parent=1 // pred_check
      _
    $region19: #{rnn_forward.7} parent=1 // pred_check_branch
      %49 = sbr.rel (0) target = $region21
    $region20: #{rnn_forward.7} parent=1 // pred_region
      %50 = dma.done [#allocation7], 4096
    $region21: #{rnn_forward.7} parent=1 // pred_fallthru
      _
    // Predicated region
    $region22: #{rnn_forward.7} parent=1 // pred_check
      _
    $region23: #{rnn_forward.7} parent=1 // pred_check_branch
      %52 = sbr.rel (0) target = $region25
    $region24: #{rnn_forward.7} parent=1 // pred_region
      %53 = dma.done [#allocation7], 64
    $region25: #{rnn_forward.7} parent=1 // pred_fallthru
      _
    %p55 = scmp.eq.s32.totalorder 0, 0
    // Predicated region
    $region26: #{rnn_forward.7} parent=1 // pred_check
      %p56 = pneg %p55
    $region27: #{rnn_forward.7} parent=1 // pred_check_branch
      %58 = sbr.rel (%p56) target = $region29
    $region28: #{rnn_forward.7} parent=1 // pred_region
      %59 = vst [vmem:[#allocation2] sm:$0xff] 0.0
      %60 = vst [vmem:[#allocation2 + $0x8] sm:$0xff] 0.0
      %61 = vst [vmem:[#allocation2 + $0x10] sm:$0xff] 0.0
      %62 = vst [vmem:[#allocation2 + $0x18] sm:$0xff] 0.0
      %63 = vst [vmem:[#allocation2 + $0x20] sm:$0xff] 0.0
      %64 = vst [vmem:[#allocation2 + $0x28] sm:$0xff] 0.0
      %65 = vst [vmem:[#allocation2 + $0x30] sm:$0xff] 0.0
      %66 = vst [vmem:[#allocation2 + $0x38] sm:$0xff] 0.0
      %67 = vst [vmem:[#allocation2 + $0x40] sm:$0xff] 0.0
      %68 = vst [vmem:[#allocation2 + $0x48] sm:$0xff] 0.0
      %69 = vst [vmem:[#allocation2 + $0x50] sm:$0xff] 0.0
      %70 = vst [vmem:[#allocation2 + $0x58] sm:$0xff] 0.0
      %71 = vst [vmem:[#allocation2 + $0x60] sm:$0xff] 0.0
      %72 = vst [vmem:[#allocation2 + $0x68] sm:$0xff] 0.0
      %73 = vst [vmem:[#allocation2 + $0x70] sm:$0xff] 0.0
      %74 = vst [vmem:[#allocation2 + $0x78] sm:$0xff] 0.0
      %75 = vst [vmem:[#allocation2 + $0x80] sm:$0xff] 0.0
      %76 = vst [vmem:[#allocation2 + $0x88] sm:$0xff] 0.0
      %77 = vst [vmem:[#allocation2 + $0x90] sm:$0xff] 0.0
      %78 = vst [vmem:[#allocation2 + $0x98] sm:$0xff] 0.0
      %79 = vst [vmem:[#allocation2 + $0xa0] sm:$0xff] 0.0
      %80 = vst [vmem:[#allocation2 + $0xa8] sm:$0xff] 0.0
      %81 = vst [vmem:[#allocation2 + $0xb0] sm:$0xff] 0.0
      %82 = vst [vmem:[#allocation2 + $0xb8] sm:$0xff] 0.0
      %83 = vst [vmem:[#allocation2 + $0xc0] sm:$0xff] 0.0
      %84 = vst [vmem:[#allocation2 + $0xc8] sm:$0xff] 0.0
      %85 = vst [vmem:[#allocation2 + $0xd0] sm:$0xff] 0.0
      %86 = vst [vmem:[#allocation2 + $0xd8] sm:$0xff] 0.0
      %87 = vst [vmem:[#allocation2 + $0xe0] sm:$0xff] 0.0
      %88 = vst [vmem:[#allocation2 + $0xe8] sm:$0xff] 0.0
      %89 = vst [vmem:[#allocation2 + $0xf0] sm:$0xff] 0.0
      %90 = vst [vmem:[#allocation2 + $0xf8] sm:$0xff] 0.0
    $region29: #{rnn_forward.7} parent=1 // pred_fallthru
      _
    %v91 = vld [vmem:[#allocation2] sm:$0xff]
    %v92 = vld [vmem:[#allocation2 + $0x8] sm:$0xff]
    %v93 = vld [vmem:[#allocation2 + $0x10] sm:$0xff]
    %v94 = vld [vmem:[#allocation2 + $0x18] sm:$0xff]
    %v95 = vld [vmem:[#allocation2 + $0x20] sm:$0xff]
    %v96 = vld [vmem:[#allocation2 + $0x28] sm:$0xff]
    %v97 = vld [vmem:[#allocation2 + $0x30] sm:$0xff]
    %v98 = vld [vmem:[#allocation2 + $0x38] sm:$0xff]
    %v99 = vld [vmem:[#allocation2 + $0x40] sm:$0xff]
    %v100 = vld [vmem:[#allocation2 + $0x48] sm:$0xff]
    %v101 = vld [vmem:[#allocation2 + $0x50] sm:$0xff]
    %v102 = vld [vmem:[#allocation2 + $0x58] sm:$0xff]
    %v103 = vld [vmem:[#allocation2 + $0x60] sm:$0xff]
    %v104 = vld [vmem:[#allocation2 + $0x68] sm:$0xff]
    %v105 = vld [vmem:[#allocation2 + $0x70] sm:$0xff]
    %v106 = vld [vmem:[#allocation2 + $0x78] sm:$0xff]
    %v107 = vld [vmem:[#allocation2 + $0x80] sm:$0xff]
    %v108 = vld [vmem:[#allocation2 + $0x88] sm:$0xff]
    %v109 = vld [vmem:[#allocation2 + $0x90] sm:$0xff]
    %v110 = vld [vmem:[#allocation2 + $0x98] sm:$0xff]
    %v111 = vld [vmem:[#allocation2 + $0xa0] sm:$0xff]
    %v112 = vld [vmem:[#allocation2 + $0xa8] sm:$0xff]
    %v113 = vld [vmem:[#allocation2 + $0xb0] sm:$0xff]
    %v114 = vld [vmem:[#allocation2 + $0xb8] sm:$0xff]
    %v115 = vld [vmem:[#allocation2 + $0xc0] sm:$0xff]
    %v116 = vld [vmem:[#allocation2 + $0xc8] sm:$0xff]
    %v117 = vld [vmem:[#allocation2 + $0xd0] sm:$0xff]
    %v118 = vld [vmem:[#allocation2 + $0xd8] sm:$0xff]
    %v119 = vld [vmem:[#allocation2 + $0xe0] sm:$0xff]
    %v120 = vld [vmem:[#allocation2 + $0xe8] sm:$0xff]
    %v121 = vld [vmem:[#allocation2 + $0xf0] sm:$0xff]
    %v122 = vld [vmem:[#allocation2 + $0xf8] sm:$0xff]
    %v123 = vld [vmem:[#allocation3] sm:$0xf]
    %v124 = vld [vmem:[#allocation3 + $0x4] sm:$0xf]
    %v125 = vld [vmem:[#allocation3 + $0x8] sm:$0xf]
    %v126 = vld [vmem:[#allocation3 + $0xc] sm:$0xf]
    %v127 = vld [vmem:[#allocation3 + $0x10] sm:$0xf]
    %v128 = vld [vmem:[#allocation3 + $0x14] sm:$0xf]
    %v129 = vld [vmem:[#allocation3 + $0x18] sm:$0xf]
    %v130 = vld [vmem:[#allocation3 + $0x1c] sm:$0xf]
    %v131 = vld [vmem:[#allocation6] sm:$0xff]
    %v132 = vld [vmem:[#allocation6 + $0x8] sm:$0xff]
    %v133 = vld [vmem:[#allocation6 + $0x10] sm:$0xff]
    %v134 = vld [vmem:[#allocation6 + $0x18] sm:$0xff]
    %v135 = vld [vmem:[#allocation6 + $0x20] sm:$0xff]
    %v136 = vld [vmem:[#allocation6 + $0x28] sm:$0xff]
    %v137 = vld [vmem:[#allocation6 + $0x30] sm:$0xff]
    %v138 = vld [vmem:[#allocation6 + $0x38] sm:$0xff]
    %v139 = vld [vmem:[#allocation6 + $0x40] sm:$0xff]
    %v140 = vld [vmem:[#allocation6 + $0x48] sm:$0xff]
    %v141 = vld [vmem:[#allocation6 + $0x50] sm:$0xff]
    %v142 = vld [vmem:[#allocation6 + $0x58] sm:$0xff]
    %v143 = vld [vmem:[#allocation6 + $0x60] sm:$0xff]
    %v144 = vld [vmem:[#allocation6 + $0x68] sm:$0xff]
    %v145 = vld [vmem:[#allocation6 + $0x70] sm:$0xff]
    %v146 = vld [vmem:[#allocation6 + $0x78] sm:$0xff]
    %v147 = vld [vmem:[#allocation6 + $0x80] sm:$0xff]
    %v148 = vld [vmem:[#allocation6 + $0x88] sm:$0xff]
    %v149 = vld [vmem:[#allocation6 + $0x90] sm:$0xff]
    %v150 = vld [vmem:[#allocation6 + $0x98] sm:$0xff]
    %v151 = vld [vmem:[#allocation6 + $0xa0] sm:$0xff]
    %v152 = vld [vmem:[#allocation6 + $0xa8] sm:$0xff]
    %v153 = vld [vmem:[#allocation6 + $0xb0] sm:$0xff]
    %v154 = vld [vmem:[#allocation6 + $0xb8] sm:$0xff]
    %v155 = vld [vmem:[#allocation6 + $0xc0] sm:$0xff]
    %v156 = vld [vmem:[#allocation6 + $0xc8] sm:$0xff]
    %v157 = vld [vmem:[#allocation6 + $0xd0] sm:$0xff]
    %v158 = vld [vmem:[#allocation6 + $0xd8] sm:$0xff]
    %v159 = vld [vmem:[#allocation6 + $0xe0] sm:$0xff]
    %v160 = vld [vmem:[#allocation6 + $0xe8] sm:$0xff]
    %v161 = vld [vmem:[#allocation6 + $0xf0] sm:$0xff]
    %v162 = vld [vmem:[#allocation6 + $0xf8] sm:$0xff]
    %v171 = vunpack.c.l.b16 %v123
    %v172 = vunpack.c.l.b16 %v124
    %v173 = vunpack.c.l.b16 %v125
    %v174 = vunpack.c.l.b16 %v126
    %v175 = vunpack.c.l.b16 %v127
    %v176 = vunpack.c.l.b16 %v128
    %v177 = vunpack.c.l.b16 %v129
    %v178 = vunpack.c.l.b16 %v130
    %v179 = vpack.c.b16 %v172, %v171
    %v180 = vpack.c.b16 %v174, %v173
    %v181 = vpack.c.b16 %v176, %v175
    %v182 = vpack.c.b16 %v178, %v177
    %v219 = vunpack.c.l.b16 %v131
    %v220 = vunpack.c.h.b16 %v131
    %v221 = vunpack.c.l.b16 %v132
    %v222 = vunpack.c.h.b16 %v132
    %v223 = vunpack.c.l.b16 %v133
    %v224 = vunpack.c.h.b16 %v133
    %v225 = vunpack.c.l.b16 %v134
    %v226 = vunpack.c.h.b16 %v134
    %v227 = vunpack.c.l.b16 %v135
    %v228 = vunpack.c.h.b16 %v135
    %v229 = vunpack.c.l.b16 %v136
    %v230 = vunpack.c.h.b16 %v136
    %v231 = vunpack.c.l.b16 %v137
    %v232 = vunpack.c.h.b16 %v137
    %v233 = vunpack.c.l.b16 %v138
    %v234 = vunpack.c.h.b16 %v138
    %v235 = vunpack.c.l.b16 %v139
    %v236 = vunpack.c.h.b16 %v139
    %v237 = vunpack.c.l.b16 %v140
    %v238 = vunpack.c.h.b16 %v140
    %v239 = vunpack.c.l.b16 %v141
    %v240 = vunpack.c.h.b16 %v141
    %v241 = vunpack.c.l.b16 %v142
    %v242 = vunpack.c.h.b16 %v142
    %v243 = vunpack.c.l.b16 %v143
    %v244 = vunpack.c.h.b16 %v143
    %v245 = vunpack.c.l.b16 %v144
    %v246 = vunpack.c.h.b16 %v144
    %v247 = vunpack.c.l.b16 %v145
    %v248 = vunpack.c.h.b16 %v145
    %v249 = vunpack.c.l.b16 %v146
    %v250 = vunpack.c.h.b16 %v146
    %v251 = vunpack.c.l.b16 %v147
    %v252 = vunpack.c.h.b16 %v147
    %v253 = vunpack.c.l.b16 %v148
    %v254 = vunpack.c.h.b16 %v148
    %v255 = vunpack.c.l.b16 %v149
    %v256 = vunpack.c.h.b16 %v149
    %v257 = vunpack.c.l.b16 %v150
    %v258 = vunpack.c.h.b16 %v150
    %v259 = vunpack.c.l.b16 %v151
    %v260 = vunpack.c.h.b16 %v151
    %v261 = vunpack.c.l.b16 %v152
    %v262 = vunpack.c.h.b16 %v152
    %v263 = vunpack.c.l.b16 %v153
    %v264 = vunpack.c.h.b16 %v153
    %v265 = vunpack.c.l.b16 %v154
    %v266 = vunpack.c.h.b16 %v154
    %v267 = vunpack.c.l.b16 %v155
    %v268 = vunpack.c.h.b16 %v155
    %v269 = vunpack.c.l.b16 %v156
    %v270 = vunpack.c.h.b16 %v156
    %v271 = vunpack.c.l.b16 %v157
    %v272 = vunpack.c.h.b16 %v157
    %v273 = vunpack.c.l.b16 %v158
    %v274 = vunpack.c.h.b16 %v158
    %v275 = vunpack.c.l.b16 %v159
    %v276 = vunpack.c.h.b16 %v159
    %v277 = vunpack.c.l.b16 %v160
    %v278 = vunpack.c.h.b16 %v160
    %v279 = vunpack.c.l.b16 %v161
    %v280 = vunpack.c.h.b16 %v161
    %v281 = vunpack.c.l.b16 %v162
    %v282 = vunpack.c.h.b16 %v162
    %v283 = vpack.c.b16 %v223, %v219
    %v284 = vpack.c.b16 %v224, %v220
    %v285 = vpack.c.b16 %v225, %v221
    %v286 = vpack.c.b16 %v226, %v222
    %v287 = vpack.c.b16 %v231, %v227
    %v288 = vpack.c.b16 %v232, %v228
    %v289 = vpack.c.b16 %v233, %v229
    %v290 = vpack.c.b16 %v234, %v230
    %v291 = vpack.c.b16 %v239, %v235
    %v292 = vpack.c.b16 %v240, %v236
    %v293 = vpack.c.b16 %v241, %v237
    %v294 = vpack.c.b16 %v242, %v238
    %v295 = vpack.c.b16 %v247, %v243
    %v296 = vpack.c.b16 %v248, %v244
    %v297 = vpack.c.b16 %v249, %v245
    %v298 = vpack.c.b16 %v250, %v246
    %v299 = vpack.c.b16 %v255, %v251
    %v300 = vpack.c.b16 %v256, %v252
    %v301 = vpack.c.b16 %v257, %v253
    %v302 = vpack.c.b16 %v258, %v254
    %v303 = vpack.c.b16 %v263, %v259
    %v304 = vpack.c.b16 %v264, %v260
    %v305 = vpack.c.b16 %v265, %v261
    %v306 = vpack.c.b16 %v266, %v262
    %v307 = vpack.c.b16 %v271, %v267
    %v308 = vpack.c.b16 %v272, %v268
    %v309 = vpack.c.b16 %v273, %v269
    %v310 = vpack.c.b16 %v274, %v270
    %v311 = vpack.c.b16 %v279, %v275
    %v312 = vpack.c.b16 %v280, %v276
    %v313 = vpack.c.b16 %v281, %v277
    %v314 = vpack.c.b16 %v282, %v278
    %347 = vmatprep.subr.bf16.mxu0 %v284
    %348 = vmatpush1.bf16.msra.mxu0 %v283
    %349 = vmatprep.subr.bf16.mxu0 %v288
    %350 = vmatpush1.bf16.msra.mxu0 %v287
    %351 = vmatprep.subr.bf16.mxu0 %v292
    %352 = vmatpush1.bf16.msra.mxu0 %v291
    %353 = vmatprep.subr.bf16.mxu0 %v296
    %354 = vmatpush1.bf16.msra.mxu0 %v295
    %355 = vmatprep.subr.bf16.mxu0 %v300
    %356 = vmatpush1.bf16.msra.mxu0 %v299
    %357 = vmatprep.subr.bf16.mxu0 %v304
    %358 = vmatpush1.bf16.msra.mxu0 %v303
    %359 = vmatprep.subr.bf16.mxu0 %v308
    %360 = vmatpush1.bf16.msra.mxu0 %v307
    %361 = vmatprep.subr.bf16.mxu0 %v312
    %362 = vmatpush1.bf16.msra.mxu0 %v311
    %363 = vmatprep.subr.bf16.mxu0 0
    %364 = vmatpush1.bf16.msra.mxu0 0
    %365 = vmatprep.subr.bf16.mxu0 0
    %366 = vmatpush1.bf16.msra.mxu0 0
    %367 = vmatprep.subr.bf16.mxu0 0
    %368 = vmatpush1.bf16.msra.mxu0 0
    %369 = vmatprep.subr.bf16.mxu0 0
    %370 = vmatpush1.bf16.msra.mxu0 0
    %371 = vmatprep.subr.bf16.mxu0 0
    %372 = vmatpush1.bf16.msra.mxu0 0
    %373 = vmatprep.subr.bf16.mxu0 0
    %374 = vmatpush1.bf16.msra.mxu0 0
    %375 = vmatprep.subr.bf16.mxu0 0
    %376 = vmatpush1.bf16.msra.mxu0 0
    %377 = vmatprep.subr.bf16.mxu0 0
    %378 = vmatpush1.bf16.msra.mxu0 0
    %379 = vmatprep.mubr.bf16.mxu0 0
    %380 = vmatmul.mubr.bf16.gmra.mrb[0].mxu0 %v179
    %v381 = vpop.f32.mrb[0].mxu0
    %v382 = vadd.f32 0.0, %v381
    %v383 = vpop.f32.mrb[0].mxu0
    %v384 = vadd.f32 0.0, %v383
    %v385 = vpop.f32.mrb[0].mxu0
    %v386 = vadd.f32 0.0, %v385
    %v387 = vpop.f32.mrb[0].mxu0
    %v388 = vadd.f32 0.0, %v387
    %389 = vmatprep.mubr.bf16.mxu0 0
    %390 = vmatmul.mubr.bf16.gmra.mrb[0].mxu0 %v180
    %v391 = vpop.f32.mrb[0].mxu0
    %v392 = vadd.f32 0.0, %v391
    %v393 = vpop.f32.mrb[0].mxu0
    %v394 = vadd.f32 0.0, %v393
    %v395 = vpop.f32.mrb[0].mxu0
    %v396 = vadd.f32 0.0, %v395
    %v397 = vpop.f32.mrb[0].mxu0
    %v398 = vadd.f32 0.0, %v397
    %399 = vmatprep.mubr.bf16.mxu0 0
    %400 = vmatmul.mubr.bf16.gmra.mrb[0].mxu0 %v181
    %v401 = vpop.f32.mrb[0].mxu0
    %v402 = vadd.f32 0.0, %v401
    %v403 = vpop.f32.mrb[0].mxu0
    %v404 = vadd.f32 0.0, %v403
    %v405 = vpop.f32.mrb[0].mxu0
    %v406 = vadd.f32 0.0, %v405
    %v407 = vpop.f32.mrb[0].mxu0
    %v408 = vadd.f32 0.0, %v407
    %409 = vmatprep.mubr.bf16.mxu0 0
    %410 = vmatmul.mubr.bf16.gmra.mrb[0].mxu0 %v182
    %v411 = vpop.f32.mrb[0].mxu0
    %v412 = vadd.f32 0.0, %v411
    %v413 = vpop.f32.mrb[0].mxu0
    %v414 = vadd.f32 0.0, %v413
    %v415 = vpop.f32.mrb[0].mxu0
    %v416 = vadd.f32 0.0, %v415
    %v417 = vpop.f32.mrb[0].mxu0
    %v418 = vadd.f32 0.0, %v417
    %419 = vdwg.mxu0
    %420 = vmatprep.subr.bf16.mxu0 %v286
    %421 = vmatpush1.bf16.msra.mxu0 %v285
    %422 = vmatprep.subr.bf16.mxu0 %v290
    %423 = vmatpush1.bf16.msra.mxu0 %v289
    %424 = vmatprep.subr.bf16.mxu0 %v294
    %425 = vmatpush1.bf16.msra.mxu0 %v293
    %426 = vmatprep.subr.bf16.mxu0 %v298
    %427 = vmatpush1.bf16.msra.mxu0 %v297
    %428 = vmatprep.subr.bf16.mxu0 %v302
    %429 = vmatpush1.bf16.msra.mxu0 %v301
    %430 = vmatprep.subr.bf16.mxu0 %v306
    %431 = vmatpush1.bf16.msra.mxu0 %v305
    %432 = vmatprep.subr.bf16.mxu0 %v310
    %433 = vmatpush1.bf16.msra.mxu0 %v309
    %434 = vmatprep.subr.bf16.mxu0 %v314
    %435 = vmatpush1.bf16.msra.mxu0 %v313
    %436 = vmatprep.subr.bf16.mxu0 0
    %437 = vmatpush1.bf16.msra.mxu0 0
    %438 = vmatprep.subr.bf16.mxu0 0
    %439 = vmatpush1.bf16.msra.mxu0 0
    %440 = vmatprep.subr.bf16.mxu0 0
    %441 = vmatpush1.bf16.msra.mxu0 0
    %442 = vmatprep.subr.bf16.mxu0 0
    %443 = vmatpush1.bf16.msra.mxu0 0
    %444 = vmatprep.subr.bf16.mxu0 0
    %445 = vmatpush1.bf16.msra.mxu0 0
    %446 = vmatprep.subr.bf16.mxu0 0
    %447 = vmatpush1.bf16.msra.mxu0 0
    %448 = vmatprep.subr.bf16.mxu0 0
    %449 = vmatpush1.bf16.msra.mxu0 0
    %450 = vmatprep.subr.bf16.mxu0 0
    %451 = vmatpush1.bf16.msra.mxu0 0
    %452 = vmatprep.mubr.bf16.mxu0 0
    %453 = vmatmul.mubr.bf16.gmra.mrb[0].mxu0 %v179
    %v454 = vpop.f32.mrb[0].mxu0
    %v455 = vadd.f32 0.0, %v454
    %v456 = vpop.f32.mrb[0].mxu0
    %v457 = vadd.f32 0.0, %v456
    %v458 = vpop.f32.mrb[0].mxu0
    %v459 = vadd.f32 0.0, %v458
    %v460 = vpop.f32.mrb[0].mxu0
    %v461 = vadd.f32 0.0, %v460
    %462 = vmatprep.mubr.bf16.mxu0 0
    %463 = vmatmul.mubr.bf16.gmra.mrb[0].mxu0 %v180
    %v464 = vpop.f32.mrb[0].mxu0
    %v465 = vadd.f32 0.0, %v464
    %v466 = vpop.f32.mrb[0].mxu0
    %v467 = vadd.f32 0.0, %v466
    %v468 = vpop.f32.mrb[0].mxu0
    %v469 = vadd.f32 0.0, %v468
    %v470 = vpop.f32.mrb[0].mxu0
    %v471 = vadd.f32 0.0, %v470
    %472 = vmatprep.mubr.bf16.mxu0 0
    %473 = vmatmul.mubr.bf16.gmra.mrb[0].mxu0 %v181
    %v474 = vpop.f32.mrb[0].mxu0
    %v475 = vadd.f32 0.0, %v474
    %v476 = vpop.f32.mrb[0].mxu0
    %v477 = vadd.f32 0.0, %v476
    %v478 = vpop.f32.mrb[0].mxu0
    %v479 = vadd.f32 0.0, %v478
    %v480 = vpop.f32.mrb[0].mxu0
    %v481 = vadd.f32 0.0, %v480
    %482 = vmatprep.mubr.bf16.mxu0 0
    %483 = vmatmul.mubr.bf16.gmra.mrb[0].mxu0 %v182
    %v484 = vpop.f32.mrb[0].mxu0
    %v485 = vadd.f32 0.0, %v484
    %v486 = vpop.f32.mrb[0].mxu0
    %v487 = vadd.f32 0.0, %v486
    %v488 = vpop.f32.mrb[0].mxu0
    %v489 = vadd.f32 0.0, %v488
    %v490 = vpop.f32.mrb[0].mxu0
    %v491 = vadd.f32 0.0, %v490
    %492 = vdwg.mxu0
    %v493 = vadd.f32 %v91, %v382
    %v494 = vadd.f32 %v92, %v384
    %v495 = vadd.f32 %v93, %v455
    %v496 = vadd.f32 %v94, %v457
    %v497 = vadd.f32 %v95, %v386
    %v498 = vadd.f32 %v96, %v388
    %v499 = vadd.f32 %v97, %v459
    %v500 = vadd.f32 %v98, %v461
    %v501 = vadd.f32 %v99, %v392
    %v502 = vadd.f32 %v100, %v394
    %v503 = vadd.f32 %v101, %v465
    %v504 = vadd.f32 %v102, %v467
    %v505 = vadd.f32 %v103, %v396
    %v506 = vadd.f32 %v104, %v398
    %v507 = vadd.f32 %v105, %v469
    %v508 = vadd.f32 %v106, %v471
    %v509 = vadd.f32 %v107, %v402
    %v510 = vadd.f32 %v108, %v404
    %v511 = vadd.f32 %v109, %v475
    %v512 = vadd.f32 %v110, %v477
    %v513 = vadd.f32 %v111, %v406
    %v514 = vadd.f32 %v112, %v408
    %v515 = vadd.f32 %v113, %v479
    %v516 = vadd.f32 %v114, %v481
    %v517 = vadd.f32 %v115, %v412
    %v518 = vadd.f32 %v116, %v414
    %v519 = vadd.f32 %v117, %v485
    %v520 = vadd.f32 %v118, %v487
    %v521 = vadd.f32 %v119, %v416
    %v522 = vadd.f32 %v120, %v418
    %v523 = vadd.f32 %v121, %v489
    %v524 = vadd.f32 %v122, %v491
    %525 = vst [vmem:[#allocation2] sm:$0xff] %v493
    %526 = vst [vmem:[#allocation2 + $0x8] sm:$0xff] %v494
    %527 = vst [vmem:[#allocation2 + $0x10] sm:$0xff] %v495
    %528 = vst [vmem:[#allocation2 + $0x18] sm:$0xff] %v496
    %529 = vst [vmem:[#allocation2 + $0x20] sm:$0xff] %v497
    %530 = vst [vmem:[#allocation2 + $0x28] sm:$0xff] %v498
    %531 = vst [vmem:[#allocation2 + $0x30] sm:$0xff] %v499
    %532 = vst [vmem:[#allocation2 + $0x38] sm:$0xff] %v500
    %533 = vst [vmem:[#allocation2 + $0x40] sm:$0xff] %v501
    %534 = vst [vmem:[#allocation2 + $0x48] sm:$0xff] %v502
    %535 = vst [vmem:[#allocation2 + $0x50] sm:$0xff] %v503
    %536 = vst [vmem:[#allocation2 + $0x58] sm:$0xff] %v504
    %537 = vst [vmem:[#allocation2 + $0x60] sm:$0xff] %v505
    %538 = vst [vmem:[#allocation2 + $0x68] sm:$0xff] %v506
    %539 = vst [vmem:[#allocation2 + $0x70] sm:$0xff] %v507
    %540 = vst [vmem:[#allocation2 + $0x78] sm:$0xff] %v508
    %541 = vst [vmem:[#allocation2 + $0x80] sm:$0xff] %v509
    %542 = vst [vmem:[#allocation2 + $0x88] sm:$0xff] %v510
    %543 = vst [vmem:[#allocation2 + $0x90] sm:$0xff] %v511
    %544 = vst [vmem:[#allocation2 + $0x98] sm:$0xff] %v512
    %545 = vst [vmem:[#allocation2 + $0xa0] sm:$0xff] %v513
    %546 = vst [vmem:[#allocation2 + $0xa8] sm:$0xff] %v514
    %547 = vst [vmem:[#allocation2 + $0xb0] sm:$0xff] %v515
    %548 = vst [vmem:[#allocation2 + $0xb8] sm:$0xff] %v516
    %549 = vst [vmem:[#allocation2 + $0xc0] sm:$0xff] %v517
    %550 = vst [vmem:[#allocation2 + $0xc8] sm:$0xff] %v518
    %551 = vst [vmem:[#allocation2 + $0xd0] sm:$0xff] %v519
    %552 = vst [vmem:[#allocation2 + $0xd8] sm:$0xff] %v520
    %553 = vst [vmem:[#allocation2 + $0xe0] sm:$0xff] %v521
    %554 = vst [vmem:[#allocation2 + $0xe8] sm:$0xff] %v522
    %555 = vst [vmem:[#allocation2 + $0xf0] sm:$0xff] %v523
    %556 = vst [vmem:[#allocation2 + $0xf8] sm:$0xff] %v524
    // Predicated region
    $region30: #{rnn_forward.7} parent=1 // pred_check
      %p557 = pneg %p55
    $region31: #{rnn_forward.7} parent=1 // pred_check_branch
      %559 = sbr.rel (%p557) target = $region33
    $region32: #{rnn_forward.7} parent=1 // pred_region
      %v560 = vld [vmem:[#allocation2] sm:$0xff]
      %v561 = vld [vmem:[#allocation2 + $0x8] sm:$0xff]
      %v562 = vld [vmem:[#allocation2 + $0x10] sm:$0xff]
      %v563 = vld [vmem:[#allocation2 + $0x18] sm:$0xff]
      %v564 = vld [vmem:[#allocation2 + $0x20] sm:$0xff]
      %v565 = vld [vmem:[#allocation2 + $0x28] sm:$0xff]
      %v566 = vld [vmem:[#allocation2 + $0x30] sm:$0xff]
      %v567 = vld [vmem:[#allocation2 + $0x38] sm:$0xff]
      %v568 = vld [vmem:[#allocation2 + $0x40] sm:$0xff]
      %v569 = vld [vmem:[#allocation2 + $0x48] sm:$0xff]
      %v570 = vld [vmem:[#allocation2 + $0x50] sm:$0xff]
      %v571 = vld [vmem:[#allocation2 + $0x58] sm:$0xff]
      %v572 = vld [vmem:[#allocation2 + $0x60] sm:$0xff]
      %v573 = vld [vmem:[#allocation2 + $0x68] sm:$0xff]
      %v574 = vld [vmem:[#allocation2 + $0x70] sm:$0xff]
      %v575 = vld [vmem:[#allocation2 + $0x78] sm:$0xff]
      %v576 = vld [vmem:[#allocation2 + $0x80] sm:$0xff]
      %v577 = vld [vmem:[#allocation2 + $0x88] sm:$0xff]
      %v578 = vld [vmem:[#allocation2 + $0x90] sm:$0xff]
      %v579 = vld [vmem:[#allocation2 + $0x98] sm:$0xff]
      %v580 = vld [vmem:[#allocation2 + $0xa0] sm:$0xff]
      %v581 = vld [vmem:[#allocation2 + $0xa8] sm:$0xff]
      %v582 = vld [vmem:[#allocation2 + $0xb0] sm:$0xff]
      %v583 = vld [vmem:[#allocation2 + $0xb8] sm:$0xff]
      %v584 = vld [vmem:[#allocation2 + $0xc0] sm:$0xff]
      %v585 = vld [vmem:[#allocation2 + $0xc8] sm:$0xff]
      %v586 = vld [vmem:[#allocation2 + $0xd0] sm:$0xff]
      %v587 = vld [vmem:[#allocation2 + $0xd8] sm:$0xff]
      %v588 = vld [vmem:[#allocation2 + $0xe0] sm:$0xff]
      %v589 = vld [vmem:[#allocation2 + $0xe8] sm:$0xff]
      %v590 = vld [vmem:[#allocation2 + $0xf0] sm:$0xff]
      %v591 = vld [vmem:[#allocation2 + $0xf8] sm:$0xff]
      %v592 = vld [vmem:[#allocation8] sm:$0xf]
      %v594 = vlaneseq
      %v595 = vshrl.u32 %v594, 7
      %v596 = vsub.s32 0, %v595
      %v597 = vrot.slane %v592, %v596
      %v598 = vlaneseq
      %v599 = vshrl.u32 %v598, 7
      %v600 = vsub.s32 1, %v599
      %v601 = vrot.slane %v592, %v600
      %v602 = vlaneseq
      %v603 = vshrl.u32 %v602, 7
      %v604 = vsub.s32 2, %v603
      %v605 = vrot.slane %v592, %v604
      %v606 = vlaneseq
      %v607 = vshrl.u32 %v606, 7
      %v608 = vsub.s32 3, %v607
      %v609 = vrot.slane %v592, %v608
      %v614 = vadd.f32 %v560, %v597
      %v615 = vadd.f32 %v561, %v601
      %v616 = vadd.f32 %v562, %v605
      %v617 = vadd.f32 %v563, %v609
      %v618 = vadd.f32 %v564, %v597
      %v619 = vadd.f32 %v565, %v601
      %v620 = vadd.f32 %v566, %v605
      %v621 = vadd.f32 %v567, %v609
      %v622 = vadd.f32 %v568, %v597
      %v623 = vadd.f32 %v569, %v601
      %v624 = vadd.f32 %v570, %v605
      %v625 = vadd.f32 %v571, %v609
      %v626 = vadd.f32 %v572, %v597
      %v627 = vadd.f32 %v573, %v601
      %v628 = vadd.f32 %v574, %v605
      %v629 = vadd.f32 %v575, %v609
      %v630 = vadd.f32 %v576, %v597
      %v631 = vadd.f32 %v577, %v601
      %v632 = vadd.f32 %v578, %v605
      %v633 = vadd.f32 %v579, %v609
      %v634 = vadd.f32 %v580, %v597
      %v635 = vadd.f32 %v581, %v601
      %v636 = vadd.f32 %v582, %v605
      %v637 = vadd.f32 %v583, %v609
      %v638 = vadd.f32 %v584, %v597
      %v639 = vadd.f32 %v585, %v601
      %v640 = vadd.f32 %v586, %v605
      %v641 = vadd.f32 %v587, %v609
      %v642 = vadd.f32 %v588, %v597
      %v643 = vadd.f32 %v589, %v601
      %v644 = vadd.f32 %v590, %v605
      %v645 = vadd.f32 %v591, %v609
      %v646 = vpack.c.bf16 %v618, %v614
      %v647 = vpack.c.bf16 %v619, %v615
      %v648 = vpack.c.bf16 %v620, %v616
      %v649 = vpack.c.bf16 %v621, %v617
      %v650 = vpack.c.bf16 %v626, %v622
      %v651 = vpack.c.bf16 %v627, %v623
      %v652 = vpack.c.bf16 %v628, %v624
      %v653 = vpack.c.bf16 %v629, %v625
      %v654 = vpack.c.bf16 %v634, %v630
      %v655 = vpack.c.bf16 %v635, %v631
      %v656 = vpack.c.bf16 %v636, %v632
      %v657 = vpack.c.bf16 %v637, %v633
      %v658 = vpack.c.bf16 %v642, %v638
      %v659 = vpack.c.bf16 %v643, %v639
      %v660 = vpack.c.bf16 %v644, %v640
      %v661 = vpack.c.bf16 %v645, %v641
      %v678 = vunpack.c.l.b16 %v646
      %v679 = vunpack.c.l.b16 %v647
      %v680 = vunpack.c.l.b16 %v648
      %v681 = vunpack.c.l.b16 %v649
      %v682 = vunpack.c.h.b16 %v646
      %v683 = vunpack.c.h.b16 %v647
      %v684 = vunpack.c.h.b16 %v648
      %v685 = vunpack.c.h.b16 %v649
      %v686 = vunpack.c.l.b16 %v650
      %v687 = vunpack.c.l.b16 %v651
      %v688 = vunpack.c.l.b16 %v652
      %v689 = vunpack.c.l.b16 %v653
      %v690 = vunpack.c.h.b16 %v650
      %v691 = vunpack.c.h.b16 %v651
      %v692 = vunpack.c.h.b16 %v652
      %v693 = vunpack.c.h.b16 %v653
      %v694 = vunpack.c.l.b16 %v654
      %v695 = vunpack.c.l.b16 %v655
      %v696 = vunpack.c.l.b16 %v656
      %v697 = vunpack.c.l.b16 %v657
      %v698 = vunpack.c.h.b16 %v654
      %v699 = vunpack.c.h.b16 %v655
      %v700 = vunpack.c.h.b16 %v656
      %v701 = vunpack.c.h.b16 %v657
      %v702 = vunpack.c.l.b16 %v658
      %v703 = vunpack.c.l.b16 %v659
      %v704 = vunpack.c.l.b16 %v660
      %v705 = vunpack.c.l.b16 %v661
      %v706 = vunpack.c.h.b16 %v658
      %v707 = vunpack.c.h.b16 %v659
      %v708 = vunpack.c.h.b16 %v660
      %v709 = vunpack.c.h.b16 %v661
      %v710 = vpack.c.b16 %v679, %v678
      %v711 = vpack.c.b16 %v681, %v680
      %v712 = vpack.c.b16 %v683, %v682
      %v713 = vpack.c.b16 %v685, %v684
      %v714 = vpack.c.b16 %v687, %v686
      %v715 = vpack.c.b16 %v689, %v688
      %v716 = vpack.c.b16 %v691, %v690
      %v717 = vpack.c.b16 %v693, %v692
      %v718 = vpack.c.b16 %v695, %v694
      %v719 = vpack.c.b16 %v697, %v696
      %v720 = vpack.c.b16 %v699, %v698
      %v721 = vpack.c.b16 %v701, %v700
      %v722 = vpack.c.b16 %v703, %v702
      %v723 = vpack.c.b16 %v705, %v704
      %v724 = vpack.c.b16 %v707, %v706
      %v725 = vpack.c.b16 %v709, %v708
      %742 = vst [vmem:[#allocation9] sm:$0xff] %v710
      %743 = vst [vmem:[#allocation9 + $0x8] sm:$0xff] %v711
      %744 = vst [vmem:[#allocation9 + $0x10] sm:$0xff] %v712
      %745 = vst [vmem:[#allocation9 + $0x18] sm:$0xff] %v713
      %746 = vst [vmem:[#allocation9 + $0x20] sm:$0xff] %v714
      %747 = vst [vmem:[#allocation9 + $0x28] sm:$0xff] %v715
      %748 = vst [vmem:[#allocation9 + $0x30] sm:$0xff] %v716
      %749 = vst [vmem:[#allocation9 + $0x38] sm:$0xff] %v717
      %750 = vst [vmem:[#allocation9 + $0x40] sm:$0xff] %v718
      %751 = vst [vmem:[#allocation9 + $0x48] sm:$0xff] %v719
      %752 = vst [vmem:[#allocation9 + $0x50] sm:$0xff] %v720
      %753 = vst [vmem:[#allocation9 + $0x58] sm:$0xff] %v721
      %754 = vst [vmem:[#allocation9 + $0x60] sm:$0xff] %v722
      %755 = vst [vmem:[#allocation9 + $0x68] sm:$0xff] %v723
      %756 = vst [vmem:[#allocation9 + $0x70] sm:$0xff] %v724
      %757 = vst [vmem:[#allocation9 + $0x78] sm:$0xff] %v725
    $region33: #{rnn_forward.7} parent=1 // pred_fallthru
      _
    // Predicated region
    $region34: #{rnn_forward.7} parent=1 // pred_check
      _
    $region35: #{rnn_forward.7} parent=1 // pred_check_branch
      %759 = sbr.rel (0) target = $region37
    $region36: #{rnn_forward.7} parent=1 // pred_region
      %s761 = ssub.s32 2048, 2048
      %762 = vsyncadd [#allocation5], %s761
      %s763 = sshll.u32 [#allocation9], 4
      %s764 = int_to_ptr.vmem [resolvable:$true] %s763
      %769 = dma.vmem_to_hbm [thread:$0]  %s764, 2048, %s3, [#allocation5], 256, 256, 16
    $region37: #{rnn_forward.7} parent=1 // pred_fallthru
      _
    // Predicated region
    $region38: #{rnn_forward.7} parent=1 // pred_check
      _
    $region39: #{rnn_forward.7} parent=1 // pred_check_branch
      %771 = sbr.rel (0) target = $region41
    $region40: #{rnn_forward.7} parent=1 // pred_region
      %772 = dma.done [#allocation5], 2048
    $region41: #{rnn_forward.7} parent=1 // pred_fallthru
      _
    %773 = vsyncpa [#allocation4], 1
    %774 = vsyncpa [#allocation7], 1
    %775 = vsyncpa [#allocation5], 1

// kernel: rnn_forward.5
$region0: #{rnn_forward.5}
  #allocation0 [shape = 'u32[]', space=smem, size = 0x4, offset = 0x4, fixed_abs, tag = 'smem constant byte address 0x4 - core index']
  #allocation1 [shape = 'u32[144,128]{1,0:T(1,128)}', space=vmem, size = 0x12000, scoped, tag = 'internal scratch']
  #allocation2 [shape = 'f32[64,512]{1,0:T(8,128)}', space=vmem, size = 0x20000, scoped, tag = 'scratch operand']
  %s0 = inlined_call_operand.hbm [shape: bf16[64,32], index: 0, kind: input, shape index: {}]
  %s1 = inlined_call_operand.hbm [shape: bf16[32,512], index: 1, kind: input, shape index: {}]
  %s2 = inlined_call_operand.hbm [shape: f32[1,512], index: 2, kind: input, shape index: {}]
  %s3 = inlined_call_operand.hbm [shape: bf16[64,512], index: 3, kind: output, shape index: {}]
  %s4 = sld [smem:[#allocation0]]
  $region42: #{rnn_forward.5} parent=0
    _
  %s6 = ssub.s32 1, %s4
  %s7 = scalar_select 0, %s6, %s4
  $region1: #{rnn_forward.5} parent=0
    #allocation3 [shape = 'u8[16384]{0}', space=vmem, size = 0x4000, scoped, tag = 'input window, operand 0, single buffered']
    #allocation4 [shape = 's32[1]{0}', space=sflag, size = 0x4, scoped, tag = 'scoped memory for rnn_forward.5']
    #allocation5 [shape = 's32[1]{0}', space=sflag, size = 0x4, scoped, tag = 'scoped memory for rnn_forward.5']
    #allocation6 [shape = 'u8[32768]{0}', space=vmem, size = 0x8000, scoped, tag = 'input window, operand 1, single buffered']
    #allocation7 [shape = 's32[1]{0}', space=sflag, size = 0x4, scoped, tag = 'scoped memory for rnn_forward.5']
    #allocation8 [shape = 'u8[2048]{0}', space=vmem, size = 0x800, scoped, tag = 'input window, operand 2, single buffered']
    #allocation9 [shape = 'u8[65536]{0}', space=vmem, size = 0x10000, scoped, tag = 'output window, operand 0, single buffered']
    %8 = vsyncpa [#allocation4], 0
    %9 = vsyncpa [#allocation7], 0
    %10 = vsyncpa [#allocation5], 0
    // Predicated region
    $region2: #{rnn_forward.5} parent=1 // pred_check
      _
    $region3: #{rnn_forward.5} parent=1 // pred_check_branch
      %12 = sbr.rel (0) target = $region5
    $region4: #{rnn_forward.5} parent=1 // pred_region
      %s14 = ssub.s32 512, 512
      %15 = vsyncadd [#allocation4], %s14
      %s16 = sshll.u32 [#allocation3], 4
      %s17 = int_to_ptr.vmem [resolvable:$true] %s16
      %22 = dma.hbm_to_vmem [thread:$0]  %s0, 512, %s17, [#allocation4], 64, 64, 4
    $region5: #{rnn_forward.5} parent=1 // pred_fallthru
      _
    // Predicated region
    $region6: #{rnn_forward.5} parent=1 // pred_check
      _
    $region7: #{rnn_forward.5} parent=1 // pred_check_branch
      %24 = sbr.rel (0) target = $region9
    $region8: #{rnn_forward.5} parent=1 // pred_region
      %s26 = ssub.s32 1024, 1024
      %27 = vsyncadd [#allocation7], %s26
      %s28 = sshll.u32 [#allocation6], 4
      %s29 = int_to_ptr.vmem [resolvable:$true] %s28
      %34 = dma.hbm_to_vmem [thread:$0]  %s1, 1024, %s29, [#allocation7], 256, 256, 16
    $region9: #{rnn_forward.5} parent=1 // pred_fallthru
      _
    // Predicated region
    $region10: #{rnn_forward.5} parent=1 // pred_check
      _
    $region11: #{rnn_forward.5} parent=1 // pred_check_branch
      %36 = sbr.rel (0) target = $region13
    $region12: #{rnn_forward.5} parent=1 // pred_region
      %s38 = ssub.s32 64, 64
      %39 = vsyncadd [#allocation7], %s38
      %s41 = sshll.u32 [#allocation8], 4
      %s42 = int_to_ptr.vmem [resolvable:$true] %s41
      %44 = dma.hbm_to_vmem [thread:$0]  %s2, 64, %s42, [#allocation7]
    $region13: #{rnn_forward.5} parent=1 // pred_fallthru
      _
    // Predicated region
    $region14: #{rnn_forward.5} parent=1 // pred_check
      _
    $region15: #{rnn_forward.5} parent=1 // pred_check_branch
      %46 = sbr.rel (0) target = $region17
    $region16: #{rnn_forward.5} parent=1 // pred_region
      %47 = dma.done [#allocation4], 512
    $region17: #{rnn_forward.5} parent=1 // pred_fallthru
      _
    // Predicated region
    $region18: #{rnn_forward.5} parent=1 // pred_check
      _
    $region19: #{rnn_forward.5} parent=1 // pred_check_branch
      %49 = sbr.rel (0) target = $region21
    $region20: #{rnn_forward.5} parent=1 // pred_region
      %50 = dma.done [#allocation7], 1024
    $region21: #{rnn_forward.5} parent=1 // pred_fallthru
      _
    // Predicated region
    $region22: #{rnn_forward.5} parent=1 // pred_check
      _
    $region23: #{rnn_forward.5} parent=1 // pred_check_branch
      %52 = sbr.rel (0) target = $region25
    $region24: #{rnn_forward.5} parent=1 // pred_region
      %53 = dma.done [#allocation7], 64
    $region25: #{rnn_forward.5} parent=1 // pred_fallthru
      _
    %p55 = scmp.eq.s32.totalorder 0, 0
    // Predicated region
    $region26: #{rnn_forward.5} parent=1 // pred_check
      %p56 = pneg %p55
    $region27: #{rnn_forward.5} parent=1 // pred_check_branch
      %58 = sbr.rel (%p56) target = $region29
    $region28: #{rnn_forward.5} parent=1 // pred_region
      %59 = vst [vmem:[#allocation2] sm:$0xff] 0.0
      %60 = vst [vmem:[#allocation2 + $0x8] sm:$0xff] 0.0
      %61 = vst [vmem:[#allocation2 + $0x10] sm:$0xff] 0.0
      %62 = vst [vmem:[#allocation2 + $0x18] sm:$0xff] 0.0
      %63 = vst [vmem:[#allocation2 + $0x20] sm:$0xff] 0.0
      %64 = vst [vmem:[#allocation2 + $0x28] sm:$0xff] 0.0
      %65 = vst [vmem:[#allocation2 + $0x30] sm:$0xff] 0.0
      %66 = vst [vmem:[#allocation2 + $0x38] sm:$0xff] 0.0
      %67 = vst [vmem:[#allocation2 + $0x40] sm:$0xff] 0.0
      %68 = vst [vmem:[#allocation2 + $0x48] sm:$0xff] 0.0
      %69 = vst [vmem:[#allocation2 + $0x50] sm:$0xff] 0.0
      %70 = vst [vmem:[#allocation2 + $0x58] sm:$0xff] 0.0
      %71 = vst [vmem:[#allocation2 + $0x60] sm:$0xff] 0.0
      %72 = vst [vmem:[#allocation2 + $0x68] sm:$0xff] 0.0
      %73 = vst [vmem:[#allocation2 + $0x70] sm:$0xff] 0.0
      %74 = vst [vmem:[#allocation2 + $0x78] sm:$0xff] 0.0
      %75 = vst [vmem:[#allocation2 + $0x80] sm:$0xff] 0.0
      %76 = vst [vmem:[#allocation2 + $0x88] sm:$0xff] 0.0
      %77 = vst [vmem:[#allocation2 + $0x90] sm:$0xff] 0.0
      %78 = vst [vmem:[#allocation2 + $0x98] sm:$0xff] 0.0
      %79 = vst [vmem:[#allocation2 + $0xa0] sm:$0xff] 0.0
      %80 = vst [vmem:[#allocation2 + $0xa8] sm:$0xff] 0.0
      %81 = vst [vmem:[#allocation2 + $0xb0] sm:$0xff] 0.0
      %82 = vst [vmem:[#allocation2 + $0xb8] sm:$0xff] 0.0
      %83 = vst [vmem:[#allocation2 + $0xc0] sm:$0xff] 0.0
      %84 = vst [vmem:[#allocation2 + $0xc8] sm:$0xff] 0.0
      %85 = vst [vmem:[#allocation2 + $0xd0] sm:$0xff] 0.0
      %86 = vst [vmem:[#allocation2 + $0xd8] sm:$0xff] 0.0
      %87 = vst [vmem:[#allocation2 + $0xe0] sm:$0xff] 0.0
      %88 = vst [vmem:[#allocation2 + $0xe8] sm:$0xff] 0.0
      %89 = vst [vmem:[#allocation2 + $0xf0] sm:$0xff] 0.0
      %90 = vst [vmem:[#allocation2 + $0xf8] sm:$0xff] 0.0
    $region29: #{rnn_forward.5} parent=1 // pred_fallthru
      _
    %v91 = vld [vmem:[#allocation2] sm:$0xff]
    %v92 = vld [vmem:[#allocation2 + $0x8] sm:$0xff]
    %v93 = vld [vmem:[#allocation2 + $0x10] sm:$0xff]
    %v94 = vld [vmem:[#allocation2 + $0x18] sm:$0xff]
    %v95 = vld [vmem:[#allocation2 + $0x20] sm:$0xff]
    %v96 = vld [vmem:[#allocation2 + $0x28] sm:$0xff]
    %v97 = vld [vmem:[#allocation2 + $0x30] sm:$0xff]
    %v98 = vld [vmem:[#allocation2 + $0x38] sm:$0xff]
    %v99 = vld [vmem:[#allocation2 + $0x40] sm:$0xff]
    %v100 = vld [vmem:[#allocation2 + $0x48] sm:$0xff]
    %v101 = vld [vmem:[#allocation2 + $0x50] sm:$0xff]
    %v102 = vld [vmem:[#allocation2 + $0x58] sm:$0xff]
    %v103 = vld [vmem:[#allocation2 + $0x60] sm:$0xff]
    %v104 = vld [vmem:[#allocation2 + $0x68] sm:$0xff]
    %v105 = vld [vmem:[#allocation2 + $0x70] sm:$0xff]
    %v106 = vld [vmem:[#allocation2 + $0x78] sm:$0xff]
    %v107 = vld [vmem:[#allocation2 + $0x80] sm:$0xff]
    %v108 = vld [vmem:[#allocation2 + $0x88] sm:$0xff]
    %v109 = vld [vmem:[#allocation2 + $0x90] sm:$0xff]
    %v110 = vld [vmem:[#allocation2 + $0x98] sm:$0xff]
    %v111 = vld [vmem:[#allocation2 + $0xa0] sm:$0xff]
    %v112 = vld [vmem:[#allocation2 + $0xa8] sm:$0xff]
    %v113 = vld [vmem:[#allocation2 + $0xb0] sm:$0xff]
    %v114 = vld [vmem:[#allocation2 + $0xb8] sm:$0xff]
    %v115 = vld [vmem:[#allocation2 + $0xc0] sm:$0xff]
    %v116 = vld [vmem:[#allocation2 + $0xc8] sm:$0xff]
    %v117 = vld [vmem:[#allocation2 + $0xd0] sm:$0xff]
    %v118 = vld [vmem:[#allocation2 + $0xd8] sm:$0xff]
    %v119 = vld [vmem:[#allocation2 + $0xe0] sm:$0xff]
    %v120 = vld [vmem:[#allocation2 + $0xe8] sm:$0xff]
    %v121 = vld [vmem:[#allocation2 + $0xf0] sm:$0xff]
    %v122 = vld [vmem:[#allocation2 + $0xf8] sm:$0xff]
    %v123 = vld [vmem:[#allocation3] sm:$0xf]
    %v124 = vld [vmem:[#allocation3 + $0x4] sm:$0xf]
    %v125 = vld [vmem:[#allocation3 + $0x8] sm:$0xf]
    %v126 = vld [vmem:[#allocation3 + $0xc] sm:$0xf]
    %v127 = vld [vmem:[#allocation3 + $0x10] sm:$0xf]
    %v128 = vld [vmem:[#allocation3 + $0x14] sm:$0xf]
    %v129 = vld [vmem:[#allocation3 + $0x18] sm:$0xf]
    %v130 = vld [vmem:[#allocation3 + $0x1c] sm:$0xf]
    %v131 = vld [vmem:[#allocation6] sm:$0xff]
    %v132 = vld [vmem:[#allocation6 + $0x8] sm:$0xff]
    %v133 = vld [vmem:[#allocation6 + $0x10] sm:$0xff]
    %v134 = vld [vmem:[#allocation6 + $0x18] sm:$0xff]
    %v135 = vld [vmem:[#allocation6 + $0x20] sm:$0xff]
    %v136 = vld [vmem:[#allocation6 + $0x28] sm:$0xff]
    %v137 = vld [vmem:[#allocation6 + $0x30] sm:$0xff]
    %v138 = vld [vmem:[#allocation6 + $0x38] sm:$0xff]
    %v147 = vunpack.c.l.b16 %v123
    %v148 = vunpack.c.l.b16 %v124
    %v149 = vunpack.c.l.b16 %v125
    %v150 = vunpack.c.l.b16 %v126
    %v151 = vunpack.c.l.b16 %v127
    %v152 = vunpack.c.l.b16 %v128
    %v153 = vunpack.c.l.b16 %v129
    %v154 = vunpack.c.l.b16 %v130
    %v155 = vpack.c.b16 %v148, %v147
    %v156 = vpack.c.b16 %v150, %v149
    %v157 = vpack.c.b16 %v152, %v151
    %v158 = vpack.c.b16 %v154, %v153
    %v167 = vunpack.c.l.b16 %v131
    %v168 = vunpack.c.h.b16 %v131
    %v169 = vunpack.c.l.b16 %v132
    %v170 = vunpack.c.h.b16 %v132
    %v171 = vunpack.c.l.b16 %v133
    %v172 = vunpack.c.h.b16 %v133
    %v173 = vunpack.c.l.b16 %v134
    %v174 = vunpack.c.h.b16 %v134
    %v175 = vunpack.c.l.b16 %v135
    %v176 = vunpack.c.h.b16 %v135
    %v177 = vunpack.c.l.b16 %v136
    %v178 = vunpack.c.h.b16 %v136
    %v179 = vunpack.c.l.b16 %v137
    %v180 = vunpack.c.h.b16 %v137
    %v181 = vunpack.c.l.b16 %v138
    %v182 = vunpack.c.h.b16 %v138
    %v183 = vpack.c.b16 %v171, %v167
    %v184 = vpack.c.b16 %v172, %v168
    %v185 = vpack.c.b16 %v173, %v169
    %v186 = vpack.c.b16 %v174, %v170
    %v187 = vpack.c.b16 %v179, %v175
    %v188 = vpack.c.b16 %v180, %v176
    %v189 = vpack.c.b16 %v181, %v177
    %v190 = vpack.c.b16 %v182, %v178
    %vm199 = vcmask 261120
    %v201 = vsel %vm199, %v155, 0
    %v204 = vsel %vm199, %v156, 0
    %v207 = vsel %vm199, %v157, 0
    %v210 = vsel %vm199, %v158, 0
    %212 = vmatprep.subr.bf16.mxu0 %v184
    %213 = vmatpush1.bf16.msra.mxu0 %v183
    %214 = vmatprep.subr.bf16.mxu0 %v188
    %215 = vmatpush1.bf16.msra.mxu0 %v187
    %216 = vmatprep.subr.bf16.mxu0 0
    %217 = vmatpush1.bf16.msra.mxu0 0
    %218 = vmatprep.subr.bf16.mxu0 0
    %219 = vmatpush1.bf16.msra.mxu0 0
    %220 = vmatprep.subr.bf16.mxu0 0
    %221 = vmatpush1.bf16.msra.mxu0 0
    %222 = vmatprep.subr.bf16.mxu0 0
    %223 = vmatpush1.bf16.msra.mxu0 0
    %224 = vmatprep.subr.bf16.mxu0 0
    %225 = vmatpush1.bf16.msra.mxu0 0
    %226 = vmatprep.subr.bf16.mxu0 0
    %227 = vmatpush1.bf16.msra.mxu0 0
    %228 = vmatprep.subr.bf16.mxu0 0
    %229 = vmatpush1.bf16.msra.mxu0 0
    %230 = vmatprep.subr.bf16.mxu0 0
    %231 = vmatpush1.bf16.msra.mxu0 0
    %232 = vmatprep.subr.bf16.mxu0 0
    %233 = vmatpush1.bf16.msra.mxu0 0
    %234 = vmatprep.subr.bf16.mxu0 0
    %235 = vmatpush1.bf16.msra.mxu0 0
    %236 = vmatprep.subr.bf16.mxu0 0
    %237 = vmatpush1.bf16.msra.mxu0 0
    %238 = vmatprep.subr.bf16.mxu0 0
    %239 = vmatpush1.bf16.msra.mxu0 0
    %240 = vmatprep.subr.bf16.mxu0 0
    %241 = vmatpush1.bf16.msra.mxu0 0
    %242 = vmatprep.subr.bf16.mxu0 0
    %243 = vmatpush1.bf16.msra.mxu0 0
    %244 = vmatprep.mubr.bf16.mxu0 0
    %245 = vmatmul.mubr.bf16.gmra.mrb[0].mxu0 %v201
    %v246 = vpop.f32.mrb[0].mxu0
    %v247 = vadd.f32 0.0, %v246
    %v248 = vpop.f32.mrb[0].mxu0
    %v249 = vadd.f32 0.0, %v248
    %v250 = vpop.f32.mrb[0].mxu0
    %v251 = vadd.f32 0.0, %v250
    %v252 = vpop.f32.mrb[0].mxu0
    %v253 = vadd.f32 0.0, %v252
    %254 = vmatprep.mubr.bf16.mxu0 0
    %255 = vmatmul.mubr.bf16.gmra.mrb[0].mxu0 %v204
    %v256 = vpop.f32.mrb[0].mxu0
    %v257 = vadd.f32 0.0, %v256
    %v258 = vpop.f32.mrb[0].mxu0
    %v259 = vadd.f32 0.0, %v258
    %v260 = vpop.f32.mrb[0].mxu0
    %v261 = vadd.f32 0.0, %v260
    %v262 = vpop.f32.mrb[0].mxu0
    %v263 = vadd.f32 0.0, %v262
    %264 = vmatprep.mubr.bf16.mxu0 0
    %265 = vmatmul.mubr.bf16.gmra.mrb[0].mxu0 %v207
    %v266 = vpop.f32.mrb[0].mxu0
    %v267 = vadd.f32 0.0, %v266
    %v268 = vpop.f32.mrb[0].mxu0
    %v269 = vadd.f32 0.0, %v268
    %v270 = vpop.f32.mrb[0].mxu0
    %v271 = vadd.f32 0.0, %v270
    %v272 = vpop.f32.mrb[0].mxu0
    %v273 = vadd.f32 0.0, %v272
    %274 = vmatprep.mubr.bf16.mxu0 0
    %275 = vmatmul.mubr.bf16.gmra.mrb[0].mxu0 %v210
    %v276 = vpop.f32.mrb[0].mxu0
    %v277 = vadd.f32 0.0, %v276
    %v278 = vpop.f32.mrb[0].mxu0
    %v279 = vadd.f32 0.0, %v278
    %v280 = vpop.f32.mrb[0].mxu0
    %v281 = vadd.f32 0.0, %v280
    %v282 = vpop.f32.mrb[0].mxu0
    %v283 = vadd.f32 0.0, %v282
    %284 = vdwg.mxu0
    %285 = vmatprep.subr.bf16.mxu0 %v186
    %286 = vmatpush1.bf16.msra.mxu0 %v185
    %287 = vmatprep.subr.bf16.mxu0 %v190
    %288 = vmatpush1.bf16.msra.mxu0 %v189
    %289 = vmatprep.subr.bf16.mxu0 0
    %290 = vmatpush1.bf16.msra.mxu0 0
    %291 = vmatprep.subr.bf16.mxu0 0
    %292 = vmatpush1.bf16.msra.mxu0 0
    %293 = vmatprep.subr.bf16.mxu0 0
    %294 = vmatpush1.bf16.msra.mxu0 0
    %295 = vmatprep.subr.bf16.mxu0 0
    %296 = vmatpush1.bf16.msra.mxu0 0
    %297 = vmatprep.subr.bf16.mxu0 0
    %298 = vmatpush1.bf16.msra.mxu0 0
    %299 = vmatprep.subr.bf16.mxu0 0
    %300 = vmatpush1.bf16.msra.mxu0 0
    %301 = vmatprep.subr.bf16.mxu0 0
    %302 = vmatpush1.bf16.msra.mxu0 0
    %303 = vmatprep.subr.bf16.mxu0 0
    %304 = vmatpush1.bf16.msra.mxu0 0
    %305 = vmatprep.subr.bf16.mxu0 0
    %306 = vmatpush1.bf16.msra.mxu0 0
    %307 = vmatprep.subr.bf16.mxu0 0
    %308 = vmatpush1.bf16.msra.mxu0 0
    %309 = vmatprep.subr.bf16.mxu0 0
    %310 = vmatpush1.bf16.msra.mxu0 0
    %311 = vmatprep.subr.bf16.mxu0 0
    %312 = vmatpush1.bf16.msra.mxu0 0
    %313 = vmatprep.subr.bf16.mxu0 0
    %314 = vmatpush1.bf16.msra.mxu0 0
    %315 = vmatprep.subr.bf16.mxu0 0
    %316 = vmatpush1.bf16.msra.mxu0 0
    %317 = vmatprep.mubr.bf16.mxu0 0
    %318 = vmatmul.mubr.bf16.gmra.mrb[0].mxu0 %v201
    %v319 = vpop.f32.mrb[0].mxu0
    %v320 = vadd.f32 0.0, %v319
    %v321 = vpop.f32.mrb[0].mxu0
    %v322 = vadd.f32 0.0, %v321
    %v323 = vpop.f32.mrb[0].mxu0
    %v324 = vadd.f32 0.0, %v323
    %v325 = vpop.f32.mrb[0].mxu0
    %v326 = vadd.f32 0.0, %v325
    %327 = vmatprep.mubr.bf16.mxu0 0
    %328 = vmatmul.mubr.bf16.gmra.mrb[0].mxu0 %v204
    %v329 = vpop.f32.mrb[0].mxu0
    %v330 = vadd.f32 0.0, %v329
    %v331 = vpop.f32.mrb[0].mxu0
    %v332 = vadd.f32 0.0, %v331
    %v333 = vpop.f32.mrb[0].mxu0
    %v334 = vadd.f32 0.0, %v333
    %v335 = vpop.f32.mrb[0].mxu0
    %v336 = vadd.f32 0.0, %v335
    %337 = vmatprep.mubr.bf16.mxu0 0
    %338 = vmatmul.mubr.bf16.gmra.mrb[0].mxu0 %v207
    %v339 = vpop.f32.mrb[0].mxu0
    %v340 = vadd.f32 0.0, %v339
    %v341 = vpop.f32.mrb[0].mxu0
    %v342 = vadd.f32 0.0, %v341
    %v343 = vpop.f32.mrb[0].mxu0
    %v344 = vadd.f32 0.0, %v343
    %v345 = vpop.f32.mrb[0].mxu0
    %v346 = vadd.f32 0.0, %v345
    %347 = vmatprep.mubr.bf16.mxu0 0
    %348 = vmatmul.mubr.bf16.gmra.mrb[0].mxu0 %v210
    %v349 = vpop.f32.mrb[0].mxu0
    %v350 = vadd.f32 0.0, %v349
    %v351 = vpop.f32.mrb[0].mxu0
    %v352 = vadd.f32 0.0, %v351
    %v353 = vpop.f32.mrb[0].mxu0
    %v354 = vadd.f32 0.0, %v353
    %v355 = vpop.f32.mrb[0].mxu0
    %v356 = vadd.f32 0.0, %v355
    %357 = vdwg.mxu0
    %v358 = vadd.f32 %v91, %v247
    %v359 = vadd.f32 %v92, %v249
    %v360 = vadd.f32 %v93, %v320
    %v361 = vadd.f32 %v94, %v322
    %v362 = vadd.f32 %v95, %v251
    %v363 = vadd.f32 %v96, %v253
    %v364 = vadd.f32 %v97, %v324
    %v365 = vadd.f32 %v98, %v326
    %v366 = vadd.f32 %v99, %v257
    %v367 = vadd.f32 %v100, %v259
    %v368 = vadd.f32 %v101, %v330
    %v369 = vadd.f32 %v102, %v332
    %v370 = vadd.f32 %v103, %v261
    %v371 = vadd.f32 %v104, %v263
    %v372 = vadd.f32 %v105, %v334
    %v373 = vadd.f32 %v106, %v336
    %v374 = vadd.f32 %v107, %v267
    %v375 = vadd.f32 %v108, %v269
    %v376 = vadd.f32 %v109, %v340
    %v377 = vadd.f32 %v110, %v342
    %v378 = vadd.f32 %v111, %v271
    %v379 = vadd.f32 %v112, %v273
    %v380 = vadd.f32 %v113, %v344
    %v381 = vadd.f32 %v114, %v346
    %v382 = vadd.f32 %v115, %v277
    %v383 = vadd.f32 %v116, %v279
    %v384 = vadd.f32 %v117, %v350
    %v385 = vadd.f32 %v118, %v352
    %v386 = vadd.f32 %v119, %v281
    %v387 = vadd.f32 %v120, %v283
    %v388 = vadd.f32 %v121, %v354
    %v389 = vadd.f32 %v122, %v356
    %390 = vst [vmem:[#allocation2] sm:$0xff] %v358
    %391 = vst [vmem:[#allocation2 + $0x8] sm:$0xff] %v359
    %392 = vst [vmem:[#allocation2 + $0x10] sm:$0xff] %v360
    %393 = vst [vmem:[#allocation2 + $0x18] sm:$0xff] %v361
    %394 = vst [vmem:[#allocation2 + $0x20] sm:$0xff] %v362
    %395 = vst [vmem:[#allocation2 + $0x28] sm:$0xff] %v363
    %396 = vst [vmem:[#allocation2 + $0x30] sm:$0xff] %v364
    %397 = vst [vmem:[#allocation2 + $0x38] sm:$0xff] %v365
    %398 = vst [vmem:[#allocation2 + $0x40] sm:$0xff] %v366
    %399 = vst [vmem:[#allocation2 + $0x48] sm:$0xff] %v367
    %400 = vst [vmem:[#allocation2 + $0x50] sm:$0xff] %v368
    %401 = vst [vmem:[#allocation2 + $0x58] sm:$0xff] %v369
    %402 = vst [vmem:[#allocation2 + $0x60] sm:$0xff] %v370
    %403 = vst [vmem:[#allocation2 + $0x68] sm:$0xff] %v371
    %404 = vst [vmem:[#allocation2 + $0x70] sm:$0xff] %v372
    %405 = vst [vmem:[#allocation2 + $0x78] sm:$0xff] %v373
    %406 = vst [vmem:[#allocation2 + $0x80] sm:$0xff] %v374
    %407 = vst [vmem:[#allocation2 + $0x88] sm:$0xff] %v375
    %408 = vst [vmem:[#allocation2 + $0x90] sm:$0xff] %v376
    %409 = vst [vmem:[#allocation2 + $0x98] sm:$0xff] %v377
    %410 = vst [vmem:[#allocation2 + $0xa0] sm:$0xff] %v378
    %411 = vst [vmem:[#allocation2 + $0xa8] sm:$0xff] %v379
    %412 = vst [vmem:[#allocation2 + $0xb0] sm:$0xff] %v380
    %413 = vst [vmem:[#allocation2 + $0xb8] sm:$0xff] %v381
    %414 = vst [vmem:[#allocation2 + $0xc0] sm:$0xff] %v382
    %415 = vst [vmem:[#allocation2 + $0xc8] sm:$0xff] %v383
    %416 = vst [vmem:[#allocation2 + $0xd0] sm:$0xff] %v384
    %417 = vst [vmem:[#allocation2 + $0xd8] sm:$0xff] %v385
    %418 = vst [vmem:[#allocation2 + $0xe0] sm:$0xff] %v386
    %419 = vst [vmem:[#allocation2 + $0xe8] sm:$0xff] %v387
    %420 = vst [vmem:[#allocation2 + $0xf0] sm:$0xff] %v388
    %421 = vst [vmem:[#allocation2 + $0xf8] sm:$0xff] %v389
    // Predicated region
    $region30: #{rnn_forward.5} parent=1 // pred_check
      %p422 = pneg %p55
    $region31: #{rnn_forward.5} parent=1 // pred_check_branch
      %424 = sbr.rel (%p422) target = $region33
    $region32: #{rnn_forward.5} parent=1 // pred_region
      %v425 = vld [vmem:[#allocation2] sm:$0xff]
      %v426 = vld [vmem:[#allocation2 + $0x8] sm:$0xff]
      %v427 = vld [vmem:[#allocation2 + $0x10] sm:$0xff]
      %v428 = vld [vmem:[#allocation2 + $0x18] sm:$0xff]
      %v429 = vld [vmem:[#allocation2 + $0x20] sm:$0xff]
      %v430 = vld [vmem:[#allocation2 + $0x28] sm:$0xff]
      %v431 = vld [vmem:[#allocation2 + $0x30] sm:$0xff]
      %v432 = vld [vmem:[#allocation2 + $0x38] sm:$0xff]
      %v433 = vld [vmem:[#allocation2 + $0x40] sm:$0xff]
      %v434 = vld [vmem:[#allocation2 + $0x48] sm:$0xff]
      %v435 = vld [vmem:[#allocation2 + $0x50] sm:$0xff]
      %v436 = vld [vmem:[#allocation2 + $0x58] sm:$0xff]
      %v437 = vld [vmem:[#allocation2 + $0x60] sm:$0xff]
      %v438 = vld [vmem:[#allocation2 + $0x68] sm:$0xff]
      %v439 = vld [vmem:[#allocation2 + $0x70] sm:$0xff]
      %v440 = vld [vmem:[#allocation2 + $0x78] sm:$0xff]
      %v441 = vld [vmem:[#allocation2 + $0x80] sm:$0xff]
      %v442 = vld [vmem:[#allocation2 + $0x88] sm:$0xff]
      %v443 = vld [vmem:[#allocation2 + $0x90] sm:$0xff]
      %v444 = vld [vmem:[#allocation2 + $0x98] sm:$0xff]
      %v445 = vld [vmem:[#allocation2 + $0xa0] sm:$0xff]
      %v446 = vld [vmem:[#allocation2 + $0xa8] sm:$0xff]
      %v447 = vld [vmem:[#allocation2 + $0xb0] sm:$0xff]
      %v448 = vld [vmem:[#allocation2 + $0xb8] sm:$0xff]
      %v449 = vld [vmem:[#allocation2 + $0xc0] sm:$0xff]
      %v450 = vld [vmem:[#allocation2 + $0xc8] sm:$0xff]
      %v451 = vld [vmem:[#allocation2 + $0xd0] sm:$0xff]
      %v452 = vld [vmem:[#allocation2 + $0xd8] sm:$0xff]
      %v453 = vld [vmem:[#allocation2 + $0xe0] sm:$0xff]
      %v454 = vld [vmem:[#allocation2 + $0xe8] sm:$0xff]
      %v455 = vld [vmem:[#allocation2 + $0xf0] sm:$0xff]
      %v456 = vld [vmem:[#allocation2 + $0xf8] sm:$0xff]
      %v457 = vld [vmem:[#allocation8] sm:$0xf]
      %v459 = vlaneseq
      %v460 = vshrl.u32 %v459, 7
      %v461 = vsub.s32 0, %v460
      %v462 = vrot.slane %v457, %v461
      %v463 = vlaneseq
      %v464 = vshrl.u32 %v463, 7
      %v465 = vsub.s32 1, %v464
      %v466 = vrot.slane %v457, %v465
      %v467 = vlaneseq
      %v468 = vshrl.u32 %v467, 7
      %v469 = vsub.s32 2, %v468
      %v470 = vrot.slane %v457, %v469
      %v471 = vlaneseq
      %v472 = vshrl.u32 %v471, 7
      %v473 = vsub.s32 3, %v472
      %v474 = vrot.slane %v457, %v473
      %v479 = vadd.f32 %v425, %v462
      %v480 = vadd.f32 %v426, %v466
      %v481 = vadd.f32 %v427, %v470
      %v482 = vadd.f32 %v428, %v474
      %v483 = vadd.f32 %v429, %v462
      %v484 = vadd.f32 %v430, %v466
      %v485 = vadd.f32 %v431, %v470
      %v486 = vadd.f32 %v432, %v474
      %v487 = vadd.f32 %v433, %v462
      %v488 = vadd.f32 %v434, %v466
      %v489 = vadd.f32 %v435, %v470
      %v490 = vadd.f32 %v436, %v474
      %v491 = vadd.f32 %v437, %v462
      %v492 = vadd.f32 %v438, %v466
      %v493 = vadd.f32 %v439, %v470
      %v494 = vadd.f32 %v440, %v474
      %v495 = vadd.f32 %v441, %v462
      %v496 = vadd.f32 %v442, %v466
      %v497 = vadd.f32 %v443, %v470
      %v498 = vadd.f32 %v444, %v474
      %v499 = vadd.f32 %v445, %v462
      %v500 = vadd.f32 %v446, %v466
      %v501 = vadd.f32 %v447, %v470
      %v502 = vadd.f32 %v448, %v474
      %v503 = vadd.f32 %v449, %v462
      %v504 = vadd.f32 %v450, %v466
      %v505 = vadd.f32 %v451, %v470
      %v506 = vadd.f32 %v452, %v474
      %v507 = vadd.f32 %v453, %v462
      %v508 = vadd.f32 %v454, %v466
      %v509 = vadd.f32 %v455, %v470
      %v510 = vadd.f32 %v456, %v474
      %v511 = vpack.c.bf16 %v483, %v479
      %v512 = vpack.c.bf16 %v484, %v480
      %v513 = vpack.c.bf16 %v485, %v481
      %v514 = vpack.c.bf16 %v486, %v482
      %v515 = vpack.c.bf16 %v491, %v487
      %v516 = vpack.c.bf16 %v492, %v488
      %v517 = vpack.c.bf16 %v493, %v489
      %v518 = vpack.c.bf16 %v494, %v490
      %v519 = vpack.c.bf16 %v499, %v495
      %v520 = vpack.c.bf16 %v500, %v496
      %v521 = vpack.c.bf16 %v501, %v497
      %v522 = vpack.c.bf16 %v502, %v498
      %v523 = vpack.c.bf16 %v507, %v503
      %v524 = vpack.c.bf16 %v508, %v504
      %v525 = vpack.c.bf16 %v509, %v505
      %v526 = vpack.c.bf16 %v510, %v506
      %v543 = vunpack.c.l.b16 %v511
      %v544 = vunpack.c.l.b16 %v512
      %v545 = vunpack.c.l.b16 %v513
      %v546 = vunpack.c.l.b16 %v514
      %v547 = vunpack.c.h.b16 %v511
      %v548 = vunpack.c.h.b16 %v512
      %v549 = vunpack.c.h.b16 %v513
      %v550 = vunpack.c.h.b16 %v514
      %v551 = vunpack.c.l.b16 %v515
      %v552 = vunpack.c.l.b16 %v516
      %v553 = vunpack.c.l.b16 %v517
      %v554 = vunpack.c.l.b16 %v518
      %v555 = vunpack.c.h.b16 %v515
      %v556 = vunpack.c.h.b16 %v516
      %v557 = vunpack.c.h.b16 %v517
      %v558 = vunpack.c.h.b16 %v518
      %v559 = vunpack.c.l.b16 %v519
      %v560 = vunpack.c.l.b16 %v520
      %v561 = vunpack.c.l.b16 %v521
      %v562 = vunpack.c.l.b16 %v522
      %v563 = vunpack.c.h.b16 %v519
      %v564 = vunpack.c.h.b16 %v520
      %v565 = vunpack.c.h.b16 %v521
      %v566 = vunpack.c.h.b16 %v522
      %v567 = vunpack.c.l.b16 %v523
      %v568 = vunpack.c.l.b16 %v524
      %v569 = vunpack.c.l.b16 %v525
      %v570 = vunpack.c.l.b16 %v526
      %v571 = vunpack.c.h.b16 %v523
      %v572 = vunpack.c.h.b16 %v524
      %v573 = vunpack.c.h.b16 %v525
      %v574 = vunpack.c.h.b16 %v526
      %v575 = vpack.c.b16 %v544, %v543
      %v576 = vpack.c.b16 %v546, %v545
      %v577 = vpack.c.b16 %v548, %v547
      %v578 = vpack.c.b16 %v550, %v549
      %v579 = vpack.c.b16 %v552, %v551
      %v580 = vpack.c.b16 %v554, %v553
      %v581 = vpack.c.b16 %v556, %v555
      %v582 = vpack.c.b16 %v558, %v557
      %v583 = vpack.c.b16 %v560, %v559
      %v584 = vpack.c.b16 %v562, %v561
      %v585 = vpack.c.b16 %v564, %v563
      %v586 = vpack.c.b16 %v566, %v565
      %v587 = vpack.c.b16 %v568, %v567
      %v588 = vpack.c.b16 %v570, %v569
      %v589 = vpack.c.b16 %v572, %v571
      %v590 = vpack.c.b16 %v574, %v573
      %607 = vst [vmem:[#allocation9] sm:$0xff] %v575
      %608 = vst [vmem:[#allocation9 + $0x8] sm:$0xff] %v576
      %609 = vst [vmem:[#allocation9 + $0x10] sm:$0xff] %v577
      %610 = vst [vmem:[#allocation9 + $0x18] sm:$0xff] %v578
      %611 = vst [vmem:[#allocation9 + $0x20] sm:$0xff] %v579
      %612 = vst [vmem:[#allocation9 + $0x28] sm:$0xff] %v580
      %613 = vst [vmem:[#allocation9 + $0x30] sm:$0xff] %v581
      %614 = vst [vmem:[#allocation9 + $0x38] sm:$0xff] %v582
      %615 = vst [vmem:[#allocation9 + $0x40] sm:$0xff] %v583
      %616 = vst [vmem:[#allocation9 + $0x48] sm:$0xff] %v584
      %617 = vst [vmem:[#allocation9 + $0x50] sm:$0xff] %v585
      %618 = vst [vmem:[#allocation9 + $0x58] sm:$0xff] %v586
      %619 = vst [vmem:[#allocation9 + $0x60] sm:$0xff] %v587
      %620 = vst [vmem:[#allocation9 + $0x68] sm:$0xff] %v588
      %621 = vst [vmem:[#allocation9 + $0x70] sm:$0xff] %v589
      %622 = vst [vmem:[#allocation9 + $0x78] sm:$0xff] %v590
    $region33: #{rnn_forward.5} parent=1 // pred_fallthru
      _
    // Predicated region
    $region34: #{rnn_forward.5} parent=1 // pred_check
      _
    $region35: #{rnn_forward.5} parent=1 // pred_check_branch
      %624 = sbr.rel (0) target = $region37
    $region36: #{rnn_forward.5} parent=1 // pred_region
      %s626 = ssub.s32 2048, 2048
      %627 = vsyncadd [#allocation5], %s626
      %s628 = sshll.u32 [#allocation9], 4
      %s629 = int_to_ptr.vmem [resolvable:$true] %s628
      %634 = dma.vmem_to_hbm [thread:$0]  %s629, 2048, %s3, [#allocation5], 256, 256, 16
    $region37: #{rnn_forward.5} parent=1 // pred_fallthru
      _
    // Predicated region
    $region38: #{rnn_forward.5} parent=1 // pred_check
      _
    $region39: #{rnn_forward.5} parent=1 // pred_check_branch
      %636 = sbr.rel (0) target = $region41
    $region40: #{rnn_forward.5} parent=1 // pred_region
      %637 = dma.done [#allocation5], 2048
    $region41: #{rnn_forward.5} parent=1 // pred_fallthru
      _
    %638 = vsyncpa [#allocation4], 1
    %639 = vsyncpa [#allocation7], 1
    %640 = vsyncpa [#allocation5], 1

// kernel: rnn_forward.6
$region0: #{rnn_forward.6}
  #allocation0 [shape = 'u32[]', space=smem, size = 0x4, offset = 0x4, fixed_abs, tag = 'smem constant byte address 0x4 - core index']
  #allocation1 [shape = 'u32[144,128]{1,0:T(1,128)}', space=vmem, size = 0x12000, scoped, tag = 'internal scratch']
  #allocation2 [shape = 'f32[8,128]{1,0:T(8,128)}', space=vmem, size = 0x1000, scoped, tag = 'scratch operand']
  #allocation3 [shape = 'f32[8,128]{1,0:T(8,128)}', space=vmem, size = 0x1000, scoped, tag = 'scratch operand']
  %s0 = inlined_call_operand.hbm [shape: bf16[8,8,512], index: 0, kind: input, shape index: {}]
  %s1 = inlined_call_operand.hbm [shape: f32[8,128], index: 1, kind: input, shape index: {}]
  %s2 = inlined_call_operand.hbm [shape: f32[8,128], index: 2, kind: input, shape index: {}]
  %s3 = inlined_call_operand.hbm [shape: bf16[128,512], index: 3, kind: input, shape index: {}]
  %s4 = inlined_call_operand.hbm [shape: bf16[8,8,128], index: 4, kind: output, shape index: {0}]
  %s5 = inlined_call_operand.hbm [shape: f32[8,128], index: 5, kind: output, shape index: {1}]
  %s6 = inlined_call_operand.hbm [shape: f32[8,128], index: 6, kind: output, shape index: {2}]
  %7 = xla_tuple %s4, %s5, %s6
  %s8 = sld [smem:[#allocation0]]
  $region66: #{rnn_forward.6} parent=0
    _
  %s10 = ssub.s32 1, %s8
  %s11 = scalar_select 0, %s10, %s8
  $region1: #{rnn_forward.6} parent=0
    #allocation4 [shape = 'u8[65536]{0}', space=vmem, size = 0x10000, scoped, tag = 'input window, operand 0, single buffered']
    #allocation5 [shape = 's32[1]{0}', space=sflag, size = 0x4, scoped, tag = 'scoped memory for rnn_forward.6']
    #allocation6 [shape = 's32[1]{0}', space=sflag, size = 0x4, scoped, tag = 'scoped memory for rnn_forward.6']
    #allocation7 [shape = 'u8[4096]{0}', space=vmem, size = 0x1000, scoped, tag = 'input window, operand 1, single buffered']
    #allocation8 [shape = 's32[1]{0}', space=sflag, size = 0x4, scoped, tag = 'scoped memory for rnn_forward.6']
    #allocation9 [shape = 'u8[4096]{0}', space=vmem, size = 0x1000, scoped, tag = 'input window, operand 2, single buffered']
    #allocation10 [shape = 'u8[131072]{0}', space=vmem, size = 0x20000, scoped, tag = 'input window, operand 3, single buffered']
    #allocation11 [shape = 's32[1]{0}', space=sflag, size = 0x4, scoped, tag = 'scoped memory for rnn_forward.6']
    #allocation12 [shape = 'u8[16384]{0}', space=vmem, size = 0x4000, scoped, tag = 'output window, operand 0, single buffered']
    #allocation13 [shape = 'u8[4096]{0}', space=vmem, size = 0x1000, scoped, tag = 'output window, operand 1, single buffered']
    #allocation14 [shape = 's32[1]{0}', space=sflag, size = 0x4, scoped, tag = 'scoped memory for rnn_forward.6']
    #allocation15 [shape = 'u8[4096]{0}', space=vmem, size = 0x1000, scoped, tag = 'output window, operand 2, single buffered']
    %12 = vsyncpa [#allocation5], 0
    %13 = vsyncpa [#allocation8], 0
    %14 = vsyncpa [#allocation11], 0
    %15 = vsyncpa [#allocation6], 0
    %16 = vsyncpa [#allocation14], 0
    // Predicated region
    $region2: #{rnn_forward.6} parent=1 // pred_check
      _
    $region3: #{rnn_forward.6} parent=1 // pred_check_branch
      %18 = sbr.rel (0) target = $region5
    $region4: #{rnn_forward.6} parent=1 // pred_region
      %s20 = ssub.s32 2048, 2048
      %21 = vsyncadd [#allocation5], %s20
      %s22 = sshll.u32 [#allocation4], 4
      %s23 = int_to_ptr.vmem [resolvable:$true] %s22
      %28 = dma.hbm_to_vmem [thread:$0]  %s0, 2048, %s23, [#allocation5], 256, 256, 16
    $region5: #{rnn_forward.6} parent=1 // pred_fallthru
      _
    // Predicated region
    $region6: #{rnn_forward.6} parent=1 // pred_check
      _
    $region7: #{rnn_forward.6} parent=1 // pred_check_branch
      %30 = sbr.rel (0) target = $region9
    $region8: #{rnn_forward.6} parent=1 // pred_region
      %s32 = ssub.s32 128, 128
      %33 = vsyncadd [#allocation8], %s32
      %s35 = sshll.u32 [#allocation7], 4
      %s36 = int_to_ptr.vmem [resolvable:$true] %s35
      %38 = dma.hbm_to_vmem [thread:$0]  %s1, 128, %s36, [#allocation8]
    $region9: #{rnn_forward.6} parent=1 // pred_fallthru
      _
    // Predicated region
    $region10: #{rnn_forward.6} parent=1 // pred_check
      _
    $region11: #{rnn_forward.6} parent=1 // pred_check_branch
      %40 = sbr.rel (0) target = $region13
    $region12: #{rnn_forward.6} parent=1 // pred_region
      %s42 = ssub.s32 128, 128
      %43 = vsyncadd [#allocation8], %s42
      %s45 = sshll.u32 [#allocation9], 4
      %s46 = int_to_ptr.vmem [resolvable:$true] %s45
      %48 = dma.hbm_to_vmem [thread:$0]  %s2, 128, %s46, [#allocation8]
    $region13: #{rnn_forward.6} parent=1 // pred_fallthru
      _
    // Predicated region
    $region14: #{rnn_forward.6} parent=1 // pred_check
      _
    $region15: #{rnn_forward.6} parent=1 // pred_check_branch
      %50 = sbr.rel (0) target = $region17
    $region16: #{rnn_forward.6} parent=1 // pred_region
      %s52 = ssub.s32 4096, 4096
      %53 = vsyncadd [#allocation11], %s52
      %s54 = sshll.u32 [#allocation10], 4
      %s55 = int_to_ptr.vmem [resolvable:$true] %s54
      %60 = dma.hbm_to_vmem [thread:$0]  %s3, 4096, %s55, [#allocation11], 256, 256, 16
    $region17: #{rnn_forward.6} parent=1 // pred_fallthru
      _
    // Predicated region
    $region18: #{rnn_forward.6} parent=1 // pred_check
      _
    $region19: #{rnn_forward.6} parent=1 // pred_check_branch
      %62 = sbr.rel (0) target = $region21
    $region20: #{rnn_forward.6} parent=1 // pred_region
      %63 = dma.done [#allocation5], 2048
    $region21: #{rnn_forward.6} parent=1 // pred_fallthru
      _
    // Predicated region
    $region22: #{rnn_forward.6} parent=1 // pred_check
      _
    $region23: #{rnn_forward.6} parent=1 // pred_check_branch
      %65 = sbr.rel (0) target = $region25
    $region24: #{rnn_forward.6} parent=1 // pred_region
      %66 = dma.done [#allocation8], 128
    $region25: #{rnn_forward.6} parent=1 // pred_fallthru
      _
    // Predicated region
    $region26: #{rnn_forward.6} parent=1 // pred_check
      _
    $region27: #{rnn_forward.6} parent=1 // pred_check_branch
      %68 = sbr.rel (0) target = $region29
    $region28: #{rnn_forward.6} parent=1 // pred_region
      %69 = dma.done [#allocation8], 128
    $region29: #{rnn_forward.6} parent=1 // pred_fallthru
      _
    // Predicated region
    $region30: #{rnn_forward.6} parent=1 // pred_check
      _
    $region31: #{rnn_forward.6} parent=1 // pred_check_branch
      %71 = sbr.rel (0) target = $region33
    $region32: #{rnn_forward.6} parent=1 // pred_region
      %72 = dma.done [#allocation11], 4096
    $region33: #{rnn_forward.6} parent=1 // pred_fallthru
      _
    %p74 = scmp.eq.s32.totalorder 0, 0
    // Predicated region
    $region34: #{rnn_forward.6} parent=1 // pred_check
      %p75 = pneg %p74
    $region35: #{rnn_forward.6} parent=1 // pred_check_branch
      %77 = sbr.rel (%p75) target = $region37
    $region36: #{rnn_forward.6} parent=1 // pred_region
      %v78 = vld [vmem:[#allocation7] sm:$0xff]
      %79 = vst [vmem:[#allocation2] sm:$0xff] %v78
      %v80 = vld [vmem:[#allocation9] sm:$0xff]
      %81 = vst [vmem:[#allocation3] sm:$0xff] %v80
    $region37: #{rnn_forward.6} parent=1 // pred_fallthru
      _
    %v82 = vld [vmem:[#allocation2] sm:$0xff]
    %v83 = vld [vmem:[#allocation3] sm:$0xff]
    %v84 = vld [vmem:[#allocation4] sm:$0xff]
    %v85 = vld [vmem:[#allocation4 + $0x8] sm:$0xff]
    %v86 = vunpack.c.l.bf16 %v84
    %v87 = vunpack.c.h.bf16 %v84
    %v88 = vunpack.c.l.bf16 %v85
    %v89 = vunpack.c.h.bf16 %v85
    %v90 = vpack.c.bf16 %v82, %v82
    %v91 = vld [vmem:[#allocation10] sm:$0xff]
    %v92 = vld [vmem:[#allocation10 + $0x8] sm:$0xff]
    %v93 = vld [vmem:[#allocation10 + $0x10] sm:$0xff]
    %v94 = vld [vmem:[#allocation10 + $0x18] sm:$0xff]
    %v95 = vld [vmem:[#allocation10 + $0x20] sm:$0xff]
    %v96 = vld [vmem:[#allocation10 + $0x28] sm:$0xff]
    %v97 = vld [vmem:[#allocation10 + $0x30] sm:$0xff]
    %v98 = vld [vmem:[#allocation10 + $0x38] sm:$0xff]
    %v99 = vld [vmem:[#allocation10 + $0x40] sm:$0xff]
    %v100 = vld [vmem:[#allocation10 + $0x48] sm:$0xff]
    %v101 = vld [vmem:[#allocation10 + $0x50] sm:$0xff]
    %v102 = vld [vmem:[#allocation10 + $0x58] sm:$0xff]
    %v103 = vld [vmem:[#allocation10 + $0x60] sm:$0xff]
    %v104 = vld [vmem:[#allocation10 + $0x68] sm:$0xff]
    %v105 = vld [vmem:[#allocation10 + $0x70] sm:$0xff]
    %v106 = vld [vmem:[#allocation10 + $0x78] sm:$0xff]
    %v107 = vld [vmem:[#allocation10 + $0x80] sm:$0xff]
    %v108 = vld [vmem:[#allocation10 + $0x88] sm:$0xff]
    %v109 = vld [vmem:[#allocation10 + $0x90] sm:$0xff]
    %v110 = vld [vmem:[#allocation10 + $0x98] sm:$0xff]
    %v111 = vld [vmem:[#allocation10 + $0xa0] sm:$0xff]
    %v112 = vld [vmem:[#allocation10 + $0xa8] sm:$0xff]
    %v113 = vld [vmem:[#allocation10 + $0xb0] sm:$0xff]
    %v114 = vld [vmem:[#allocation10 + $0xb8] sm:$0xff]
    %v115 = vld [vmem:[#allocation10 + $0xc0] sm:$0xff]
    %v116 = vld [vmem:[#allocation10 + $0xc8] sm:$0xff]
    %v117 = vld [vmem:[#allocation10 + $0xd0] sm:$0xff]
    %v118 = vld [vmem:[#allocation10 + $0xd8] sm:$0xff]
    %v119 = vld [vmem:[#allocation10 + $0xe0] sm:$0xff]
    %v120 = vld [vmem:[#allocation10 + $0xe8] sm:$0xff]
    %v121 = vld [vmem:[#allocation10 + $0xf0] sm:$0xff]
    %v122 = vld [vmem:[#allocation10 + $0xf8] sm:$0xff]
    %v155 = vunpack.c.l.b16 %v91
    %v156 = vunpack.c.h.b16 %v91
    %v157 = vunpack.c.l.b16 %v92
    %v158 = vunpack.c.h.b16 %v92
    %v159 = vunpack.c.l.b16 %v93
    %v160 = vunpack.c.h.b16 %v93
    %v161 = vunpack.c.l.b16 %v94
    %v162 = vunpack.c.h.b16 %v94
    %v163 = vunpack.c.l.b16 %v95
    %v164 = vunpack.c.h.b16 %v95
    %v165 = vunpack.c.l.b16 %v96
    %v166 = vunpack.c.h.b16 %v96
    %v167 = vunpack.c.l.b16 %v97
    %v168 = vunpack.c.h.b16 %v97
    %v169 = vunpack.c.l.b16 %v98
    %v170 = vunpack.c.h.b16 %v98
    %v171 = vunpack.c.l.b16 %v99
    %v172 = vunpack.c.h.b16 %v99
    %v173 = vunpack.c.l.b16 %v100
    %v174 = vunpack.c.h.b16 %v100
    %v175 = vunpack.c.l.b16 %v101
    %v176 = vunpack.c.h.b16 %v101
    %v177 = vunpack.c.l.b16 %v102
    %v178 = vunpack.c.h.b16 %v102
    %v179 = vunpack.c.l.b16 %v103
    %v180 = vunpack.c.h.b16 %v103
    %v181 = vunpack.c.l.b16 %v104
    %v182 = vunpack.c.h.b16 %v104
    %v183 = vunpack.c.l.b16 %v105
    %v184 = vunpack.c.h.b16 %v105
    %v185 = vunpack.c.l.b16 %v106
    %v186 = vunpack.c.h.b16 %v106
    %v187 = vunpack.c.l.b16 %v107
    %v188 = vunpack.c.h.b16 %v107
    %v189 = vunpack.c.l.b16 %v108
    %v190 = vunpack.c.h.b16 %v108
    %v191 = vunpack.c.l.b16 %v109
    %v192 = vunpack.c.h.b16 %v109
    %v193 = vunpack.c.l.b16 %v110
    %v194 = vunpack.c.h.b16 %v110
    %v195 = vunpack.c.l.b16 %v111
    %v196 = vunpack.c.h.b16 %v111
    %v197 = vunpack.c.l.b16 %v112
    %v198 = vunpack.c.h.b16 %v112
    %v199 = vunpack.c.l.b16 %v113
    %v200 = vunpack.c.h.b16 %v113
    %v201 = vunpack.c.l.b16 %v114
    %v202 = vunpack.c.h.b16 %v114
    %v203 = vunpack.c.l.b16 %v115
    %v204 = vunpack.c.h.b16 %v115
    %v205 = vunpack.c.l.b16 %v116
    %v206 = vunpack.c.h.b16 %v116
    %v207 = vunpack.c.l.b16 %v117
    %v208 = vunpack.c.h.b16 %v117
    %v209 = vunpack.c.l.b16 %v118
    %v210 = vunpack.c.h.b16 %v118
    %v211 = vunpack.c.l.b16 %v119
    %v212 = vunpack.c.h.b16 %v119
    %v213 = vunpack.c.l.b16 %v120
    %v214 = vunpack.c.h.b16 %v120
    %v215 = vunpack.c.l.b16 %v121
    %v216 = vunpack.c.h.b16 %v121
    %v217 = vunpack.c.l.b16 %v122
    %v218 = vunpack.c.h.b16 %v122
    %v219 = vpack.c.b16 %v159, %v155
    %v220 = vpack.c.b16 %v160, %v156
    %v221 = vpack.c.b16 %v161, %v157
    %v222 = vpack.c.b16 %v162, %v158
    %v223 = vpack.c.b16 %v167, %v163
    %v224 = vpack.c.b16 %v168, %v164
    %v225 = vpack.c.b16 %v169, %v165
    %v226 = vpack.c.b16 %v170, %v166
    %v227 = vpack.c.b16 %v175, %v171
    %v228 = vpack.c.b16 %v176, %v172
    %v229 = vpack.c.b16 %v177, %v173
    %v230 = vpack.c.b16 %v178, %v174
    %v231 = vpack.c.b16 %v183, %v179
    %v232 = vpack.c.b16 %v184, %v180
    %v233 = vpack.c.b16 %v185, %v181
    %v234 = vpack.c.b16 %v186, %v182
    %v235 = vpack.c.b16 %v191, %v187
    %v236 = vpack.c.b16 %v192, %v188
    %v237 = vpack.c.b16 %v193, %v189
    %v238 = vpack.c.b16 %v194, %v190
    %v239 = vpack.c.b16 %v199, %v195
    %v240 = vpack.c.b16 %v200, %v196
    %v241 = vpack.c.b16 %v201, %v197
    %v242 = vpack.c.b16 %v202, %v198
    %v243 = vpack.c.b16 %v207, %v203
    %v244 = vpack.c.b16 %v208, %v204
    %v245 = vpack.c.b16 %v209, %v205
    %v246 = vpack.c.b16 %v210, %v206
    %v247 = vpack.c.b16 %v215, %v211
    %v248 = vpack.c.b16 %v216, %v212
    %v249 = vpack.c.b16 %v217, %v213
    %v250 = vpack.c.b16 %v218, %v214
    %283 = vmatprep.subr.bf16.mxu0 %v220
    %284 = vmatpush1.bf16.msra.mxu0 %v219
    %285 = vmatprep.subr.bf16.mxu0 %v224
    %286 = vmatpush1.bf16.msra.mxu0 %v223
    %287 = vmatprep.subr.bf16.mxu0 %v228
    %288 = vmatpush1.bf16.msra.mxu0 %v227
    %289 = vmatprep.subr.bf16.mxu0 %v232
    %290 = vmatpush1.bf16.msra.mxu0 %v231
    %291 = vmatprep.subr.bf16.mxu0 %v236
    %292 = vmatpush1.bf16.msra.mxu0 %v235
    %293 = vmatprep.subr.bf16.mxu0 %v240
    %294 = vmatpush1.bf16.msra.mxu0 %v239
    %295 = vmatprep.subr.bf16.mxu0 %v244
    %296 = vmatpush1.bf16.msra.mxu0 %v243
    %297 = vmatprep.subr.bf16.mxu0 %v248
    %298 = vmatpush1.bf16.msra.mxu0 %v247
    %299 = vmatprep.subr.bf16.mxu0 0
    %300 = vmatpush1.bf16.msra.mxu0 0
    %301 = vmatprep.subr.bf16.mxu0 0
    %302 = vmatpush1.bf16.msra.mxu0 0
    %303 = vmatprep.subr.bf16.mxu0 0
    %304 = vmatpush1.bf16.msra.mxu0 0
    %305 = vmatprep.subr.bf16.mxu0 0
    %306 = vmatpush1.bf16.msra.mxu0 0
    %307 = vmatprep.subr.bf16.mxu0 0
    %308 = vmatpush1.bf16.msra.mxu0 0
    %309 = vmatprep.subr.bf16.mxu0 0
    %310 = vmatpush1.bf16.msra.mxu0 0
    %311 = vmatprep.subr.bf16.mxu0 0
    %312 = vmatpush1.bf16.msra.mxu0 0
    %313 = vmatprep.subr.bf16.mxu0 0
    %314 = vmatpush1.bf16.msra.mxu0 0
    %315 = vmatprep.mubr.bf16.mxu0 0
    %316 = vmatmul.mubr.bf16.gmra.mrb[0].mxu0 %v90
    %v317 = vpop.f32.mrb[0].mxu0
    %v318 = vadd.f32 0.0, %v317
    %v319 = vpop.f32.mrb[0].mxu0
    %v320 = vadd.f32 0.0, %v319
    %v321 = vpop.f32.mrb[0].mxu0
    %v322 = vpop.f32.mrb[0].mxu0
    %323 = vdwg.mxu0
    %324 = vmatprep.subr.bf16.mxu0 %v222
    %325 = vmatpush1.bf16.msra.mxu0 %v221
    %326 = vmatprep.subr.bf16.mxu0 %v226
    %327 = vmatpush1.bf16.msra.mxu0 %v225
    %328 = vmatprep.subr.bf16.mxu0 %v230
    %329 = vmatpush1.bf16.msra.mxu0 %v229
    %330 = vmatprep.subr.bf16.mxu0 %v234
    %331 = vmatpush1.bf16.msra.mxu0 %v233
    %332 = vmatprep.subr.bf16.mxu0 %v238
    %333 = vmatpush1.bf16.msra.mxu0 %v237
    %334 = vmatprep.subr.bf16.mxu0 %v242
    %335 = vmatpush1.bf16.msra.mxu0 %v241
    %336 = vmatprep.subr.bf16.mxu0 %v246
    %337 = vmatpush1.bf16.msra.mxu0 %v245
    %338 = vmatprep.subr.bf16.mxu0 %v250
    %339 = vmatpush1.bf16.msra.mxu0 %v249
    %340 = vmatprep.subr.bf16.mxu0 0
    %341 = vmatpush1.bf16.msra.mxu0 0
    %342 = vmatprep.subr.bf16.mxu0 0
    %343 = vmatpush1.bf16.msra.mxu0 0
    %344 = vmatprep.subr.bf16.mxu0 0
    %345 = vmatpush1.bf16.msra.mxu0 0
    %346 = vmatprep.subr.bf16.mxu0 0
    %347 = vmatpush1.bf16.msra.mxu0 0
    %348 = vmatprep.subr.bf16.mxu0 0
    %349 = vmatpush1.bf16.msra.mxu0 0
    %350 = vmatprep.subr.bf16.mxu0 0
    %351 = vmatpush1.bf16.msra.mxu0 0
    %352 = vmatprep.subr.bf16.mxu0 0
    %353 = vmatpush1.bf16.msra.mxu0 0
    %354 = vmatprep.subr.bf16.mxu0 0
    %355 = vmatpush1.bf16.msra.mxu0 0
    %356 = vmatprep.mubr.bf16.mxu0 0
    %357 = vmatmul.mubr.bf16.gmra.mrb[0].mxu0 %v90
    %v358 = vpop.f32.mrb[0].mxu0
    %v359 = vadd.f32 0.0, %v358
    %v360 = vpop.f32.mrb[0].mxu0
    %v361 = vadd.f32 0.0, %v360
    %v362 = vpop.f32.mrb[0].mxu0
    %v363 = vpop.f32.mrb[0].mxu0
    %364 = vdwg.mxu0
    %v365 = vadd.f32 %v86, %v318
    %v366 = vadd.f32 %v87, %v320
    %v367 = vadd.f32 %v88, %v359
    %v368 = vadd.f32 %v89, %v361
    %v369 = vxor.u32 %v365, 2147483648
    %v370 = vmul.f32 %v369, 1.442695
    %v371 = vpow.pop %v370
    %v372 = vadd.f32 %v371, 1.0
    %v373 = vrcp.pop %v372
    %v374 = vmul.f32 1.0, %v373
    %v375 = vxor.u32 %v366, 2147483648
    %v376 = vmul.f32 %v375, 1.442695
    %v377 = vpow.pop %v376
    %v378 = vadd.f32 %v377, 1.0
    %v379 = vrcp.pop %v378
    %v380 = vmul.f32 1.0, %v379
    %v381 = vtanh.pop %v367
    %v382 = vxor.u32 %v368, 2147483648
    %v383 = vmul.f32 %v382, 1.442695
    %v384 = vpow.pop %v383
    %v385 = vadd.f32 %v384, 1.0
    %v386 = vrcp.pop %v385
    %v387 = vmul.f32 1.0, %v386
    %v388 = vmul.f32 %v380, %v83
    %v389 = vmul.f32 %v374, %v381
    %v390 = vadd.f32 %v388, %v389
    %v391 = vtanh.pop %v390
    %v392 = vmul.f32 %v387, %v391
    %393 = vst [vmem:[#allocation2] sm:$0xff] %v392
    %394 = vst [vmem:[#allocation3] sm:$0xff] %v390
    %v395 = vpack.c.bf16 %v392, %v392
    %396 = vst [vmem:[#allocation12] sm:$0xf] %v395
    %v397 = vld [vmem:[#allocation2] sm:$0xff]
    %v398 = vld [vmem:[#allocation3] sm:$0xff]
    %s399 = scalar_lea.vmem [#allocation4], 16
    %v400 = vld [vmem:[%s399] sm:$0xff]
    %v401 = vld [vmem:[%s399 + $0x8] sm:$0xff]
    %v402 = vunpack.c.l.bf16 %v400
    %v403 = vunpack.c.h.bf16 %v400
    %v404 = vunpack.c.l.bf16 %v401
    %v405 = vunpack.c.h.bf16 %v401
    %v406 = vpack.c.bf16 %v397, %v397
    %v407 = vld [vmem:[#allocation10] sm:$0xff]
    %v408 = vld [vmem:[#allocation10 + $0x8] sm:$0xff]
    %v409 = vld [vmem:[#allocation10 + $0x10] sm:$0xff]
    %v410 = vld [vmem:[#allocation10 + $0x18] sm:$0xff]
    %v411 = vld [vmem:[#allocation10 + $0x20] sm:$0xff]
    %v412 = vld [vmem:[#allocation10 + $0x28] sm:$0xff]
    %v413 = vld [vmem:[#allocation10 + $0x30] sm:$0xff]
    %v414 = vld [vmem:[#allocation10 + $0x38] sm:$0xff]
    %v415 = vld [vmem:[#allocation10 + $0x40] sm:$0xff]
    %v416 = vld [vmem:[#allocation10 + $0x48] sm:$0xff]
    %v417 = vld [vmem:[#allocation10 + $0x50] sm:$0xff]
    %v418 = vld [vmem:[#allocation10 + $0x58] sm:$0xff]
    %v419 = vld [vmem:[#allocation10 + $0x60] sm:$0xff]
    %v420 = vld [vmem:[#allocation10 + $0x68] sm:$0xff]
    %v421 = vld [vmem:[#allocation10 + $0x70] sm:$0xff]
    %v422 = vld [vmem:[#allocation10 + $0x78] sm:$0xff]
    %v423 = vld [vmem:[#allocation10 + $0x80] sm:$0xff]
    %v424 = vld [vmem:[#allocation10 + $0x88] sm:$0xff]
    %v425 = vld [vmem:[#allocation10 + $0x90] sm:$0xff]
    %v426 = vld [vmem:[#allocation10 + $0x98] sm:$0xff]
    %v427 = vld [vmem:[#allocation10 + $0xa0] sm:$0xff]
    %v428 = vld [vmem:[#allocation10 + $0xa8] sm:$0xff]
    %v429 = vld [vmem:[#allocation10 + $0xb0] sm:$0xff]
    %v430 = vld [vmem:[#allocation10 + $0xb8] sm:$0xff]
    %v431 = vld [vmem:[#allocation10 + $0xc0] sm:$0xff]
    %v432 = vld [vmem:[#allocation10 + $0xc8] sm:$0xff]
    %v433 = vld [vmem:[#allocation10 + $0xd0] sm:$0xff]
    %v434 = vld [vmem:[#allocation10 + $0xd8] sm:$0xff]
    %v435 = vld [vmem:[#allocation10 + $0xe0] sm:$0xff]
    %v436 = vld [vmem:[#allocation10 + $0xe8] sm:$0xff]
    %v437 = vld [vmem:[#allocation10 + $0xf0] sm:$0xff]
    %v438 = vld [vmem:[#allocation10 + $0xf8] sm:$0xff]
    %v471 = vunpack.c.l.b16 %v407
    %v472 = vunpack.c.h.b16 %v407
    %v473 = vunpack.c.l.b16 %v408
    %v474 = vunpack.c.h.b16 %v408
    %v475 = vunpack.c.l.b16 %v409
    %v476 = vunpack.c.h.b16 %v409
    %v477 = vunpack.c.l.b16 %v410
    %v478 = vunpack.c.h.b16 %v410
    %v479 = vunpack.c.l.b16 %v411
    %v480 = vunpack.c.h.b16 %v411
    %v481 = vunpack.c.l.b16 %v412
    %v482 = vunpack.c.h.b16 %v412
    %v483 = vunpack.c.l.b16 %v413
    %v484 = vunpack.c.h.b16 %v413
    %v485 = vunpack.c.l.b16 %v414
    %v486 = vunpack.c.h.b16 %v414
    %v487 = vunpack.c.l.b16 %v415
    %v488 = vunpack.c.h.b16 %v415
    %v489 = vunpack.c.l.b16 %v416
    %v490 = vunpack.c.h.b16 %v416
    %v491 = vunpack.c.l.b16 %v417
    %v492 = vunpack.c.h.b16 %v417
    %v493 = vunpack.c.l.b16 %v418
    %v494 = vunpack.c.h.b16 %v418
    %v495 = vunpack.c.l.b16 %v419
    %v496 = vunpack.c.h.b16 %v419
    %v497 = vunpack.c.l.b16 %v420
    %v498 = vunpack.c.h.b16 %v420
    %v499 = vunpack.c.l.b16 %v421
    %v500 = vunpack.c.h.b16 %v421
    %v501 = vunpack.c.l.b16 %v422
    %v502 = vunpack.c.h.b16 %v422
    %v503 = vunpack.c.l.b16 %v423
    %v504 = vunpack.c.h.b16 %v423
    %v505 = vunpack.c.l.b16 %v424
    %v506 = vunpack.c.h.b16 %v424
    %v507 = vunpack.c.l.b16 %v425
    %v508 = vunpack.c.h.b16 %v425
    %v509 = vunpack.c.l.b16 %v426
    %v510 = vunpack.c.h.b16 %v426
    %v511 = vunpack.c.l.b16 %v427
    %v512 = vunpack.c.h.b16 %v427
    %v513 = vunpack.c.l.b16 %v428
    %v514 = vunpack.c.h.b16 %v428
    %v515 = vunpack.c.l.b16 %v429
    %v516 = vunpack.c.h.b16 %v429
    %v517 = vunpack.c.l.b16 %v430
    %v518 = vunpack.c.h.b16 %v430
    %v519 = vunpack.c.l.b16 %v431
    %v520 = vunpack.c.h.b16 %v431
    %v521 = vunpack.c.l.b16 %v432
    %v522 = vunpack.c.h.b16 %v432
    %v523 = vunpack.c.l.b16 %v433
    %v524 = vunpack.c.h.b16 %v433
    %v525 = vunpack.c.l.b16 %v434
    %v526 = vunpack.c.h.b16 %v434
    %v527 = vunpack.c.l.b16 %v435
    %v528 = vunpack.c.h.b16 %v435
    %v529 = vunpack.c.l.b16 %v436
    %v530 = vunpack.c.h.b16 %v436
    %v531 = vunpack.c.l.b16 %v437
    %v532 = vunpack.c.h.b16 %v437
    %v533 = vunpack.c.l.b16 %v438
    %v534 = vunpack.c.h.b16 %v438
    %v535 = vpack.c.b16 %v475, %v471
    %v536 = vpack.c.b16 %v476, %v472
    %v537 = vpack.c.b16 %v477, %v473
    %v538 = vpack.c.b16 %v478, %v474
    %v539 = vpack.c.b16 %v483, %v479
    %v540 = vpack.c.b16 %v484, %v480
    %v541 = vpack.c.b16 %v485, %v481
    %v542 = vpack.c.b16 %v486, %v482
    %v543 = vpack.c.b16 %v491, %v487
    %v544 = vpack.c.b16 %v492, %v488
    %v545 = vpack.c.b16 %v493, %v489
    %v546 = vpack.c.b16 %v494, %v490
    %v547 = vpack.c.b16 %v499, %v495
    %v548 = vpack.c.b16 %v500, %v496
    %v549 = vpack.c.b16 %v501, %v497
    %v550 = vpack.c.b16 %v502, %v498
    %v551 = vpack.c.b16 %v507, %v503
    %v552 = vpack.c.b16 %v508, %v504
    %v553 = vpack.c.b16 %v509, %v505
    %v554 = vpack.c.b16 %v510, %v506
    %v555 = vpack.c.b16 %v515, %v511
    %v556 = vpack.c.b16 %v516, %v512
    %v557 = vpack.c.b16 %v517, %v513
    %v558 = vpack.c.b16 %v518, %v514
    %v559 = vpack.c.b16 %v523, %v519
    %v560 = vpack.c.b16 %v524, %v520
    %v561 = vpack.c.b16 %v525, %v521
    %v562 = vpack.c.b16 %v526, %v522
    %v563 = vpack.c.b16 %v531, %v527
    %v564 = vpack.c.b16 %v532, %v528
    %v565 = vpack.c.b16 %v533, %v529
    %v566 = vpack.c.b16 %v534, %v530
    %599 = vmatprep.subr.bf16.mxu0 %v536
    %600 = vmatpush1.bf16.msra.mxu0 %v535
    %601 = vmatprep.subr.bf16.mxu0 %v540
    %602 = vmatpush1.bf16.msra.mxu0 %v539
    %603 = vmatprep.subr.bf16.mxu0 %v544
    %604 = vmatpush1.bf16.msra.mxu0 %v543
    %605 = vmatprep.subr.bf16.mxu0 %v548
    %606 = vmatpush1.bf16.msra.mxu0 %v547
    %607 = vmatprep.subr.bf16.mxu0 %v552
    %608 = vmatpush1.bf16.msra.mxu0 %v551
    %609 = vmatprep.subr.bf16.mxu0 %v556
    %610 = vmatpush1.bf16.msra.mxu0 %v555
    %611 = vmatprep.subr.bf16.mxu0 %v560
    %612 = vmatpush1.bf16.msra.mxu0 %v559
    %613 = vmatprep.subr.bf16.mxu0 %v564
    %614 = vmatpush1.bf16.msra.mxu0 %v563
    %615 = vmatprep.subr.bf16.mxu0 0
    %616 = vmatpush1.bf16.msra.mxu0 0
    %617 = vmatprep.subr.bf16.mxu0 0
    %618 = vmatpush1.bf16.msra.mxu0 0
    %619 = vmatprep.subr.bf16.mxu0 0
    %620 = vmatpush1.bf16.msra.mxu0 0
    %621 = vmatprep.subr.bf16.mxu0 0
    %622 = vmatpush1.bf16.msra.mxu0 0
    %623 = vmatprep.subr.bf16.mxu0 0
    %624 = vmatpush1.bf16.msra.mxu0 0
    %625 = vmatprep.subr.bf16.mxu0 0
    %626 = vmatpush1.bf16.msra.mxu0 0
    %627 = vmatprep.subr.bf16.mxu0 0
    %628 = vmatpush1.bf16.msra.mxu0 0
    %629 = vmatprep.subr.bf16.mxu0 0
    %630 = vmatpush1.bf16.msra.mxu0 0
    %631 = vmatprep.mubr.bf16.mxu0 0
    %632 = vmatmul.mubr.bf16.gmra.mrb[0].mxu0 %v406
    %v633 = vpop.f32.mrb[0].mxu0
    %v634 = vadd.f32 0.0, %v633
    %v635 = vpop.f32.mrb[0].mxu0
    %v636 = vadd.f32 0.0, %v635
    %v637 = vpop.f32.mrb[0].mxu0
    %v638 = vpop.f32.mrb[0].mxu0
    %639 = vdwg.mxu0
    %640 = vmatprep.subr.bf16.mxu0 %v538
    %641 = vmatpush1.bf16.msra.mxu0 %v537
    %642 = vmatprep.subr.bf16.mxu0 %v542
    %643 = vmatpush1.bf16.msra.mxu0 %v541
    %644 = vmatprep.subr.bf16.mxu0 %v546
    %645 = vmatpush1.bf16.msra.mxu0 %v545
    %646 = vmatprep.subr.bf16.mxu0 %v550
    %647 = vmatpush1.bf16.msra.mxu0 %v549
    %648 = vmatprep.subr.bf16.mxu0 %v554
    %649 = vmatpush1.bf16.msra.mxu0 %v553
    %650 = vmatprep.subr.bf16.mxu0 %v558
    %651 = vmatpush1.bf16.msra.mxu0 %v557
    %652 = vmatprep.subr.bf16.mxu0 %v562
    %653 = vmatpush1.bf16.msra.mxu0 %v561
    %654 = vmatprep.subr.bf16.mxu0 %v566
    %655 = vmatpush1.bf16.msra.mxu0 %v565
    %656 = vmatprep.subr.bf16.mxu0 0
    %657 = vmatpush1.bf16.msra.mxu0 0
    %658 = vmatprep.subr.bf16.mxu0 0
    %659 = vmatpush1.bf16.msra.mxu0 0
    %660 = vmatprep.subr.bf16.mxu0 0
    %661 = vmatpush1.bf16.msra.mxu0 0
    %662 = vmatprep.subr.bf16.mxu0 0
    %663 = vmatpush1.bf16.msra.mxu0 0
    %664 = vmatprep.subr.bf16.mxu0 0
    %665 = vmatpush1.bf16.msra.mxu0 0
    %666 = vmatprep.subr.bf16.mxu0 0
    %667 = vmatpush1.bf16.msra.mxu0 0
    %668 = vmatprep.subr.bf16.mxu0 0
    %669 = vmatpush1.bf16.msra.mxu0 0
    %670 = vmatprep.subr.bf16.mxu0 0
    %671 = vmatpush1.bf16.msra.mxu0 0
    %672 = vmatprep.mubr.bf16.mxu0 0
    %673 = vmatmul.mubr.bf16.gmra.mrb[0].mxu0 %v406
    %v674 = vpop.f32.mrb[0].mxu0
    %v675 = vadd.f32 0.0, %v674
    %v676 = vpop.f32.mrb[0].mxu0
    %v677 = vadd.f32 0.0, %v676
    %v678 = vpop.f32.mrb[0].mxu0
    %v679 = vpop.f32.mrb[0].mxu0
    %680 = vdwg.mxu0
    %v681 = vadd.f32 %v402, %v634
    %v682 = vadd.f32 %v403, %v636
    %v683 = vadd.f32 %v404, %v675
    %v684 = vadd.f32 %v405, %v677
    %v685 = vxor.u32 %v681, 2147483648
    %v686 = vmul.f32 %v685, 1.442695
    %v687 = vpow.pop %v686
    %v688 = vadd.f32 %v687, 1.0
    %v689 = vrcp.pop %v688
    %v690 = vmul.f32 1.0, %v689
    %v691 = vxor.u32 %v682, 2147483648
    %v692 = vmul.f32 %v691, 1.442695
    %v693 = vpow.pop %v692
    %v694 = vadd.f32 %v693, 1.0
    %v695 = vrcp.pop %v694
    %v696 = vmul.f32 1.0, %v695
    %v697 = vtanh.pop %v683
    %v698 = vxor.u32 %v684, 2147483648
    %v699 = vmul.f32 %v698, 1.442695
    %v700 = vpow.pop %v699
    %v701 = vadd.f32 %v700, 1.0
    %v702 = vrcp.pop %v701
    %v703 = vmul.f32 1.0, %v702
    %v704 = vmul.f32 %v696, %v398
    %v705 = vmul.f32 %v690, %v697
    %v706 = vadd.f32 %v704, %v705
    %v707 = vtanh.pop %v706
    %v708 = vmul.f32 %v703, %v707
    %709 = vst [vmem:[#allocation2] sm:$0xff] %v708
    %710 = vst [vmem:[#allocation3] sm:$0xff] %v706
    %v711 = vpack.c.bf16 %v708, %v708
    %s712 = scalar_lea.vmem [#allocation12], 4
    %713 = vst [vmem:[%s712] sm:$0xf] %v711
    %v714 = vld [vmem:[#allocation2] sm:$0xff]
    %v715 = vld [vmem:[#allocation3] sm:$0xff]
    %s716 = scalar_lea.vmem [#allocation4], 32
    %v717 = vld [vmem:[%s716] sm:$0xff]
    %v718 = vld [vmem:[%s716 + $0x8] sm:$0xff]
    %v719 = vunpack.c.l.bf16 %v717
    %v720 = vunpack.c.h.bf16 %v717
    %v721 = vunpack.c.l.bf16 %v718
    %v722 = vunpack.c.h.bf16 %v718
    %v723 = vpack.c.bf16 %v714, %v714
    %v724 = vld [vmem:[#allocation10] sm:$0xff]
    %v725 = vld [vmem:[#allocation10 + $0x8] sm:$0xff]
    %v726 = vld [vmem:[#allocation10 + $0x10] sm:$0xff]
    %v727 = vld [vmem:[#allocation10 + $0x18] sm:$0xff]
    %v728 = vld [vmem:[#allocation10 + $0x20] sm:$0xff]
    %v729 = vld [vmem:[#allocation10 + $0x28] sm:$0xff]
    %v730 = vld [vmem:[#allocation10 + $0x30] sm:$0xff]
    %v731 = vld [vmem:[#allocation10 + $0x38] sm:$0xff]
    %v732 = vld [vmem:[#allocation10 + $0x40] sm:$0xff]
    %v733 = vld [vmem:[#allocation10 + $0x48] sm:$0xff]
    %v734 = vld [vmem:[#allocation10 + $0x50] sm:$0xff]
    %v735 = vld [vmem:[#allocation10 + $0x58] sm:$0xff]
    %v736 = vld [vmem:[#allocation10 + $0x60] sm:$0xff]
    %v737 = vld [vmem:[#allocation10 + $0x68] sm:$0xff]
    %v738 = vld [vmem:[#allocation10 + $0x70] sm:$0xff]
    %v739 = vld [vmem:[#allocation10 + $0x78] sm:$0xff]
    %v740 = vld [vmem:[#allocation10 + $0x80] sm:$0xff]
    %v741 = vld [vmem:[#allocation10 + $0x88] sm:$0xff]
    %v742 = vld [vmem:[#allocation10 + $0x90] sm:$0xff]
    %v743 = vld [vmem:[#allocation10 + $0x98] sm:$0xff]
    %v744 = vld [vmem:[#allocation10 + $0xa0] sm:$0xff]
    %v745 = vld [vmem:[#allocation10 + $0xa8] sm:$0xff]
    %v746 = vld [vmem:[#allocation10 + $0xb0] sm:$0xff]
    %v747 = vld [vmem:[#allocation10 + $0xb8] sm:$0xff]
    %v748 = vld [vmem:[#allocation10 + $0xc0] sm:$0xff]
    %v749 = vld [vmem:[#allocation10 + $0xc8] sm:$0xff]
    %v750 = vld [vmem:[#allocation10 + $0xd0] sm:$0xff]
    %v751 = vld [vmem:[#allocation10 + $0xd8] sm:$0xff]
    %v752 = vld [vmem:[#allocation10 + $0xe0] sm:$0xff]
    %v753 = vld [vmem:[#allocation10 + $0xe8] sm:$0xff]
    %v754 = vld [vmem:[#allocation10 + $0xf0] sm:$0xff]
    %v755 = vld [vmem:[#allocation10 + $0xf8] sm:$0xff]
    %v788 = vunpack.c.l.b16 %v724
    %v789 = vunpack.c.h.b16 %v724
    %v790 = vunpack.c.l.b16 %v725
    %v791 = vunpack.c.h.b16 %v725
    %v792 = vunpack.c.l.b16 %v726
    %v793 = vunpack.c.h.b16 %v726
    %v794 = vunpack.c.l.b16 %v727
    %v795 = vunpack.c.h.b16 %v727
    %v796 = vunpack.c.l.b16 %v728
    %v797 = vunpack.c.h.b16 %v728
    %v798 = vunpack.c.l.b16 %v729
    %v799 = vunpack.c.h.b16 %v729
    %v800 = vunpack.c.l.b16 %v730
    %v801 = vunpack.c.h.b16 %v730
    %v802 = vunpack.c.l.b16 %v731
    %v803 = vunpack.c.h.b16 %v731
    %v804 = vunpack.c.l.b16 %v732
    %v805 = vunpack.c.h.b16 %v732
    %v806 = vunpack.c.l.b16 %v733
    %v807 = vunpack.c.h.b16 %v733
    %v808 = vunpack.c.l.b16 %v734
    %v809 = vunpack.c.h.b16 %v734
    %v810 = vunpack.c.l.b16 %v735
    %v811 = vunpack.c.h.b16 %v735
    %v812 = vunpack.c.l.b16 %v736
    %v813 = vunpack.c.h.b16 %v736
    %v814 = vunpack.c.l.b16 %v737
    %v815 = vunpack.c.h.b16 %v737
    %v816 = vunpack.c.l.b16 %v738
    %v817 = vunpack.c.h.b16 %v738
    %v818 = vunpack.c.l.b16 %v739
    %v819 = vunpack.c.h.b16 %v739
    %v820 = vunpack.c.l.b16 %v740
    %v821 = vunpack.c.h.b16 %v740
    %v822 = vunpack.c.l.b16 %v741
    %v823 = vunpack.c.h.b16 %v741
    %v824 = vunpack.c.l.b16 %v742
    %v825 = vunpack.c.h.b16 %v742
    %v826 = vunpack.c.l.b16 %v743
    %v827 = vunpack.c.h.b16 %v743
    %v828 = vunpack.c.l.b16 %v744
    %v829 = vunpack.c.h.b16 %v744
    %v830 = vunpack.c.l.b16 %v745
    %v831 = vunpack.c.h.b16 %v745
    %v832 = vunpack.c.l.b16 %v746
    %v833 = vunpack.c.h.b16 %v746
    %v834 = vunpack.c.l.b16 %v747
    %v835 = vunpack.c.h.b16 %v747
    %v836 = vunpack.c.l.b16 %v748
    %v837 = vunpack.c.h.b16 %v748
    %v838 = vunpack.c.l.b16 %v749
    %v839 = vunpack.c.h.b16 %v749
    %v840 = vunpack.c.l.b16 %v750
    %v841 = vunpack.c.h.b16 %v750
    %v842 = vunpack.c.l.b16 %v751
    %v843 = vunpack.c.h.b16 %v751
    %v844 = vunpack.c.l.b16 %v752
    %v845 = vunpack.c.h.b16 %v752
    %v846 = vunpack.c.l.b16 %v753
    %v847 = vunpack.c.h.b16 %v753
    %v848 = vunpack.c.l.b16 %v754
    %v849 = vunpack.c.h.b16 %v754
    %v850 = vunpack.c.l.b16 %v755
    %v851 = vunpack.c.h.b16 %v755
    %v852 = vpack.c.b16 %v792, %v788
    %v853 = vpack.c.b16 %v793, %v789
    %v854 = vpack.c.b16 %v794, %v790
    %v855 = vpack.c.b16 %v795, %v791
    %v856 = vpack.c.b16 %v800, %v796
    %v857 = vpack.c.b16 %v801, %v797
    %v858 = vpack.c.b16 %v802, %v798
    %v859 = vpack.c.b16 %v803, %v799
    %v860 = vpack.c.b16 %v808, %v804
    %v861 = vpack.c.b16 %v809, %v805
    %v862 = vpack.c.b16 %v810, %v806
    %v863 = vpack.c.b16 %v811, %v807
    %v864 = vpack.c.b16 %v816, %v812
    %v865 = vpack.c.b16 %v817, %v813
    %v866 = vpack.c.b16 %v818, %v814
    %v867 = vpack.c.b16 %v819, %v815
    %v868 = vpack.c.b16 %v824, %v820
    %v869 = vpack.c.b16 %v825, %v821
    %v870 = vpack.c.b16 %v826, %v822
    %v871 = vpack.c.b16 %v827, %v823
    %v872 = vpack.c.b16 %v832, %v828
    %v873 = vpack.c.b16 %v833, %v829
    %v874 = vpack.c.b16 %v834, %v830
    %v875 = vpack.c.b16 %v835, %v831
    %v876 = vpack.c.b16 %v840, %v836
    %v877 = vpack.c.b16 %v841, %v837
    %v878 = vpack.c.b16 %v842, %v838
    %v879 = vpack.c.b16 %v843, %v839
    %v880 = vpack.c.b16 %v848, %v844
    %v881 = vpack.c.b16 %v849, %v845
    %v882 = vpack.c.b16 %v850, %v846
    %v883 = vpack.c.b16 %v851, %v847
    %916 = vmatprep.subr.bf16.mxu0 %v853
    %917 = vmatpush1.bf16.msra.mxu0 %v852
    %918 = vmatprep.subr.bf16.mxu0 %v857
    %919 = vmatpush1.bf16.msra.mxu0 %v856
    %920 = vmatprep.subr.bf16.mxu0 %v861
    %921 = vmatpush1.bf16.msra.mxu0 %v860
    %922 = vmatprep.subr.bf16.mxu0 %v865
    %923 = vmatpush1.bf16.msra.mxu0 %v864
    %924 = vmatprep.subr.bf16.mxu0 %v869
    %925 = vmatpush1.bf16.msra.mxu0 %v868
    %926 = vmatprep.subr.bf16.mxu0 %v873
    %927 = vmatpush1.bf16.msra.mxu0 %v872
    %928 = vmatprep.subr.bf16.mxu0 %v877
    %929 = vmatpush1.bf16.msra.mxu0 %v876
    %930 = vmatprep.subr.bf16.mxu0 %v881
    %931 = vmatpush1.bf16.msra.mxu0 %v880
    %932 = vmatprep.subr.bf16.mxu0 0
    %933 = vmatpush1.bf16.msra.mxu0 0
    %934 = vmatprep.subr.bf16.mxu0 0
    %935 = vmatpush1.bf16.msra.mxu0 0
    %936 = vmatprep.subr.bf16.mxu0 0
    %937 = vmatpush1.bf16.msra.mxu0 0
    %938 = vmatprep.subr.bf16.mxu0 0
    %939 = vmatpush1.bf16.msra.mxu0 0
    %940 = vmatprep.subr.bf16.mxu0 0
    %941 = vmatpush1.bf16.msra.mxu0 0
    %942 = vmatprep.subr.bf16.mxu0 0
    %943 = vmatpush1.bf16.msra.mxu0 0
    %944 = vmatprep.subr.bf16.mxu0 0
    %945 = vmatpush1.bf16.msra.mxu0 0
    %946 = vmatprep.subr.bf16.mxu0 0
    %947 = vmatpush1.bf16.msra.mxu0 0
    %948 = vmatprep.mubr.bf16.mxu0 0
    %949 = vmatmul.mubr.bf16.gmra.mrb[0].mxu0 %v723
    %v950 = vpop.f32.mrb[0].mxu0
    %v951 = vadd.f32 0.0, %v950
    %v952 = vpop.f32.mrb[0].mxu0
    %v953 = vadd.f32 0.0, %v952
    %v954 = vpop.f32.mrb[0].mxu0
    %v955 = vpop.f32.mrb[0].mxu0
    %956 = vdwg.mxu0
    %957 = vmatprep.subr.bf16.mxu0 %v855
    %958 = vmatpush1.bf16.msra.mxu0 %v854
    %959 = vmatprep.subr.bf16.mxu0 %v859
    %960 = vmatpush1.bf16.msra.mxu0 %v858
    %961 = vmatprep.subr.bf16.mxu0 %v863
    %962 = vmatpush1.bf16.msra.mxu0 %v862
    %963 = vmatprep.subr.bf16.mxu0 %v867
    %964 = vmatpush1.bf16.msra.mxu0 %v866
    %965 = vmatprep.subr.bf16.mxu0 %v871
    %966 = vmatpush1.bf16.msra.mxu0 %v870
    %967 = vmatprep.subr.bf16.mxu0 %v875
    %968 = vmatpush1.bf16.msra.mxu0 %v874
    %969 = vmatprep.subr.bf16.mxu0 %v879
    %970 = vmatpush1.bf16.msra.mxu0 %v878
    %971 = vmatprep.subr.bf16.mxu0 %v883
    %972 = vmatpush1.bf16.msra.mxu0 %v882
    %973 = vmatprep.subr.bf16.mxu0 0
    %974 = vmatpush1.bf16.msra.mxu0 0
    %975 = vmatprep.subr.bf16.mxu0 0
    %976 = vmatpush1.bf16.msra.mxu0 0
    %977 = vmatprep.subr.bf16.mxu0 0
    %978 = vmatpush1.bf16.msra.mxu0 0
    %979 = vmatprep.subr.bf16.mxu0 0
    %980 = vmatpush1.bf16.msra.mxu0 0
    %981 = vmatprep.subr.bf16.mxu0 0
    %982 = vmatpush1.bf16.msra.mxu0 0
    %983 = vmatprep.subr.bf16.mxu0 0
    %984 = vmatpush1.bf16.msra.mxu0 0
    %985 = vmatprep.subr.bf16.mxu0 0
    %986 = vmatpush1.bf16.msra.mxu0 0
    %987 = vmatprep.subr.bf16.mxu0 0
    %988 = vmatpush1.bf16.msra.mxu0 0
    %989 = vmatprep.mubr.bf16.mxu0 0
    %990 = vmatmul.mubr.bf16.gmra.mrb[0].mxu0 %v723
    %v991 = vpop.f32.mrb[0].mxu0
    %v992 = vadd.f32 0.0, %v991
    %v993 = vpop.f32.mrb[0].mxu0
    %v994 = vadd.f32 0.0, %v993
    %v995 = vpop.f32.mrb[0].mxu0
    %v996 = vpop.f32.mrb[0].mxu0
    %997 = vdwg.mxu0
    %v998 = vadd.f32 %v719, %v951
    %v999 = vadd.f32 %v720, %v953
    %v1000 = vadd.f32 %v721, %v992
    %v1001 = vadd.f32 %v722, %v994
    %v1002 = vxor.u32 %v998, 2147483648
    %v1003 = vmul.f32 %v1002, 1.442695
    %v1004 = vpow.pop %v1003
    %v1005 = vadd.f32 %v1004, 1.0
    %v1006 = vrcp.pop %v1005
    %v1007 = vmul.f32 1.0, %v1006
    %v1008 = vxor.u32 %v999, 2147483648
    %v1009 = vmul.f32 %v1008, 1.442695
    %v1010 = vpow.pop %v1009
    %v1011 = vadd.f32 %v1010, 1.0
    %v1012 = vrcp.pop %v1011
    %v1013 = vmul.f32 1.0, %v1012
    %v1014 = vtanh.pop %v1000
    %v1015 = vxor.u32 %v1001, 2147483648
    %v1016 = vmul.f32 %v1015, 1.442695
    %v1017 = vpow.pop %v1016
    %v1018 = vadd.f32 %v1017, 1.0
    %v1019 = vrcp.pop %v1018
    %v1020 = vmul.f32 1.0, %v1019
    %v1021 = vmul.f32 %v1013, %v715
    %v1022 = vmul.f32 %v1007, %v1014
    %v1023 = vadd.f32 %v1021, %v1022
    %v1024 = vtanh.pop %v1023
    %v1025 = vmul.f32 %v1020, %v1024
    %1026 = vst [vmem:[#allocation2] sm:$0xff] %v1025
    %1027 = vst [vmem:[#allocation3] sm:$0xff] %v1023
    %v1028 = vpack.c.bf16 %v1025, %v1025
    %s1029 = scalar_lea.vmem [#allocation12], 8
    %1030 = vst [vmem:[%s1029] sm:$0xf] %v1028
    %v1031 = vld [vmem:[#allocation2] sm:$0xff]
    %v1032 = vld [vmem:[#allocation3] sm:$0xff]
    %s1033 = scalar_lea.vmem [#allocation4], 48
    %v1034 = vld [vmem:[%s1033] sm:$0xff]
    %v1035 = vld [vmem:[%s1033 + $0x8] sm:$0xff]
    %v1036 = vunpack.c.l.bf16 %v1034
    %v1037 = vunpack.c.h.bf16 %v1034
    %v1038 = vunpack.c.l.bf16 %v1035
    %v1039 = vunpack.c.h.bf16 %v1035
    %v1040 = vpack.c.bf16 %v1031, %v1031
    %v1041 = vld [vmem:[#allocation10] sm:$0xff]
    %v1042 = vld [vmem:[#allocation10 + $0x8] sm:$0xff]
    %v1043 = vld [vmem:[#allocation10 + $0x10] sm:$0xff]
    %v1044 = vld [vmem:[#allocation10 + $0x18] sm:$0xff]
    %v1045 = vld [vmem:[#allocation10 + $0x20] sm:$0xff]
    %v1046 = vld [vmem:[#allocation10 + $0x28] sm:$0xff]
    %v1047 = vld [vmem:[#allocation10 + $0x30] sm:$0xff]
    %v1048 = vld [vmem:[#allocation10 + $0x38] sm:$0xff]
    %v1049 = vld [vmem:[#allocation10 + $0x40] sm:$0xff]
    %v1050 = vld [vmem:[#allocation10 + $0x48] sm:$0xff]
    %v1051 = vld [vmem:[#allocation10 + $0x50] sm:$0xff]
    %v1052 = vld [vmem:[#allocation10 + $0x58] sm:$0xff]
    %v1053 = vld [vmem:[#allocation10 + $0x60] sm:$0xff]
    %v1054 = vld [vmem:[#allocation10 + $0x68] sm:$0xff]
    %v1055 = vld [vmem:[#allocation10 + $0x70] sm:$0xff]
    %v1056 = vld [vmem:[#allocation10 + $0x78] sm:$0xff]
    %v1057 = vld [vmem:[#allocation10 + $0x80] sm:$0xff]
    %v1058 = vld [vmem:[#allocation10 + $0x88] sm:$0xff]
    %v1059 = vld [vmem:[#allocation10 + $0x90] sm:$0xff]
    %v1060 = vld [vmem:[#allocation10 + $0x98] sm:$0xff]
    %v1061 = vld [vmem:[#allocation10 + $0xa0] sm:$0xff]
    %v1062 = vld [vmem:[#allocation10 + $0xa8] sm:$0xff]
    %v1063 = vld [vmem:[#allocation10 + $0xb0] sm:$0xff]
    %v1064 = vld [vmem:[#allocation10 + $0xb8] sm:$0xff]
    %v1065 = vld [vmem:[#allocation10 + $0xc0] sm:$0xff]
    %v1066 = vld [vmem:[#allocation10 + $0xc8] sm:$0xff]
    %v1067 = vld [vmem:[#allocation10 + $0xd0] sm:$0xff]
    %v1068 = vld [vmem:[#allocation10 + $0xd8] sm:$0xff]
    %v1069 = vld [vmem:[#allocation10 + $0xe0] sm:$0xff]
    %v1070 = vld [vmem:[#allocation10 + $0xe8] sm:$0xff]
    %v1071 = vld [vmem:[#allocation10 + $0xf0] sm:$0xff]
    %v1072 = vld [vmem:[#allocation10 + $0xf8] sm:$0xff]
    %v1105 = vunpack.c.l.b16 %v1041
    %v1106 = vunpack.c.h.b16 %v1041
    %v1107 = vunpack.c.l.b16 %v1042
    %v1108 = vunpack.c.h.b16 %v1042
    %v1109 = vunpack.c.l.b16 %v1043
    %v1110 = vunpack.c.h.b16 %v1043
    %v1111 = vunpack.c.l.b16 %v1044
    %v1112 = vunpack.c.h.b16 %v1044
    %v1113 = vunpack.c.l.b16 %v1045
    %v1114 = vunpack.c.h.b16 %v1045
    %v1115 = vunpack.c.l.b16 %v1046
    %v1116 = vunpack.c.h.b16 %v1046
    %v1117 = vunpack.c.l.b16 %v1047
    %v1118 = vunpack.c.h.b16 %v1047
    %v1119 = vunpack.c.l.b16 %v1048
    %v1120 = vunpack.c.h.b16 %v1048
    %v1121 = vunpack.c.l.b16 %v1049
    %v1122 = vunpack.c.h.b16 %v1049
    %v1123 = vunpack.c.l.b16 %v1050
    %v1124 = vunpack.c.h.b16 %v1050
    %v1125 = vunpack.c.l.b16 %v1051
    %v1126 = vunpack.c.h.b16 %v1051
    %v1127 = vunpack.c.l.b16 %v1052
    %v1128 = vunpack.c.h.b16 %v1052
    %v1129 = vunpack.c.l.b16 %v1053
    %v1130 = vunpack.c.h.b16 %v1053
    %v1131 = vunpack.c.l.b16 %v1054
    %v1132 = vunpack.c.h.b16 %v1054
    %v1133 = vunpack.c.l.b16 %v1055
    %v1134 = vunpack.c.h.b16 %v1055
    %v1135 = vunpack.c.l.b16 %v1056
    %v1136 = vunpack.c.h.b16 %v1056
    %v1137 = vunpack.c.l.b16 %v1057
    %v1138 = vunpack.c.h.b16 %v1057
    %v1139 = vunpack.c.l.b16 %v1058
    %v1140 = vunpack.c.h.b16 %v1058
    %v1141 = vunpack.c.l.b16 %v1059
    %v1142 = vunpack.c.h.b16 %v1059
    %v1143 = vunpack.c.l.b16 %v1060
    %v1144 = vunpack.c.h.b16 %v1060
    %v1145 = vunpack.c.l.b16 %v1061
    %v1146 = vunpack.c.h.b16 %v1061
    %v1147 = vunpack.c.l.b16 %v1062
    %v1148 = vunpack.c.h.b16 %v1062
    %v1149 = vunpack.c.l.b16 %v1063
    %v1150 = vunpack.c.h.b16 %v1063
    %v1151 = vunpack.c.l.b16 %v1064
    %v1152 = vunpack.c.h.b16 %v1064
    %v1153 = vunpack.c.l.b16 %v1065
    %v1154 = vunpack.c.h.b16 %v1065
    %v1155 = vunpack.c.l.b16 %v1066
    %v1156 = vunpack.c.h.b16 %v1066
    %v1157 = vunpack.c.l.b16 %v1067
    %v1158 = vunpack.c.h.b16 %v1067
    %v1159 = vunpack.c.l.b16 %v1068
    %v1160 = vunpack.c.h.b16 %v1068
    %v1161 = vunpack.c.l.b16 %v1069
    %v1162 = vunpack.c.h.b16 %v1069
    %v1163 = vunpack.c.l.b16 %v1070
    %v1164 = vunpack.c.h.b16 %v1070
    %v1165 = vunpack.c.l.b16 %v1071
    %v1166 = vunpack.c.h.b16 %v1071
    %v1167 = vunpack.c.l.b16 %v1072
    %v1168 = vunpack.c.h.b16 %v1072
    %v1169 = vpack.c.b16 %v1109, %v1105
    %v1170 = vpack.c.b16 %v1110, %v1106
    %v1171 = vpack.c.b16 %v1111, %v1107
    %v1172 = vpack.c.b16 %v1112, %v1108
    %v1173 = vpack.c.b16 %v1117, %v1113
    %v1174 = vpack.c.b16 %v1118, %v1114
    %v1175 = vpack.c.b16 %v1119, %v1115
    %v1176 = vpack.c.b16 %v1120, %v1116
    %v1177 = vpack.c.b16 %v1125, %v1121
    %v1178 = vpack.c.b16 %v1126, %v1122
    %v1179 = vpack.c.b16 %v1127, %v1123
    %v1180 = vpack.c.b16 %v1128, %v1124
    %v1181 = vpack.c.b16 %v1133, %v1129
    %v1182 = vpack.c.b16 %v1134, %v1130
    %v1183 = vpack.c.b16 %v1135, %v1131
    %v1184 = vpack.c.b16 %v1136, %v1132
    %v1185 = vpack.c.b16 %v1141, %v1137
    %v1186 = vpack.c.b16 %v1142, %v1138
    %v1187 = vpack.c.b16 %v1143, %v1139
    %v1188 = vpack.c.b16 %v1144, %v1140
    %v1189 = vpack.c.b16 %v1149, %v1145
    %v1190 = vpack.c.b16 %v1150, %v1146
    %v1191 = vpack.c.b16 %v1151, %v1147
    %v1192 = vpack.c.b16 %v1152, %v1148
    %v1193 = vpack.c.b16 %v1157, %v1153
    %v1194 = vpack.c.b16 %v1158, %v1154
    %v1195 = vpack.c.b16 %v1159, %v1155
    %v1196 = vpack.c.b16 %v1160, %v1156
    %v1197 = vpack.c.b16 %v1165, %v1161
    %v1198 = vpack.c.b16 %v1166, %v1162
    %v1199 = vpack.c.b16 %v1167, %v1163
    %v1200 = vpack.c.b16 %v1168, %v1164
    %1233 = vmatprep.subr.bf16.mxu0 %v1170
    %1234 = vmatpush1.bf16.msra.mxu0 %v1169
    %1235 = vmatprep.subr.bf16.mxu0 %v1174
    %1236 = vmatpush1.bf16.msra.mxu0 %v1173
    %1237 = vmatprep.subr.bf16.mxu0 %v1178
    %1238 = vmatpush1.bf16.msra.mxu0 %v1177
    %1239 = vmatprep.subr.bf16.mxu0 %v1182
    %1240 = vmatpush1.bf16.msra.mxu0 %v1181
    %1241 = vmatprep.subr.bf16.mxu0 %v1186
    %1242 = vmatpush1.bf16.msra.mxu0 %v1185
    %1243 = vmatprep.subr.bf16.mxu0 %v1190
    %1244 = vmatpush1.bf16.msra.mxu0 %v1189
    %1245 = vmatprep.subr.bf16.mxu0 %v1194
    %1246 = vmatpush1.bf16.msra.mxu0 %v1193
    %1247 = vmatprep.subr.bf16.mxu0 %v1198
    %1248 = vmatpush1.bf16.msra.mxu0 %v1197
    %1249 = vmatprep.subr.bf16.mxu0 0
    %1250 = vmatpush1.bf16.msra.mxu0 0
    %1251 = vmatprep.subr.bf16.mxu0 0
    %1252 = vmatpush1.bf16.msra.mxu0 0
    %1253 = vmatprep.subr.bf16.mxu0 0
    %1254 = vmatpush1.bf16.msra.mxu0 0
    %1255 = vmatprep.subr.bf16.mxu0 0
    %1256 = vmatpush1.bf16.msra.mxu0 0
    %1257 = vmatprep.subr.bf16.mxu0 0
    %1258 = vmatpush1.bf16.msra.mxu0 0
    %1259 = vmatprep.subr.bf16.mxu0 0
    %1260 = vmatpush1.bf16.msra.mxu0 0
    %1261 = vmatprep.subr.bf16.mxu0 0
    %1262 = vmatpush1.bf16.msra.mxu0 0
    %1263 = vmatprep.subr.bf16.mxu0 0
    %1264 = vmatpush1.bf16.msra.mxu0 0
    %1265 = vmatprep.mubr.bf16.mxu0 0
    %1266 = vmatmul.mubr.bf16.gmra.mrb[0].mxu0 %v1040
    %v1267 = vpop.f32.mrb[0].mxu0
    %v1268 = vadd.f32 0.0, %v1267
    %v1269 = vpop.f32.mrb[0].mxu0
    %v1270 = vadd.f32 0.0, %v1269
    %v1271 = vpop.f32.mrb[0].mxu0
    %v1272 = vpop.f32.mrb[0].mxu0
    %1273 = vdwg.mxu0
    %1274 = vmatprep.subr.bf16.mxu0 %v1172
    %1275 = vmatpush1.bf16.msra.mxu0 %v1171
    %1276 = vmatprep.subr.bf16.mxu0 %v1176
    %1277 = vmatpush1.bf16.msra.mxu0 %v1175
    %1278 = vmatprep.subr.bf16.mxu0 %v1180
    %1279 = vmatpush1.bf16.msra.mxu0 %v1179
    %1280 = vmatprep.subr.bf16.mxu0 %v1184
    %1281 = vmatpush1.bf16.msra.mxu0 %v1183
    %1282 = vmatprep.subr.bf16.mxu0 %v1188
    %1283 = vmatpush1.bf16.msra.mxu0 %v1187
    %1284 = vmatprep.subr.bf16.mxu0 %v1192
    %1285 = vmatpush1.bf16.msra.mxu0 %v1191
    %1286 = vmatprep.subr.bf16.mxu0 %v1196
    %1287 = vmatpush1.bf16.msra.mxu0 %v1195
    %1288 = vmatprep.subr.bf16.mxu0 %v1200
    %1289 = vmatpush1.bf16.msra.mxu0 %v1199
    %1290 = vmatprep.subr.bf16.mxu0 0
    %1291 = vmatpush1.bf16.msra.mxu0 0
    %1292 = vmatprep.subr.bf16.mxu0 0
    %1293 = vmatpush1.bf16.msra.mxu0 0
    %1294 = vmatprep.subr.bf16.mxu0 0
    %1295 = vmatpush1.bf16.msra.mxu0 0
    %1296 = vmatprep.subr.bf16.mxu0 0
    %1297 = vmatpush1.bf16.msra.mxu0 0
    %1298 = vmatprep.subr.bf16.mxu0 0
    %1299 = vmatpush1.bf16.msra.mxu0 0
    %1300 = vmatprep.subr.bf16.mxu0 0
    %1301 = vmatpush1.bf16.msra.mxu0 0
    %1302 = vmatprep.subr.bf16.mxu0 0
    %1303 = vmatpush1.bf16.msra.mxu0 0
    %1304 = vmatprep.subr.bf16.mxu0 0
    %1305 = vmatpush1.bf16.msra.mxu0 0
    %1306 = vmatprep.mubr.bf16.mxu0 0
    %1307 = vmatmul.mubr.bf16.gmra.mrb[0].mxu0 %v1040
    %v1308 = vpop.f32.mrb[0].mxu0
    %v1309 = vadd.f32 0.0, %v1308
    %v1310 = vpop.f32.mrb[0].mxu0
    %v1311 = vadd.f32 0.0, %v1310
    %v1312 = vpop.f32.mrb[0].mxu0
    %v1313 = vpop.f32.mrb[0].mxu0
    %1314 = vdwg.mxu0
    %v1315 = vadd.f32 %v1036, %v1268
    %v1316 = vadd.f32 %v1037, %v1270
    %v1317 = vadd.f32 %v1038, %v1309
    %v1318 = vadd.f32 %v1039, %v1311
    %v1319 = vxor.u32 %v1315, 2147483648
    %v1320 = vmul.f32 %v1319, 1.442695
    %v1321 = vpow.pop %v1320
    %v1322 = vadd.f32 %v1321, 1.0
    %v1323 = vrcp.pop %v1322
    %v1324 = vmul.f32 1.0, %v1323
    %v1325 = vxor.u32 %v1316, 2147483648
    %v1326 = vmul.f32 %v1325, 1.442695
    %v1327 = vpow.pop %v1326
    %v1328 = vadd.f32 %v1327, 1.0
    %v1329 = vrcp.pop %v1328
    %v1330 = vmul.f32 1.0, %v1329
    %v1331 = vtanh.pop %v1317
    %v1332 = vxor.u32 %v1318, 2147483648
    %v1333 = vmul.f32 %v1332, 1.442695
    %v1334 = vpow.pop %v1333
    %v1335 = vadd.f32 %v1334, 1.0
    %v1336 = vrcp.pop %v1335
    %v1337 = vmul.f32 1.0, %v1336
    %v1338 = vmul.f32 %v1330, %v1032
    %v1339 = vmul.f32 %v1324, %v1331
    %v1340 = vadd.f32 %v1338, %v1339
    %v1341 = vtanh.pop %v1340
    %v1342 = vmul.f32 %v1337, %v1341
    %1343 = vst [vmem:[#allocation2] sm:$0xff] %v1342
    %1344 = vst [vmem:[#allocation3] sm:$0xff] %v1340
    %v1345 = vpack.c.bf16 %v1342, %v1342
    %s1346 = scalar_lea.vmem [#allocation12], 12
    %1347 = vst [vmem:[%s1346] sm:$0xf] %v1345
    %v1348 = vld [vmem:[#allocation2] sm:$0xff]
    %v1349 = vld [vmem:[#allocation3] sm:$0xff]
    %s1350 = scalar_lea.vmem [#allocation4], 64
    %v1351 = vld [vmem:[%s1350] sm:$0xff]
    %v1352 = vld [vmem:[%s1350 + $0x8] sm:$0xff]
    %v1353 = vunpack.c.l.bf16 %v1351
    %v1354 = vunpack.c.h.bf16 %v1351
    %v1355 = vunpack.c.l.bf16 %v1352
    %v1356 = vunpack.c.h.bf16 %v1352
    %v1357 = vpack.c.bf16 %v1348, %v1348
    %v1358 = vld [vmem:[#allocation10] sm:$0xff]
    %v1359 = vld [vmem:[#allocation10 + $0x8] sm:$0xff]
    %v1360 = vld [vmem:[#allocation10 + $0x10] sm:$0xff]
    %v1361 = vld [vmem:[#allocation10 + $0x18] sm:$0xff]
    %v1362 = vld [vmem:[#allocation10 + $0x20] sm:$0xff]
    %v1363 = vld [vmem:[#allocation10 + $0x28] sm:$0xff]
    %v1364 = vld [vmem:[#allocation10 + $0x30] sm:$0xff]
    %v1365 = vld [vmem:[#allocation10 + $0x38] sm:$0xff]
    %v1366 = vld [vmem:[#allocation10 + $0x40] sm:$0xff]
    %v1367 = vld [vmem:[#allocation10 + $0x48] sm:$0xff]
    %v1368 = vld [vmem:[#allocation10 + $0x50] sm:$0xff]
    %v1369 = vld [vmem:[#allocation10 + $0x58] sm:$0xff]
    %v1370 = vld [vmem:[#allocation10 + $0x60] sm:$0xff]
    %v1371 = vld [vmem:[#allocation10 + $0x68] sm:$0xff]
    %v1372 = vld [vmem:[#allocation10 + $0x70] sm:$0xff]
    %v1373 = vld [vmem:[#allocation10 + $0x78] sm:$0xff]
    %v1374 = vld [vmem:[#allocation10 + $0x80] sm:$0xff]
    %v1375 = vld [vmem:[#allocation10 + $0x88] sm:$0xff]
    %v1376 = vld [vmem:[#allocation10 + $0x90] sm:$0xff]
    %v1377 = vld [vmem:[#allocation10 + $0x98] sm:$0xff]
    %v1378 = vld [vmem:[#allocation10 + $0xa0] sm:$0xff]
    %v1379 = vld [vmem:[#allocation10 + $0xa8] sm:$0xff]
    %v1380 = vld [vmem:[#allocation10 + $0xb0] sm:$0xff]
    %v1381 = vld [vmem:[#allocation10 + $0xb8] sm:$0xff]
    %v1382 = vld [vmem:[#allocation10 + $0xc0] sm:$0xff]
    %v1383 = vld [vmem:[#allocation10 + $0xc8] sm:$0xff]
    %v1384 = vld [vmem:[#allocation10 + $0xd0] sm:$0xff]
    %v1385 = vld [vmem:[#allocation10 + $0xd8] sm:$0xff]
    %v1386 = vld [vmem:[#allocation10 + $0xe0] sm:$0xff]
    %v1387 = vld [vmem:[#allocation10 + $0xe8] sm:$0xff]
    %v1388 = vld [vmem:[#allocation10 + $0xf0] sm:$0xff]
    %v1389 = vld [vmem:[#allocation10 + $0xf8] sm:$0xff]
    %v1422 = vunpack.c.l.b16 %v1358
    %v1423 = vunpack.c.h.b16 %v1358
    %v1424 = vunpack.c.l.b16 %v1359
    %v1425 = vunpack.c.h.b16 %v1359
    %v1426 = vunpack.c.l.b16 %v1360
    %v1427 = vunpack.c.h.b16 %v1360
    %v1428 = vunpack.c.l.b16 %v1361
    %v1429 = vunpack.c.h.b16 %v1361
    %v1430 = vunpack.c.l.b16 %v1362
    %v1431 = vunpack.c.h.b16 %v1362
    %v1432 = vunpack.c.l.b16 %v1363
    %v1433 = vunpack.c.h.b16 %v1363
    %v1434 = vunpack.c.l.b16 %v1364
    %v1435 = vunpack.c.h.b16 %v1364
    %v1436 = vunpack.c.l.b16 %v1365
    %v1437 = vunpack.c.h.b16 %v1365
    %v1438 = vunpack.c.l.b16 %v1366
    %v1439 = vunpack.c.h.b16 %v1366
    %v1440 = vunpack.c.l.b16 %v1367
    %v1441 = vunpack.c.h.b16 %v1367
    %v1442 = vunpack.c.l.b16 %v1368
    %v1443 = vunpack.c.h.b16 %v1368
    %v1444 = vunpack.c.l.b16 %v1369
    %v1445 = vunpack.c.h.b16 %v1369
    %v1446 = vunpack.c.l.b16 %v1370
    %v1447 = vunpack.c.h.b16 %v1370
    %v1448 = vunpack.c.l.b16 %v1371
    %v1449 = vunpack.c.h.b16 %v1371
    %v1450 = vunpack.c.l.b16 %v1372
    %v1451 = vunpack.c.h.b16 %v1372
    %v1452 = vunpack.c.l.b16 %v1373
    %v1453 = vunpack.c.h.b16 %v1373
    %v1454 = vunpack.c.l.b16 %v1374
    %v1455 = vunpack.c.h.b16 %v1374
    %v1456 = vunpack.c.l.b16 %v1375
    %v1457 = vunpack.c.h.b16 %v1375
    %v1458 = vunpack.c.l.b16 %v1376
    %v1459 = vunpack.c.h.b16 %v1376
    %v1460 = vunpack.c.l.b16 %v1377
    %v1461 = vunpack.c.h.b16 %v1377
    %v1462 = vunpack.c.l.b16 %v1378
    %v1463 = vunpack.c.h.b16 %v1378
    %v1464 = vunpack.c.l.b16 %v1379
    %v1465 = vunpack.c.h.b16 %v1379
    %v1466 = vunpack.c.l.b16 %v1380
    %v1467 = vunpack.c.h.b16 %v1380
    %v1468 = vunpack.c.l.b16 %v1381
    %v1469 = vunpack.c.h.b16 %v1381
    %v1470 = vunpack.c.l.b16 %v1382
    %v1471 = vunpack.c.h.b16 %v1382
    %v1472 = vunpack.c.l.b16 %v1383
    %v1473 = vunpack.c.h.b16 %v1383
    %v1474 = vunpack.c.l.b16 %v1384
    %v1475 = vunpack.c.h.b16 %v1384
    %v1476 = vunpack.c.l.b16 %v1385
    %v1477 = vunpack.c.h.b16 %v1385
    %v1478 = vunpack.c.l.b16 %v1386
    %v1479 = vunpack.c.h.b16 %v1386
    %v1480 = vunpack.c.l.b16 %v1387
    %v1481 = vunpack.c.h.b16 %v1387
    %v1482 = vunpack.c.l.b16 %v1388
    %v1483 = vunpack.c.h.b16 %v1388
    %v1484 = vunpack.c.l.b16 %v1389
    %v1485 = vunpack.c.h.b16 %v1389
    %v1486 = vpack.c.b16 %v1426, %v1422
    %v1487 = vpack.c.b16 %v1427, %v1423
    %v1488 = vpack.c.b16 %v1428, %v1424
    %v1489 = vpack.c.b16 %v1429, %v1425
    %v1490 = vpack.c.b16 %v1434, %v1430
    %v1491 = vpack.c.b16 %v1435, %v1431
    %v1492 = vpack.c.b16 %v1436, %v1432
    %v1493 = vpack.c.b16 %v1437, %v1433
    %v1494 = vpack.c.b16 %v1442, %v1438
    %v1495 = vpack.c.b16 %v1443, %v1439
    %v1496 = vpack.c.b16 %v1444, %v1440
    %v1497 = vpack.c.b16 %v1445, %v1441
    %v1498 = vpack.c.b16 %v1450, %v1446
    %v1499 = vpack.c.b16 %v1451, %v1447
    %v1500 = vpack.c.b16 %v1452, %v1448
    %v1501 = vpack.c.b16 %v1453, %v1449
    %v1502 = vpack.c.b16 %v1458, %v1454
    %v1503 = vpack.c.b16 %v1459, %v1455
    %v1504 = vpack.c.b16 %v1460, %v1456
    %v1505 = vpack.c.b16 %v1461, %v1457
    %v1506 = vpack.c.b16 %v1466, %v1462
    %v1507 = vpack.c.b16 %v1467, %v1463
    %v1508 = vpack.c.b16 %v1468, %v1464
    %v1509 = vpack.c.b16 %v1469, %v1465
    %v1510 = vpack.c.b16 %v1474, %v1470
    %v1511 = vpack.c.b16 %v1475, %v1471
    %v1512 = vpack.c.b16 %v1476, %v1472
    %v1513 = vpack.c.b16 %v1477, %v1473
    %v1514 = vpack.c.b16 %v1482, %v1478
    %v1515 = vpack.c.b16 %v1483, %v1479
    %v1516 = vpack.c.b16 %v1484, %v1480
    %v1517 = vpack.c.b16 %v1485, %v1481
    %1550 = vmatprep.subr.bf16.mxu0 %v1487
    %1551 = vmatpush1.bf16.msra.mxu0 %v1486
    %1552 = vmatprep.subr.bf16.mxu0 %v1491
    %1553 = vmatpush1.bf16.msra.mxu0 %v1490
    %1554 = vmatprep.subr.bf16.mxu0 %v1495
    %1555 = vmatpush1.bf16.msra.mxu0 %v1494
    %1556 = vmatprep.subr.bf16.mxu0 %v1499
    %1557 = vmatpush1.bf16.msra.mxu0 %v1498
    %1558 = vmatprep.subr.bf16.mxu0 %v1503
    %1559 = vmatpush1.bf16.msra.mxu0 %v1502
    %1560 = vmatprep.subr.bf16.mxu0 %v1507
    %1561 = vmatpush1.bf16.msra.mxu0 %v1506
    %1562 = vmatprep.subr.bf16.mxu0 %v1511
    %1563 = vmatpush1.bf16.msra.mxu0 %v1510
    %1564 = vmatprep.subr.bf16.mxu0 %v1515
    %1565 = vmatpush1.bf16.msra.mxu0 %v1514
    %1566 = vmatprep.subr.bf16.mxu0 0
    %1567 = vmatpush1.bf16.msra.mxu0 0
    %1568 = vmatprep.subr.bf16.mxu0 0
    %1569 = vmatpush1.bf16.msra.mxu0 0
    %1570 = vmatprep.subr.bf16.mxu0 0
    %1571 = vmatpush1.bf16.msra.mxu0 0
    %1572 = vmatprep.subr.bf16.mxu0 0
    %1573 = vmatpush1.bf16.msra.mxu0 0
    %1574 = vmatprep.subr.bf16.mxu0 0
    %1575 = vmatpush1.bf16.msra.mxu0 0
    %1576 = vmatprep.subr.bf16.mxu0 0
    %1577 = vmatpush1.bf16.msra.mxu0 0
    %1578 = vmatprep.subr.bf16.mxu0 0
    %1579 = vmatpush1.bf16.msra.mxu0 0
    %1580 = vmatprep.subr.bf16.mxu0 0
    %1581 = vmatpush1.bf16.msra.mxu0 0
    %1582 = vmatprep.mubr.bf16.mxu0 0
    %1583 = vmatmul.mubr.bf16.gmra.mrb[0].mxu0 %v1357
    %v1584 = vpop.f32.mrb[0].mxu0
    %v1585 = vadd.f32 0.0, %v1584
    %v1586 = vpop.f32.mrb[0].mxu0
    %v1587 = vadd.f32 0.0, %v1586
    %v1588 = vpop.f32.mrb[0].mxu0
    %v1589 = vpop.f32.mrb[0].mxu0
    %1590 = vdwg.mxu0
    %1591 = vmatprep.subr.bf16.mxu0 %v1489
    %1592 = vmatpush1.bf16.msra.mxu0 %v1488
    %1593 = vmatprep.subr.bf16.mxu0 %v1493
    %1594 = vmatpush1.bf16.msra.mxu0 %v1492
    %1595 = vmatprep.subr.bf16.mxu0 %v1497
    %1596 = vmatpush1.bf16.msra.mxu0 %v1496
    %1597 = vmatprep.subr.bf16.mxu0 %v1501
    %1598 = vmatpush1.bf16.msra.mxu0 %v1500
    %1599 = vmatprep.subr.bf16.mxu0 %v1505
    %1600 = vmatpush1.bf16.msra.mxu0 %v1504
    %1601 = vmatprep.subr.bf16.mxu0 %v1509
    %1602 = vmatpush1.bf16.msra.mxu0 %v1508
    %1603 = vmatprep.subr.bf16.mxu0 %v1513
    %1604 = vmatpush1.bf16.msra.mxu0 %v1512
    %1605 = vmatprep.subr.bf16.mxu0 %v1517
    %1606 = vmatpush1.bf16.msra.mxu0 %v1516
    %1607 = vmatprep.subr.bf16.mxu0 0
    %1608 = vmatpush1.bf16.msra.mxu0 0
    %1609 = vmatprep.subr.bf16.mxu0 0
    %1610 = vmatpush1.bf16.msra.mxu0 0
    %1611 = vmatprep.subr.bf16.mxu0 0
    %1612 = vmatpush1.bf16.msra.mxu0 0
    %1613 = vmatprep.subr.bf16.mxu0 0
    %1614 = vmatpush1.bf16.msra.mxu0 0
    %1615 = vmatprep.subr.bf16.mxu0 0
    %1616 = vmatpush1.bf16.msra.mxu0 0
    %1617 = vmatprep.subr.bf16.mxu0 0
    %1618 = vmatpush1.bf16.msra.mxu0 0
    %1619 = vmatprep.subr.bf16.mxu0 0
    %1620 = vmatpush1.bf16.msra.mxu0 0
    %1621 = vmatprep.subr.bf16.mxu0 0
    %1622 = vmatpush1.bf16.msra.mxu0 0
    %1623 = vmatprep.mubr.bf16.mxu0 0
    %1624 = vmatmul.mubr.bf16.gmra.mrb[0].mxu0 %v1357
    %v1625 = vpop.f32.mrb[0].mxu0
    %v1626 = vadd.f32 0.0, %v1625
    %v1627 = vpop.f32.mrb[0].mxu0
    %v1628 = vadd.f32 0.0, %v1627
    %v1629 = vpop.f32.mrb[0].mxu0
    %v1630 = vpop.f32.mrb[0].mxu0
    %1631 = vdwg.mxu0
    %v1632 = vadd.f32 %v1353, %v1585
    %v1633 = vadd.f32 %v1354, %v1587
    %v1634 = vadd.f32 %v1355, %v1626
    %v1635 = vadd.f32 %v1356, %v1628
    %v1636 = vxor.u32 %v1632, 2147483648
    %v1637 = vmul.f32 %v1636, 1.442695
    %v1638 = vpow.pop %v1637
    %v1639 = vadd.f32 %v1638, 1.0
    %v1640 = vrcp.pop %v1639
    %v1641 = vmul.f32 1.0, %v1640
    %v1642 = vxor.u32 %v1633, 2147483648
    %v1643 = vmul.f32 %v1642, 1.442695
    %v1644 = vpow.pop %v1643
    %v1645 = vadd.f32 %v1644, 1.0
    %v1646 = vrcp.pop %v1645
    %v1647 = vmul.f32 1.0, %v1646
    %v1648 = vtanh.pop %v1634
    %v1649 = vxor.u32 %v1635, 2147483648
    %v1650 = vmul.f32 %v1649, 1.442695
    %v1651 = vpow.pop %v1650
    %v1652 = vadd.f32 %v1651, 1.0
    %v1653 = vrcp.pop %v1652
    %v1654 = vmul.f32 1.0, %v1653
    %v1655 = vmul.f32 %v1647, %v1349
    %v1656 = vmul.f32 %v1641, %v1648
    %v1657 = vadd.f32 %v1655, %v1656
    %v1658 = vtanh.pop %v1657
    %v1659 = vmul.f32 %v1654, %v1658
    %1660 = vst [vmem:[#allocation2] sm:$0xff] %v1659
    %1661 = vst [vmem:[#allocation3] sm:$0xff] %v1657
    %v1662 = vpack.c.bf16 %v1659, %v1659
    %s1663 = scalar_lea.vmem [#allocation12], 16
    %1664 = vst [vmem:[%s1663] sm:$0xf] %v1662
    %v1665 = vld [vmem:[#allocation2] sm:$0xff]
    %v1666 = vld [vmem:[#allocation3] sm:$0xff]
    %s1667 = scalar_lea.vmem [#allocation4], 80
    %v1668 = vld [vmem:[%s1667] sm:$0xff]
    %v1669 = vld [vmem:[%s1667 + $0x8] sm:$0xff]
    %v1670 = vunpack.c.l.bf16 %v1668
    %v1671 = vunpack.c.h.bf16 %v1668
    %v1672 = vunpack.c.l.bf16 %v1669
    %v1673 = vunpack.c.h.bf16 %v1669
    %v1674 = vpack.c.bf16 %v1665, %v1665
    %v1675 = vld [vmem:[#allocation10] sm:$0xff]
    %v1676 = vld [vmem:[#allocation10 + $0x8] sm:$0xff]
    %v1677 = vld [vmem:[#allocation10 + $0x10] sm:$0xff]
    %v1678 = vld [vmem:[#allocation10 + $0x18] sm:$0xff]
    %v1679 = vld [vmem:[#allocation10 + $0x20] sm:$0xff]
    %v1680 = vld [vmem:[#allocation10 + $0x28] sm:$0xff]
    %v1681 = vld [vmem:[#allocation10 + $0x30] sm:$0xff]
    %v1682 = vld [vmem:[#allocation10 + $0x38] sm:$0xff]
    %v1683 = vld [vmem:[#allocation10 + $0x40] sm:$0xff]
    %v1684 = vld [vmem:[#allocation10 + $0x48] sm:$0xff]
    %v1685 = vld [vmem:[#allocation10 + $0x50] sm:$0xff]
    %v1686 = vld [vmem:[#allocation10 + $0x58] sm:$0xff]
    %v1687 = vld [vmem:[#allocation10 + $0x60] sm:$0xff]
    %v1688 = vld [vmem:[#allocation10 + $0x68] sm:$0xff]
    %v1689 = vld [vmem:[#allocation10 + $0x70] sm:$0xff]
    %v1690 = vld [vmem:[#allocation10 + $0x78] sm:$0xff]
    %v1691 = vld [vmem:[#allocation10 + $0x80] sm:$0xff]
    %v1692 = vld [vmem:[#allocation10 + $0x88] sm:$0xff]
    %v1693 = vld [vmem:[#allocation10 + $0x90] sm:$0xff]
    %v1694 = vld [vmem:[#allocation10 + $0x98] sm:$0xff]
    %v1695 = vld [vmem:[#allocation10 + $0xa0] sm:$0xff]
    %v1696 = vld [vmem:[#allocation10 + $0xa8] sm:$0xff]
    %v1697 = vld [vmem:[#allocation10 + $0xb0] sm:$0xff]
    %v1698 = vld [vmem:[#allocation10 + $0xb8] sm:$0xff]
    %v1699 = vld [vmem:[#allocation10 + $0xc0] sm:$0xff]
    %v1700 = vld [vmem:[#allocation10 + $0xc8] sm:$0xff]
    %v1701 = vld [vmem:[#allocation10 + $0xd0] sm:$0xff]
    %v1702 = vld [vmem:[#allocation10 + $0xd8] sm:$0xff]
    %v1703 = vld [vmem:[#allocation10 + $0xe0] sm:$0xff]
    %v1704 = vld [vmem:[#allocation10 + $0xe8] sm:$0xff]
    %v1705 = vld [vmem:[#allocation10 + $0xf0] sm:$0xff]
    %v1706 = vld [vmem:[#allocation10 + $0xf8] sm:$0xff]
    %v1739 = vunpack.c.l.b16 %v1675
    %v1740 = vunpack.c.h.b16 %v1675
    %v1741 = vunpack.c.l.b16 %v1676
    %v1742 = vunpack.c.h.b16 %v1676
    %v1743 = vunpack.c.l.b16 %v1677
    %v1744 = vunpack.c.h.b16 %v1677
    %v1745 = vunpack.c.l.b16 %v1678
    %v1746 = vunpack.c.h.b16 %v1678
    %v1747 = vunpack.c.l.b16 %v1679
    %v1748 = vunpack.c.h.b16 %v1679
    %v1749 = vunpack.c.l.b16 %v1680
    %v1750 = vunpack.c.h.b16 %v1680
    %v1751 = vunpack.c.l.b16 %v1681
    %v1752 = vunpack.c.h.b16 %v1681
    %v1753 = vunpack.c.l.b16 %v1682
    %v1754 = vunpack.c.h.b16 %v1682
    %v1755 = vunpack.c.l.b16 %v1683
    %v1756 = vunpack.c.h.b16 %v1683
    %v1757 = vunpack.c.l.b16 %v1684
    %v1758 = vunpack.c.h.b16 %v1684
    %v1759 = vunpack.c.l.b16 %v1685
    %v1760 = vunpack.c.h.b16 %v1685
    %v1761 = vunpack.c.l.b16 %v1686
    %v1762 = vunpack.c.h.b16 %v1686
    %v1763 = vunpack.c.l.b16 %v1687
    %v1764 = vunpack.c.h.b16 %v1687
    %v1765 = vunpack.c.l.b16 %v1688
    %v1766 = vunpack.c.h.b16 %v1688
    %v1767 = vunpack.c.l.b16 %v1689
    %v1768 = vunpack.c.h.b16 %v1689
    %v1769 = vunpack.c.l.b16 %v1690
    %v1770 = vunpack.c.h.b16 %v1690
    %v1771 = vunpack.c.l.b16 %v1691
    %v1772 = vunpack.c.h.b16 %v1691
    %v1773 = vunpack.c.l.b16 %v1692
    %v1774 = vunpack.c.h.b16 %v1692
    %v1775 = vunpack.c.l.b16 %v1693
    %v1776 = vunpack.c.h.b16 %v1693
    %v1777 = vunpack.c.l.b16 %v1694
    %v1778 = vunpack.c.h.b16 %v1694
    %v1779 = vunpack.c.l.b16 %v1695
    %v1780 = vunpack.c.h.b16 %v1695
    %v1781 = vunpack.c.l.b16 %v1696
    %v1782 = vunpack.c.h.b16 %v1696
    %v1783 = vunpack.c.l.b16 %v1697
    %v1784 = vunpack.c.h.b16 %v1697
    %v1785 = vunpack.c.l.b16 %v1698
    %v1786 = vunpack.c.h.b16 %v1698
    %v1787 = vunpack.c.l.b16 %v1699
    %v1788 = vunpack.c.h.b16 %v1699
    %v1789 = vunpack.c.l.b16 %v1700
    %v1790 = vunpack.c.h.b16 %v1700
    %v1791 = vunpack.c.l.b16 %v1701
    %v1792 = vunpack.c.h.b16 %v1701
    %v1793 = vunpack.c.l.b16 %v1702
    %v1794 = vunpack.c.h.b16 %v1702
    %v1795 = vunpack.c.l.b16 %v1703
    %v1796 = vunpack.c.h.b16 %v1703
    %v1797 = vunpack.c.l.b16 %v1704
    %v1798 = vunpack.c.h.b16 %v1704
    %v1799 = vunpack.c.l.b16 %v1705
    %v1800 = vunpack.c.h.b16 %v1705
    %v1801 = vunpack.c.l.b16 %v1706
    %v1802 = vunpack.c.h.b16 %v1706
    %v1803 = vpack.c.b16 %v1743, %v1739
    %v1804 = vpack.c.b16 %v1744, %v1740
    %v1805 = vpack.c.b16 %v1745, %v1741
    %v1806 = vpack.c.b16 %v1746, %v1742
    %v1807 = vpack.c.b16 %v1751, %v1747
    %v1808 = vpack.c.b16 %v1752, %v1748
    %v1809 = vpack.c.b16 %v1753, %v1749
    %v1810 = vpack.c.b16 %v1754, %v1750
    %v1811 = vpack.c.b16 %v1759, %v1755
    %v1812 = vpack.c.b16 %v1760, %v1756
    %v1813 = vpack.c.b16 %v1761, %v1757
    %v1814 = vpack.c.b16 %v1762, %v1758
    %v1815 = vpack.c.b16 %v1767, %v1763
    %v1816 = vpack.c.b16 %v1768, %v1764
    %v1817 = vpack.c.b16 %v1769, %v1765
    %v1818 = vpack.c.b16 %v1770, %v1766
    %v1819 = vpack.c.b16 %v1775, %v1771
    %v1820 = vpack.c.b16 %v1776, %v1772
    %v1821 = vpack.c.b16 %v1777, %v1773
    %v1822 = vpack.c.b16 %v1778, %v1774
    %v1823 = vpack.c.b16 %v1783, %v1779
    %v1824 = vpack.c.b16 %v1784, %v1780
    %v1825 = vpack.c.b16 %v1785, %v1781
    %v1826 = vpack.c.b16 %v1786, %v1782
    %v1827 = vpack.c.b16 %v1791, %v1787
    %v1828 = vpack.c.b16 %v1792, %v1788
    %v1829 = vpack.c.b16 %v1793, %v1789
    %v1830 = vpack.c.b16 %v1794, %v1790
    %v1831 = vpack.c.b16 %v1799, %v1795
    %v1832 = vpack.c.b16 %v1800, %v1796
    %v1833 = vpack.c.b16 %v1801, %v1797
    %v1834 = vpack.c.b16 %v1802, %v1798
    %1867 = vmatprep.subr.bf16.mxu0 %v1804
    %1868 = vmatpush1.bf16.msra.mxu0 %v1803
    %1869 = vmatprep.subr.bf16.mxu0 %v1808
    %1870 = vmatpush1.bf16.msra.mxu0 %v1807
    %1871 = vmatprep.subr.bf16.mxu0 %v1812
    %1872 = vmatpush1.bf16.msra.mxu0 %v1811
    %1873 = vmatprep.subr.bf16.mxu0 %v1816
    %1874 = vmatpush1.bf16.msra.mxu0 %v1815
    %1875 = vmatprep.subr.bf16.mxu0 %v1820
    %1876 = vmatpush1.bf16.msra.mxu0 %v1819
    %1877 = vmatprep.subr.bf16.mxu0 %v1824
    %1878 = vmatpush1.bf16.msra.mxu0 %v1823
    %1879 = vmatprep.subr.bf16.mxu0 %v1828
    %1880 = vmatpush1.bf16.msra.mxu0 %v1827
    %1881 = vmatprep.subr.bf16.mxu0 %v1832
    %1882 = vmatpush1.bf16.msra.mxu0 %v1831
    %1883 = vmatprep.subr.bf16.mxu0 0
    %1884 = vmatpush1.bf16.msra.mxu0 0
    %1885 = vmatprep.subr.bf16.mxu0 0
    %1886 = vmatpush1.bf16.msra.mxu0 0
    %1887 = vmatprep.subr.bf16.mxu0 0
    %1888 = vmatpush1.bf16.msra.mxu0 0
    %1889 = vmatprep.subr.bf16.mxu0 0
    %1890 = vmatpush1.bf16.msra.mxu0 0
    %1891 = vmatprep.subr.bf16.mxu0 0
    %1892 = vmatpush1.bf16.msra.mxu0 0
    %1893 = vmatprep.subr.bf16.mxu0 0
    %1894 = vmatpush1.bf16.msra.mxu0 0
    %1895 = vmatprep.subr.bf16.mxu0 0
    %1896 = vmatpush1.bf16.msra.mxu0 0
    %1897 = vmatprep.subr.bf16.mxu0 0
    %1898 = vmatpush1.bf16.msra.mxu0 0
    %1899 = vmatprep.mubr.bf16.mxu0 0
    %1900 = vmatmul.mubr.bf16.gmra.mrb[0].mxu0 %v1674
    %v1901 = vpop.f32.mrb[0].mxu0
    %v1902 = vadd.f32 0.0, %v1901
    %v1903 = vpop.f32.mrb[0].mxu0
    %v1904 = vadd.f32 0.0, %v1903
    %v1905 = vpop.f32.mrb[0].mxu0
    %v1906 = vpop.f32.mrb[0].mxu0
    %1907 = vdwg.mxu0
    %1908 = vmatprep.subr.bf16.mxu0 %v1806
    %1909 = vmatpush1.bf16.msra.mxu0 %v1805
    %1910 = vmatprep.subr.bf16.mxu0 %v1810
    %1911 = vmatpush1.bf16.msra.mxu0 %v1809
    %1912 = vmatprep.subr.bf16.mxu0 %v1814
    %1913 = vmatpush1.bf16.msra.mxu0 %v1813
    %1914 = vmatprep.subr.bf16.mxu0 %v1818
    %1915 = vmatpush1.bf16.msra.mxu0 %v1817
    %1916 = vmatprep.subr.bf16.mxu0 %v1822
    %1917 = vmatpush1.bf16.msra.mxu0 %v1821
    %1918 = vmatprep.subr.bf16.mxu0 %v1826
    %1919 = vmatpush1.bf16.msra.mxu0 %v1825
    %1920 = vmatprep.subr.bf16.mxu0 %v1830
    %1921 = vmatpush1.bf16.msra.mxu0 %v1829
    %1922 = vmatprep.subr.bf16.mxu0 %v1834
    %1923 = vmatpush1.bf16.msra.mxu0 %v1833
    %1924 = vmatprep.subr.bf16.mxu0 0
    %1925 = vmatpush1.bf16.msra.mxu0 0
    %1926 = vmatprep.subr.bf16.mxu0 0
    %1927 = vmatpush1.bf16.msra.mxu0 0
    %1928 = vmatprep.subr.bf16.mxu0 0
    %1929 = vmatpush1.bf16.msra.mxu0 0
    %1930 = vmatprep.subr.bf16.mxu0 0
    %1931 = vmatpush1.bf16.msra.mxu0 0
    %1932 = vmatprep.subr.bf16.mxu0 0
    %1933 = vmatpush1.bf16.msra.mxu0 0
    %1934 = vmatprep.subr.bf16.mxu0 0
    %1935 = vmatpush1.bf16.msra.mxu0 0
    %1936 = vmatprep.subr.bf16.mxu0 0
    %1937 = vmatpush1.bf16.msra.mxu0 0
    %1938 = vmatprep.subr.bf16.mxu0 0
    %1939 = vmatpush1.bf16.msra.mxu0 0
    %1940 = vmatprep.mubr.bf16.mxu0 0
    %1941 = vmatmul.mubr.bf16.gmra.mrb[0].mxu0 %v1674
    %v1942 = vpop.f32.mrb[0].mxu0
    %v1943 = vadd.f32 0.0, %v1942
    %v1944 = vpop.f32.mrb[0].mxu0
    %v1945 = vadd.f32 0.0, %v1944
    %v1946 = vpop.f32.mrb[0].mxu0
    %v1947 = vpop.f32.mrb[0].mxu0
    %1948 = vdwg.mxu0
    %v1949 = vadd.f32 %v1670, %v1902
    %v1950 = vadd.f32 %v1671, %v1904
    %v1951 = vadd.f32 %v1672, %v1943
    %v1952 = vadd.f32 %v1673, %v1945
    %v1953 = vxor.u32 %v1949, 2147483648
    %v1954 = vmul.f32 %v1953, 1.442695
    %v1955 = vpow.pop %v1954
    %v1956 = vadd.f32 %v1955, 1.0
    %v1957 = vrcp.pop %v1956
    %v1958 = vmul.f32 1.0, %v1957
    %v1959 = vxor.u32 %v1950, 2147483648
    %v1960 = vmul.f32 %v1959, 1.442695
    %v1961 = vpow.pop %v1960
    %v1962 = vadd.f32 %v1961, 1.0
    %v1963 = vrcp.pop %v1962
    %v1964 = vmul.f32 1.0, %v1963
    %v1965 = vtanh.pop %v1951
    %v1966 = vxor.u32 %v1952, 2147483648
    %v1967 = vmul.f32 %v1966, 1.442695
    %v1968 = vpow.pop %v1967
    %v1969 = vadd.f32 %v1968, 1.0
    %v1970 = vrcp.pop %v1969
    %v1971 = vmul.f32 1.0, %v1970
    %v1972 = vmul.f32 %v1964, %v1666
    %v1973 = vmul.f32 %v1958, %v1965
    %v1974 = vadd.f32 %v1972, %v1973
    %v1975 = vtanh.pop %v1974
    %v1976 = vmul.f32 %v1971, %v1975
    %1977 = vst [vmem:[#allocation2] sm:$0xff] %v1976
    %1978 = vst [vmem:[#allocation3] sm:$0xff] %v1974
    %v1979 = vpack.c.bf16 %v1976, %v1976
    %s1980 = scalar_lea.vmem [#allocation12], 20
    %1981 = vst [vmem:[%s1980] sm:$0xf] %v1979
    %v1982 = vld [vmem:[#allocation2] sm:$0xff]
    %v1983 = vld [vmem:[#allocation3] sm:$0xff]
    %s1984 = scalar_lea.vmem [#allocation4], 96
    %v1985 = vld [vmem:[%s1984] sm:$0xff]
    %v1986 = vld [vmem:[%s1984 + $0x8] sm:$0xff]
    %v1987 = vunpack.c.l.bf16 %v1985
    %v1988 = vunpack.c.h.bf16 %v1985
    %v1989 = vunpack.c.l.bf16 %v1986
    %v1990 = vunpack.c.h.bf16 %v1986
    %v1991 = vpack.c.bf16 %v1982, %v1982
    %v1992 = vld [vmem:[#allocation10] sm:$0xff]
    %v1993 = vld [vmem:[#allocation10 + $0x8] sm:$0xff]
    %v1994 = vld [vmem:[#allocation10 + $0x10] sm:$0xff]
    %v1995 = vld [vmem:[#allocation10 + $0x18] sm:$0xff]
    %v1996 = vld [vmem:[#allocation10 + $0x20] sm:$0xff]
    %v1997 = vld [vmem:[#allocation10 + $0x28] sm:$0xff]
    %v1998 = vld [vmem:[#allocation10 + $0x30] sm:$0xff]
    %v1999 = vld [vmem:[#allocation10 + $0x38] sm:$0xff]
    %v2000 = vld [vmem:[#allocation10 + $0x40] sm:$0xff]
    %v2001 = vld [vmem:[#allocation10 + $0x48] sm:$0xff]
    %v2002 = vld [vmem:[#allocation10 + $0x50] sm:$0xff]
    %v2003 = vld [vmem:[#allocation10 + $0x58] sm:$0xff]
    %v2004 = vld [vmem:[#allocation10 + $0x60] sm:$0xff]
    %v2005 = vld [vmem:[#allocation10 + $0x68] sm:$0xff]
    %v2006 = vld [vmem:[#allocation10 + $0x70] sm:$0xff]
    %v2007 = vld [vmem:[#allocation10 + $0x78] sm:$0xff]
    %v2008 = vld [vmem:[#allocation10 + $0x80] sm:$0xff]
    %v2009 = vld [vmem:[#allocation10 + $0x88] sm:$0xff]
    %v2010 = vld [vmem:[#allocation10 + $0x90] sm:$0xff]
    %v2011 = vld [vmem:[#allocation10 + $0x98] sm:$0xff]
    %v2012 = vld [vmem:[#allocation10 + $0xa0] sm:$0xff]
    %v2013 = vld [vmem:[#allocation10 + $0xa8] sm:$0xff]
    %v2014 = vld [vmem:[#allocation10 + $0xb0] sm:$0xff]
    %v2015 = vld [vmem:[#allocation10 + $0xb8] sm:$0xff]
    %v2016 = vld [vmem:[#allocation10 + $0xc0] sm:$0xff]
    %v2017 = vld [vmem:[#allocation10 + $0xc8] sm:$0xff]
    %v2018 = vld [vmem:[#allocation10 + $0xd0] sm:$0xff]
    %v2019 = vld [vmem:[#allocation10 + $0xd8] sm:$0xff]
    %v2020 = vld [vmem:[#allocation10 + $0xe0] sm:$0xff]
    %v2021 = vld [vmem:[#allocation10 + $0xe8] sm:$0xff]
    %v2022 = vld [vmem:[#allocation10 + $0xf0] sm:$0xff]
    %v2023 = vld [vmem:[#allocation10 + $0xf8] sm:$0xff]
    %v2056 = vunpack.c.l.b16 %v1992
    %v2057 = vunpack.c.h.b16 %v1992
    %v2058 = vunpack.c.l.b16 %v1993
    %v2059 = vunpack.c.h.b16 %v1993
    %v2060 = vunpack.c.l.b16 %v1994
    %v2061 = vunpack.c.h.b16 %v1994
    %v2062 = vunpack.c.l.b16 %v1995
    %v2063 = vunpack.c.h.b16 %v1995
    %v2064 = vunpack.c.l.b16 %v1996
    %v2065 = vunpack.c.h.b16 %v1996
    %v2066 = vunpack.c.l.b16 %v1997
    %v2067 = vunpack.c.h.b16 %v1997
    %v2068 = vunpack.c.l.b16 %v1998
    %v2069 = vunpack.c.h.b16 %v1998
    %v2070 = vunpack.c.l.b16 %v1999
    %v2071 = vunpack.c.h.b16 %v1999
    %v2072 = vunpack.c.l.b16 %v2000
    %v2073 = vunpack.c.h.b16 %v2000
    %v2074 = vunpack.c.l.b16 %v2001
    %v2075 = vunpack.c.h.b16 %v2001
    %v2076 = vunpack.c.l.b16 %v2002
    %v2077 = vunpack.c.h.b16 %v2002
    %v2078 = vunpack.c.l.b16 %v2003
    %v2079 = vunpack.c.h.b16 %v2003
    %v2080 = vunpack.c.l.b16 %v2004
    %v2081 = vunpack.c.h.b16 %v2004
    %v2082 = vunpack.c.l.b16 %v2005
    %v2083 = vunpack.c.h.b16 %v2005
    %v2084 = vunpack.c.l.b16 %v2006
    %v2085 = vunpack.c.h.b16 %v2006
    %v2086 = vunpack.c.l.b16 %v2007
    %v2087 = vunpack.c.h.b16 %v2007
    %v2088 = vunpack.c.l.b16 %v2008
    %v2089 = vunpack.c.h.b16 %v2008
    %v2090 = vunpack.c.l.b16 %v2009
    %v2091 = vunpack.c.h.b16 %v2009
    %v2092 = vunpack.c.l.b16 %v2010
    %v2093 = vunpack.c.h.b16 %v2010
    %v2094 = vunpack.c.l.b16 %v2011
    %v2095 = vunpack.c.h.b16 %v2011
    %v2096 = vunpack.c.l.b16 %v2012
    %v2097 = vunpack.c.h.b16 %v2012
    %v2098 = vunpack.c.l.b16 %v2013
    %v2099 = vunpack.c.h.b16 %v2013
    %v2100 = vunpack.c.l.b16 %v2014
    %v2101 = vunpack.c.h.b16 %v2014
    %v2102 = vunpack.c.l.b16 %v2015
    %v2103 = vunpack.c.h.b16 %v2015
    %v2104 = vunpack.c.l.b16 %v2016
    %v2105 = vunpack.c.h.b16 %v2016
    %v2106 = vunpack.c.l.b16 %v2017
    %v2107 = vunpack.c.h.b16 %v2017
    %v2108 = vunpack.c.l.b16 %v2018
    %v2109 = vunpack.c.h.b16 %v2018
    %v2110 = vunpack.c.l.b16 %v2019
    %v2111 = vunpack.c.h.b16 %v2019
    %v2112 = vunpack.c.l.b16 %v2020
    %v2113 = vunpack.c.h.b16 %v2020
    %v2114 = vunpack.c.l.b16 %v2021
    %v2115 = vunpack.c.h.b16 %v2021
    %v2116 = vunpack.c.l.b16 %v2022
    %v2117 = vunpack.c.h.b16 %v2022
    %v2118 = vunpack.c.l.b16 %v2023
    %v2119 = vunpack.c.h.b16 %v2023
    %v2120 = vpack.c.b16 %v2060, %v2056
    %v2121 = vpack.c.b16 %v2061, %v2057
    %v2122 = vpack.c.b16 %v2062, %v2058
    %v2123 = vpack.c.b16 %v2063, %v2059
    %v2124 = vpack.c.b16 %v2068, %v2064
    %v2125 = vpack.c.b16 %v2069, %v2065
    %v2126 = vpack.c.b16 %v2070, %v2066
    %v2127 = vpack.c.b16 %v2071, %v2067
    %v2128 = vpack.c.b16 %v2076, %v2072
    %v2129 = vpack.c.b16 %v2077, %v2073
    %v2130 = vpack.c.b16 %v2078, %v2074
    %v2131 = vpack.c.b16 %v2079, %v2075
    %v2132 = vpack.c.b16 %v2084, %v2080
    %v2133 = vpack.c.b16 %v2085, %v2081
    %v2134 = vpack.c.b16 %v2086, %v2082
    %v2135 = vpack.c.b16 %v2087, %v2083
    %v2136 = vpack.c.b16 %v2092, %v2088
    %v2137 = vpack.c.b16 %v2093, %v2089
    %v2138 = vpack.c.b16 %v2094, %v2090
    %v2139 = vpack.c.b16 %v2095, %v2091
    %v2140 = vpack.c.b16 %v2100, %v2096
    %v2141 = vpack.c.b16 %v2101, %v2097
    %v2142 = vpack.c.b16 %v2102, %v2098
    %v2143 = vpack.c.b16 %v2103, %v2099
    %v2144 = vpack.c.b16 %v2108, %v2104
    %v2145 = vpack.c.b16 %v2109, %v2105
    %v2146 = vpack.c.b16 %v2110, %v2106
    %v2147 = vpack.c.b16 %v2111, %v2107
    %v2148 = vpack.c.b16 %v2116, %v2112
    %v2149 = vpack.c.b16 %v2117, %v2113
    %v2150 = vpack.c.b16 %v2118, %v2114
    %v2151 = vpack.c.b16 %v2119, %v2115
    %2184 = vmatprep.subr.bf16.mxu0 %v2121
    %2185 = vmatpush1.bf16.msra.mxu0 %v2120
    %2186 = vmatprep.subr.bf16.mxu0 %v2125
    %2187 = vmatpush1.bf16.msra.mxu0 %v2124
    %2188 = vmatprep.subr.bf16.mxu0 %v2129
    %2189 = vmatpush1.bf16.msra.mxu0 %v2128
    %2190 = vmatprep.subr.bf16.mxu0 %v2133
    %2191 = vmatpush1.bf16.msra.mxu0 %v2132
    %2192 = vmatprep.subr.bf16.mxu0 %v2137
    %2193 = vmatpush1.bf16.msra.mxu0 %v2136
    %2194 = vmatprep.subr.bf16.mxu0 %v2141
    %2195 = vmatpush1.bf16.msra.mxu0 %v2140
    %2196 = vmatprep.subr.bf16.mxu0 %v2145
    %2197 = vmatpush1.bf16.msra.mxu0 %v2144
    %2198 = vmatprep.subr.bf16.mxu0 %v2149
    %2199 = vmatpush1.bf16.msra.mxu0 %v2148
    %2200 = vmatprep.subr.bf16.mxu0 0
    %2201 = vmatpush1.bf16.msra.mxu0 0
    %2202 = vmatprep.subr.bf16.mxu0 0
    %2203 = vmatpush1.bf16.msra.mxu0 0
    %2204 = vmatprep.subr.bf16.mxu0 0
    %2205 = vmatpush1.bf16.msra.mxu0 0
    %2206 = vmatprep.subr.bf16.mxu0 0
    %2207 = vmatpush1.bf16.msra.mxu0 0
    %2208 = vmatprep.subr.bf16.mxu0 0
    %2209 = vmatpush1.bf16.msra.mxu0 0
    %2210 = vmatprep.subr.bf16.mxu0 0
    %2211 = vmatpush1.bf16.msra.mxu0 0
    %2212 = vmatprep.subr.bf16.mxu0 0
    %2213 = vmatpush1.bf16.msra.mxu0 0
    %2214 = vmatprep.subr.bf16.mxu0 0
    %2215 = vmatpush1.bf16.msra.mxu0 0
    %2216 = vmatprep.mubr.bf16.mxu0 0
    %2217 = vmatmul.mubr.bf16.gmra.mrb[0].mxu0 %v1991
    %v2218 = vpop.f32.mrb[0].mxu0
    %v2219 = vadd.f32 0.0, %v2218
    %v2220 = vpop.f32.mrb[0].mxu0
    %v2221 = vadd.f32 0.0, %v2220
    %v2222 = vpop.f32.mrb[0].mxu0
    %v2223 = vpop.f32.mrb[0].mxu0
    %2224 = vdwg.mxu0
    %2225 = vmatprep.subr.bf16.mxu0 %v2123
    %2226 = vmatpush1.bf16.msra.mxu0 %v2122
    %2227 = vmatprep.subr.bf16.mxu0 %v2127
    %2228 = vmatpush1.bf16.msra.mxu0 %v2126
    %2229 = vmatprep.subr.bf16.mxu0 %v2131
    %2230 = vmatpush1.bf16.msra.mxu0 %v2130
    %2231 = vmatprep.subr.bf16.mxu0 %v2135
    %2232 = vmatpush1.bf16.msra.mxu0 %v2134
    %2233 = vmatprep.subr.bf16.mxu0 %v2139
    %2234 = vmatpush1.bf16.msra.mxu0 %v2138
    %2235 = vmatprep.subr.bf16.mxu0 %v2143
    %2236 = vmatpush1.bf16.msra.mxu0 %v2142
    %2237 = vmatprep.subr.bf16.mxu0 %v2147
    %2238 = vmatpush1.bf16.msra.mxu0 %v2146
    %2239 = vmatprep.subr.bf16.mxu0 %v2151
    %2240 = vmatpush1.bf16.msra.mxu0 %v2150
    %2241 = vmatprep.subr.bf16.mxu0 0
    %2242 = vmatpush1.bf16.msra.mxu0 0
    %2243 = vmatprep.subr.bf16.mxu0 0
    %2244 = vmatpush1.bf16.msra.mxu0 0
    %2245 = vmatprep.subr.bf16.mxu0 0
    %2246 = vmatpush1.bf16.msra.mxu0 0
    %2247 = vmatprep.subr.bf16.mxu0 0
    %2248 = vmatpush1.bf16.msra.mxu0 0
    %2249 = vmatprep.subr.bf16.mxu0 0
    %2250 = vmatpush1.bf16.msra.mxu0 0
    %2251 = vmatprep.subr.bf16.mxu0 0
    %2252 = vmatpush1.bf16.msra.mxu0 0
    %2253 = vmatprep.subr.bf16.mxu0 0
    %2254 = vmatpush1.bf16.msra.mxu0 0
    %2255 = vmatprep.subr.bf16.mxu0 0
    %2256 = vmatpush1.bf16.msra.mxu0 0
    %2257 = vmatprep.mubr.bf16.mxu0 0
    %2258 = vmatmul.mubr.bf16.gmra.mrb[0].mxu0 %v1991
    %v2259 = vpop.f32.mrb[0].mxu0
    %v2260 = vadd.f32 0.0, %v2259
    %v2261 = vpop.f32.mrb[0].mxu0
    %v2262 = vadd.f32 0.0, %v2261
    %v2263 = vpop.f32.mrb[0].mxu0
    %v2264 = vpop.f32.mrb[0].mxu0
    %2265 = vdwg.mxu0
    %v2266 = vadd.f32 %v1987, %v2219
    %v2267 = vadd.f32 %v1988, %v2221
    %v2268 = vadd.f32 %v1989, %v2260
    %v2269 = vadd.f32 %v1990, %v2262
    %v2270 = vxor.u32 %v2266, 2147483648
    %v2271 = vmul.f32 %v2270, 1.442695
    %v2272 = vpow.pop %v2271
    %v2273 = vadd.f32 %v2272, 1.0
    %v2274 = vrcp.pop %v2273
    %v2275 = vmul.f32 1.0, %v2274
    %v2276 = vxor.u32 %v2267, 2147483648
    %v2277 = vmul.f32 %v2276, 1.442695
    %v2278 = vpow.pop %v2277
    %v2279 = vadd.f32 %v2278, 1.0
    %v2280 = vrcp.pop %v2279
    %v2281 = vmul.f32 1.0, %v2280
    %v2282 = vtanh.pop %v2268
    %v2283 = vxor.u32 %v2269, 2147483648
    %v2284 = vmul.f32 %v2283, 1.442695
    %v2285 = vpow.pop %v2284
    %v2286 = vadd.f32 %v2285, 1.0
    %v2287 = vrcp.pop %v2286
    %v2288 = vmul.f32 1.0, %v2287
    %v2289 = vmul.f32 %v2281, %v1983
    %v2290 = vmul.f32 %v2275, %v2282
    %v2291 = vadd.f32 %v2289, %v2290
    %v2292 = vtanh.pop %v2291
    %v2293 = vmul.f32 %v2288, %v2292
    %2294 = vst [vmem:[#allocation2] sm:$0xff] %v2293
    %2295 = vst [vmem:[#allocation3] sm:$0xff] %v2291
    %v2296 = vpack.c.bf16 %v2293, %v2293
    %s2297 = scalar_lea.vmem [#allocation12], 24
    %2298 = vst [vmem:[%s2297] sm:$0xf] %v2296
    %v2299 = vld [vmem:[#allocation2] sm:$0xff]
    %v2300 = vld [vmem:[#allocation3] sm:$0xff]
    %s2301 = scalar_lea.vmem [#allocation4], 112
    %v2302 = vld [vmem:[%s2301] sm:$0xff]
    %v2303 = vld [vmem:[%s2301 + $0x8] sm:$0xff]
    %v2304 = vunpack.c.l.bf16 %v2302
    %v2305 = vunpack.c.h.bf16 %v2302
    %v2306 = vunpack.c.l.bf16 %v2303
    %v2307 = vunpack.c.h.bf16 %v2303
    %v2308 = vpack.c.bf16 %v2299, %v2299
    %v2309 = vld [vmem:[#allocation10] sm:$0xff]
    %v2310 = vld [vmem:[#allocation10 + $0x8] sm:$0xff]
    %v2311 = vld [vmem:[#allocation10 + $0x10] sm:$0xff]
    %v2312 = vld [vmem:[#allocation10 + $0x18] sm:$0xff]
    %v2313 = vld [vmem:[#allocation10 + $0x20] sm:$0xff]
    %v2314 = vld [vmem:[#allocation10 + $0x28] sm:$0xff]
    %v2315 = vld [vmem:[#allocation10 + $0x30] sm:$0xff]
    %v2316 = vld [vmem:[#allocation10 + $0x38] sm:$0xff]
    %v2317 = vld [vmem:[#allocation10 + $0x40] sm:$0xff]
    %v2318 = vld [vmem:[#allocation10 + $0x48] sm:$0xff]
    %v2319 = vld [vmem:[#allocation10 + $0x50] sm:$0xff]
    %v2320 = vld [vmem:[#allocation10 + $0x58] sm:$0xff]
    %v2321 = vld [vmem:[#allocation10 + $0x60] sm:$0xff]
    %v2322 = vld [vmem:[#allocation10 + $0x68] sm:$0xff]
    %v2323 = vld [vmem:[#allocation10 + $0x70] sm:$0xff]
    %v2324 = vld [vmem:[#allocation10 + $0x78] sm:$0xff]
    %v2325 = vld [vmem:[#allocation10 + $0x80] sm:$0xff]
    %v2326 = vld [vmem:[#allocation10 + $0x88] sm:$0xff]
    %v2327 = vld [vmem:[#allocation10 + $0x90] sm:$0xff]
    %v2328 = vld [vmem:[#allocation10 + $0x98] sm:$0xff]
    %v2329 = vld [vmem:[#allocation10 + $0xa0] sm:$0xff]
    %v2330 = vld [vmem:[#allocation10 + $0xa8] sm:$0xff]
    %v2331 = vld [vmem:[#allocation10 + $0xb0] sm:$0xff]
    %v2332 = vld [vmem:[#allocation10 + $0xb8] sm:$0xff]
    %v2333 = vld [vmem:[#allocation10 + $0xc0] sm:$0xff]
    %v2334 = vld [vmem:[#allocation10 + $0xc8] sm:$0xff]
    %v2335 = vld [vmem:[#allocation10 + $0xd0] sm:$0xff]
    %v2336 = vld [vmem:[#allocation10 + $0xd8] sm:$0xff]
    %v2337 = vld [vmem:[#allocation10 + $0xe0] sm:$0xff]
    %v2338 = vld [vmem:[#allocation10 + $0xe8] sm:$0xff]
    %v2339 = vld [vmem:[#allocation10 + $0xf0] sm:$0xff]
    %v2340 = vld [vmem:[#allocation10 + $0xf8] sm:$0xff]
    %v2373 = vunpack.c.l.b16 %v2309
    %v2374 = vunpack.c.h.b16 %v2309
    %v2375 = vunpack.c.l.b16 %v2310
    %v2376 = vunpack.c.h.b16 %v2310
    %v2377 = vunpack.c.l.b16 %v2311
    %v2378 = vunpack.c.h.b16 %v2311
    %v2379 = vunpack.c.l.b16 %v2312
    %v2380 = vunpack.c.h.b16 %v2312
    %v2381 = vunpack.c.l.b16 %v2313
    %v2382 = vunpack.c.h.b16 %v2313
    %v2383 = vunpack.c.l.b16 %v2314
    %v2384 = vunpack.c.h.b16 %v2314
    %v2385 = vunpack.c.l.b16 %v2315
    %v2386 = vunpack.c.h.b16 %v2315
    %v2387 = vunpack.c.l.b16 %v2316
    %v2388 = vunpack.c.h.b16 %v2316
    %v2389 = vunpack.c.l.b16 %v2317
    %v2390 = vunpack.c.h.b16 %v2317
    %v2391 = vunpack.c.l.b16 %v2318
    %v2392 = vunpack.c.h.b16 %v2318
    %v2393 = vunpack.c.l.b16 %v2319
    %v2394 = vunpack.c.h.b16 %v2319
    %v2395 = vunpack.c.l.b16 %v2320
    %v2396 = vunpack.c.h.b16 %v2320
    %v2397 = vunpack.c.l.b16 %v2321
    %v2398 = vunpack.c.h.b16 %v2321
    %v2399 = vunpack.c.l.b16 %v2322
    %v2400 = vunpack.c.h.b16 %v2322
    %v2401 = vunpack.c.l.b16 %v2323
    %v2402 = vunpack.c.h.b16 %v2323
    %v2403 = vunpack.c.l.b16 %v2324
    %v2404 = vunpack.c.h.b16 %v2324
    %v2405 = vunpack.c.l.b16 %v2325
    %v2406 = vunpack.c.h.b16 %v2325
    %v2407 = vunpack.c.l.b16 %v2326
    %v2408 = vunpack.c.h.b16 %v2326
    %v2409 = vunpack.c.l.b16 %v2327
    %v2410 = vunpack.c.h.b16 %v2327
    %v2411 = vunpack.c.l.b16 %v2328
    %v2412 = vunpack.c.h.b16 %v2328
    %v2413 = vunpack.c.l.b16 %v2329
    %v2414 = vunpack.c.h.b16 %v2329
    %v2415 = vunpack.c.l.b16 %v2330
    %v2416 = vunpack.c.h.b16 %v2330
    %v2417 = vunpack.c.l.b16 %v2331
    %v2418 = vunpack.c.h.b16 %v2331
    %v2419 = vunpack.c.l.b16 %v2332
    %v2420 = vunpack.c.h.b16 %v2332
    %v2421 = vunpack.c.l.b16 %v2333
    %v2422 = vunpack.c.h.b16 %v2333
    %v2423 = vunpack.c.l.b16 %v2334
    %v2424 = vunpack.c.h.b16 %v2334
    %v2425 = vunpack.c.l.b16 %v2335
    %v2426 = vunpack.c.h.b16 %v2335
    %v2427 = vunpack.c.l.b16 %v2336
    %v2428 = vunpack.c.h.b16 %v2336
    %v2429 = vunpack.c.l.b16 %v2337
    %v2430 = vunpack.c.h.b16 %v2337
    %v2431 = vunpack.c.l.b16 %v2338
    %v2432 = vunpack.c.h.b16 %v2338
    %v2433 = vunpack.c.l.b16 %v2339
    %v2434 = vunpack.c.h.b16 %v2339
    %v2435 = vunpack.c.l.b16 %v2340
    %v2436 = vunpack.c.h.b16 %v2340
    %v2437 = vpack.c.b16 %v2377, %v2373
    %v2438 = vpack.c.b16 %v2378, %v2374
    %v2439 = vpack.c.b16 %v2379, %v2375
    %v2440 = vpack.c.b16 %v2380, %v2376
    %v2441 = vpack.c.b16 %v2385, %v2381
    %v2442 = vpack.c.b16 %v2386, %v2382
    %v2443 = vpack.c.b16 %v2387, %v2383
    %v2444 = vpack.c.b16 %v2388, %v2384
    %v2445 = vpack.c.b16 %v2393, %v2389
    %v2446 = vpack.c.b16 %v2394, %v2390
    %v2447 = vpack.c.b16 %v2395, %v2391
    %v2448 = vpack.c.b16 %v2396, %v2392
    %v2449 = vpack.c.b16 %v2401, %v2397
    %v2450 = vpack.c.b16 %v2402, %v2398
    %v2451 = vpack.c.b16 %v2403, %v2399
    %v2452 = vpack.c.b16 %v2404, %v2400
    %v2453 = vpack.c.b16 %v2409, %v2405
    %v2454 = vpack.c.b16 %v2410, %v2406
    %v2455 = vpack.c.b16 %v2411, %v2407
    %v2456 = vpack.c.b16 %v2412, %v2408
    %v2457 = vpack.c.b16 %v2417, %v2413
    %v2458 = vpack.c.b16 %v2418, %v2414
    %v2459 = vpack.c.b16 %v2419, %v2415
    %v2460 = vpack.c.b16 %v2420, %v2416
    %v2461 = vpack.c.b16 %v2425, %v2421
    %v2462 = vpack.c.b16 %v2426, %v2422
    %v2463 = vpack.c.b16 %v2427, %v2423
    %v2464 = vpack.c.b16 %v2428, %v2424
    %v2465 = vpack.c.b16 %v2433, %v2429
    %v2466 = vpack.c.b16 %v2434, %v2430
    %v2467 = vpack.c.b16 %v2435, %v2431
    %v2468 = vpack.c.b16 %v2436, %v2432
    %2501 = vmatprep.subr.bf16.mxu0 %v2438
    %2502 = vmatpush1.bf16.msra.mxu0 %v2437
    %2503 = vmatprep.subr.bf16.mxu0 %v2442
    %2504 = vmatpush1.bf16.msra.mxu0 %v2441
    %2505 = vmatprep.subr.bf16.mxu0 %v2446
    %2506 = vmatpush1.bf16.msra.mxu0 %v2445
    %2507 = vmatprep.subr.bf16.mxu0 %v2450
    %2508 = vmatpush1.bf16.msra.mxu0 %v2449
    %2509 = vmatprep.subr.bf16.mxu0 %v2454
    %2510 = vmatpush1.bf16.msra.mxu0 %v2453
    %2511 = vmatprep.subr.bf16.mxu0 %v2458
    %2512 = vmatpush1.bf16.msra.mxu0 %v2457
    %2513 = vmatprep.subr.bf16.mxu0 %v2462
    %2514 = vmatpush1.bf16.msra.mxu0 %v2461
    %2515 = vmatprep.subr.bf16.mxu0 %v2466
    %2516 = vmatpush1.bf16.msra.mxu0 %v2465
    %2517 = vmatprep.subr.bf16.mxu0 0
    %2518 = vmatpush1.bf16.msra.mxu0 0
    %2519 = vmatprep.subr.bf16.mxu0 0
    %2520 = vmatpush1.bf16.msra.mxu0 0
    %2521 = vmatprep.subr.bf16.mxu0 0
    %2522 = vmatpush1.bf16.msra.mxu0 0
    %2523 = vmatprep.subr.bf16.mxu0 0
    %2524 = vmatpush1.bf16.msra.mxu0 0
    %2525 = vmatprep.subr.bf16.mxu0 0
    %2526 = vmatpush1.bf16.msra.mxu0 0
    %2527 = vmatprep.subr.bf16.mxu0 0
    %2528 = vmatpush1.bf16.msra.mxu0 0
    %2529 = vmatprep.subr.bf16.mxu0 0
    %2530 = vmatpush1.bf16.msra.mxu0 0
    %2531 = vmatprep.subr.bf16.mxu0 0
    %2532 = vmatpush1.bf16.msra.mxu0 0
    %2533 = vmatprep.mubr.bf16.mxu0 0
    %2534 = vmatmul.mubr.bf16.gmra.mrb[0].mxu0 %v2308
    %v2535 = vpop.f32.mrb[0].mxu0
    %v2536 = vadd.f32 0.0, %v2535
    %v2537 = vpop.f32.mrb[0].mxu0
    %v2538 = vadd.f32 0.0, %v2537
    %v2539 = vpop.f32.mrb[0].mxu0
    %v2540 = vpop.f32.mrb[0].mxu0
    %2541 = vdwg.mxu0
    %2542 = vmatprep.subr.bf16.mxu0 %v2440
    %2543 = vmatpush1.bf16.msra.mxu0 %v2439
    %2544 = vmatprep.subr.bf16.mxu0 %v2444
    %2545 = vmatpush1.bf16.msra.mxu0 %v2443
    %2546 = vmatprep.subr.bf16.mxu0 %v2448
    %2547 = vmatpush1.bf16.msra.mxu0 %v2447
    %2548 = vmatprep.subr.bf16.mxu0 %v2452
    %2549 = vmatpush1.bf16.msra.mxu0 %v2451
    %2550 = vmatprep.subr.bf16.mxu0 %v2456
    %2551 = vmatpush1.bf16.msra.mxu0 %v2455
    %2552 = vmatprep.subr.bf16.mxu0 %v2460
    %2553 = vmatpush1.bf16.msra.mxu0 %v2459
    %2554 = vmatprep.subr.bf16.mxu0 %v2464
    %2555 = vmatpush1.bf16.msra.mxu0 %v2463
    %2556 = vmatprep.subr.bf16.mxu0 %v2468
    %2557 = vmatpush1.bf16.msra.mxu0 %v2467
    %2558 = vmatprep.subr.bf16.mxu0 0
    %2559 = vmatpush1.bf16.msra.mxu0 0
    %2560 = vmatprep.subr.bf16.mxu0 0
    %2561 = vmatpush1.bf16.msra.mxu0 0
    %2562 = vmatprep.subr.bf16.mxu0 0
    %2563 = vmatpush1.bf16.msra.mxu0 0
    %2564 = vmatprep.subr.bf16.mxu0 0
    %2565 = vmatpush1.bf16.msra.mxu0 0
    %2566 = vmatprep.subr.bf16.mxu0 0
    %2567 = vmatpush1.bf16.msra.mxu0 0
    %2568 = vmatprep.subr.bf16.mxu0 0
    %2569 = vmatpush1.bf16.msra.mxu0 0
    %2570 = vmatprep.subr.bf16.mxu0 0
    %2571 = vmatpush1.bf16.msra.mxu0 0
    %2572 = vmatprep.subr.bf16.mxu0 0
    %2573 = vmatpush1.bf16.msra.mxu0 0
    %2574 = vmatprep.mubr.bf16.mxu0 0
    %2575 = vmatmul.mubr.bf16.gmra.mrb[0].mxu0 %v2308
    %v2576 = vpop.f32.mrb[0].mxu0
    %v2577 = vadd.f32 0.0, %v2576
    %v2578 = vpop.f32.mrb[0].mxu0
    %v2579 = vadd.f32 0.0, %v2578
    %v2580 = vpop.f32.mrb[0].mxu0
    %v2581 = vpop.f32.mrb[0].mxu0
    %2582 = vdwg.mxu0
    %v2583 = vadd.f32 %v2304, %v2536
    %v2584 = vadd.f32 %v2305, %v2538
    %v2585 = vadd.f32 %v2306, %v2577
    %v2586 = vadd.f32 %v2307, %v2579
    %v2587 = vxor.u32 %v2583, 2147483648
    %v2588 = vmul.f32 %v2587, 1.442695
    %v2589 = vpow.pop %v2588
    %v2590 = vadd.f32 %v2589, 1.0
    %v2591 = vrcp.pop %v2590
    %v2592 = vmul.f32 1.0, %v2591
    %v2593 = vxor.u32 %v2584, 2147483648
    %v2594 = vmul.f32 %v2593, 1.442695
    %v2595 = vpow.pop %v2594
    %v2596 = vadd.f32 %v2595, 1.0
    %v2597 = vrcp.pop %v2596
    %v2598 = vmul.f32 1.0, %v2597
    %v2599 = vtanh.pop %v2585
    %v2600 = vxor.u32 %v2586, 2147483648
    %v2601 = vmul.f32 %v2600, 1.442695
    %v2602 = vpow.pop %v2601
    %v2603 = vadd.f32 %v2602, 1.0
    %v2604 = vrcp.pop %v2603
    %v2605 = vmul.f32 1.0, %v2604
    %v2606 = vmul.f32 %v2598, %v2300
    %v2607 = vmul.f32 %v2592, %v2599
    %v2608 = vadd.f32 %v2606, %v2607
    %v2609 = vtanh.pop %v2608
    %v2610 = vmul.f32 %v2605, %v2609
    %2611 = vst [vmem:[#allocation2] sm:$0xff] %v2610
    %2612 = vst [vmem:[#allocation3] sm:$0xff] %v2608
    %v2613 = vpack.c.bf16 %v2610, %v2610
    %s2614 = scalar_lea.vmem [#allocation12], 28
    %2615 = vst [vmem:[%s2614] sm:$0xf] %v2613
    // Predicated region
    $region38: #{rnn_forward.6} parent=1 // pred_check
      %p2616 = pneg %p74
    $region39: #{rnn_forward.6} parent=1 // pred_check_branch
      %2618 = sbr.rel (%p2616) target = $region41
    $region40: #{rnn_forward.6} parent=1 // pred_region
      %v2619 = vld [vmem:[#allocation2] sm:$0xff]
      %2620 = vst [vmem:[#allocation13] sm:$0xff] %v2619
      %v2621 = vld [vmem:[#allocation3] sm:$0xff]
      %2622 = vst [vmem:[#allocation15] sm:$0xff] %v2621
    $region41: #{rnn_forward.6} parent=1 // pred_fallthru
      _
    // Predicated region
    $region42: #{rnn_forward.6} parent=1 // pred_check
      _
    $region43: #{rnn_forward.6} parent=1 // pred_check_branch
      %2624 = sbr.rel (0) target = $region45
    $region44: #{rnn_forward.6} parent=1 // pred_region
      %s2626 = ssub.s32 512, 512
      %2627 = vsyncadd [#allocation6], %s2626
      %s2628 = sshll.u32 [#allocation12], 4
      %s2629 = int_to_ptr.vmem [resolvable:$true] %s2628
      %2634 = dma.vmem_to_hbm [thread:$0]  %s2629, 512, %s4, [#allocation6], 64, 64, 4
    $region45: #{rnn_forward.6} parent=1 // pred_fallthru
      _
    // Predicated region
    $region46: #{rnn_forward.6} parent=1 // pred_check
      _
    $region47: #{rnn_forward.6} parent=1 // pred_check_branch
      %2636 = sbr.rel (0) target = $region49
    $region48: #{rnn_forward.6} parent=1 // pred_region
      %s2638 = ssub.s32 128, 128
      %2639 = vsyncadd [#allocation14], %s2638
      %s2641 = sshll.u32 [#allocation13], 4
      %s2642 = int_to_ptr.vmem [resolvable:$true] %s2641
      %2644 = dma.vmem_to_hbm [thread:$0]  %s2642, 128, %s5, [#allocation14]
    $region49: #{rnn_forward.6} parent=1 // pred_fallthru
      _
    // Predicated region
    $region50: #{rnn_forward.6} parent=1 // pred_check
      _
    $region51: #{rnn_forward.6} parent=1 // pred_check_branch
      %2646 = sbr.rel (0) target = $region53
    $region52: #{rnn_forward.6} parent=1 // pred_region
      %s2648 = ssub.s32 128, 128
      %2649 = vsyncadd [#allocation14], %s2648
      %s2651 = sshll.u32 [#allocation15], 4
      %s2652 = int_to_ptr.vmem [resolvable:$true] %s2651
      %2654 = dma.vmem_to_hbm [thread:$0]  %s2652, 128, %s6, [#allocation14]
    $region53: #{rnn_forward.6} parent=1 // pred_fallthru
      _
    // Predicated region
    $region54: #{rnn_forward.6} parent=1 // pred_check
      _
    $region55: #{rnn_forward.6} parent=1 // pred_check_branch
      %2656 = sbr.rel (0) target = $region57
    $region56: #{rnn_forward.6} parent=1 // pred_region
      %2657 = dma.done [#allocation6], 512
    $region57: #{rnn_forward.6} parent=1 // pred_fallthru
      _
    // Predicated region
    $region58: #{rnn_forward.6} parent=1 // pred_check
      _
    $region59: #{rnn_forward.6} parent=1 // pred_check_branch
      %2659 = sbr.rel (0) target = $region61
    $region60: #{rnn_forward.6} parent=1 // pred_region
      %2660 = dma.done [#allocation14], 128
    $region61: #{rnn_forward.6} parent=1 // pred_fallthru
      _
    // Predicated region
    $region62: #{rnn_forward.6} parent=1 // pred_check
      _
    $region63: #{rnn_forward.6} parent=1 // pred_check_branch
      %2662 = sbr.rel (0) target = $region65
    $region64: #{rnn_forward.6} parent=1 // pred_region
      %2663 = dma.done [#allocation14], 128
    $region65: #{rnn_forward.6} parent=1 // pred_fallthru
      _
    %2664 = vsyncpa [#allocation5], 1
    %2665 = vsyncpa [#allocation8], 1
    %2666 = vsyncpa [#allocation11], 1
    %2667 = vsyncpa [#allocation6], 1
    %2668 = vsyncpa [#allocation14], 1

</llo_original>
